<compile_context>
chip_gen: v7x
topology: tpu7x:2x2x1
jax: 0.10.0
libtpu: 0.0.40
codegen_flags: <defaults>
</compile_context>

<pallas_src>
import functools

import jax
import jax.numpy as jnp
from jax.experimental import pallas as pl
from jax.experimental.pallas import tpu as pltpu


# ------------------------------- model config -------------------------------

PATCH = 8          # patch size
HIDDEN = 32        # feat_dim
NUM_HEADS = 4
HEAD_DIM = HIDDEN // NUM_HEADS
MLP_DIM = 64       # MLP hidden (real ViT uses 4x hidden; kept small here)
NUM_LAYERS = 2
NUM_CLASSES = 10
OUT_PAD = 128      # logits padded to a full 128-lane slab for lane-dense store
LN_EPS = 1e-6      # matches the Google-ViT / timm encoder LayerNorm eps


# ----------------------------- fused Pallas kernel ---------------------------

def _vit_kernel(xp_ref, patch_w_ref, patch_b_ref, cls_ref, pos_ref,
                wqkv_ref, bqkv_ref, wo_ref, bo_ref,
                w1_ref, b1_ref, w2_ref, b2_ref,
                hw1_ref, hb1_ref, hw2_ref, hb2_ref,
                out_ref, *, num_layers, num_heads, head_dim, hidden, scale, eps):
    """One grid step == one image. Entire encoder + head stays in VMEM."""

    def mm(x, w, b):
        # bf16 operands on the MXU, f32 accumulation, f32 bias add.
        return jnp.dot(x.astype(jnp.bfloat16), w,
                       preferred_element_type=jnp.float32) + b

    def layer_norm(x):
        # Affine (gamma/beta) is folded into the following matmul's weights and
        # bias at parameter-prep time, so only the normalization runs here.
        mu = jnp.mean(x, axis=-1, keepdims=True)
        xc = x - mu
        var = jnp.mean(xc * xc, axis=-1, keepdims=True)
        return xc * jax.lax.rsqrt(var + eps)

    # --- patch embedding (Conv2d stride=kernel=PATCH == patchify + matmul) ---
    patches = xp_ref[0]                                        # (n_patches, C*P*P)
    tok = mm(patches, patch_w_ref[...], patch_b_ref[...])      # (n_patches, D)

    # --- cls token + position embedding ---
    h = jnp.concatenate([cls_ref[...], tok], axis=0) + pos_ref[...]   # (T, D)

    # --- transformer encoder blocks (static unroll, weights indexed per layer)
    for l in range(num_layers):
        # ---------- attention block ----------
        qkv = mm(layer_norm(h), wqkv_ref[l], bqkv_ref[l]).astype(jnp.bfloat16)

        heads = []
        for hh in range(num_heads):
            lo = hh * head_dim
            q = qkv[:, lo:lo + head_dim]                       # (T, hd) bf16
            k = qkv[:, hidden + lo:hidden + lo + head_dim]
            v = qkv[:, 2 * hidden + lo:2 * hidden + lo + head_dim]
            # q @ k^T without an explicit transpose (contract last dims).
            s = jax.lax.dot_general(
                q, k, (((1,), (1,)), ((), ())),
                preferred_element_type=jnp.float32) * scale
            s = s - jnp.max(s, axis=-1, keepdims=True)
            p = jnp.exp(s)
            p = p * pl.reciprocal(jnp.sum(p, axis=-1, keepdims=True), approx=True)
            heads.append(jnp.dot(p.astype(jnp.bfloat16), v,
                                 preferred_element_type=jnp.float32))
        ctx = jnp.concatenate(heads, axis=-1)                  # (T, D) f32
        h = h + mm(ctx, wo_ref[l], bo_ref[l])                  # attn residual

        # ---------- MLP block ----------
        m = mm(layer_norm(h), w1_ref[l], b1_ref[l])
        # TODO(synk): PyTorch nn.GELU default is the exact erf GELU; tanh
        #             approximation is used here for a guaranteed TPU lowering.
        m = jax.nn.gelu(m, approximate=True)
        h = h + mm(m, w2_ref[l], b2_ref[l])                    # mlp residual

    # --- final encoder norm on the cls row only -> features (1, D) ---
    feat = layer_norm(h[0:1, :])

    # --- classification head MLP: Linear -> ReLU -> Linear (lane-padded out) --
    hid = jnp.maximum(mm(feat, hw1_ref[...], hb1_ref[...]), 0.0)
    out_ref[0] = mm(hid, hw2_ref[...], hb2_ref[...])           # (1, OUT_PAD)


# ------------------------------- forward pass --------------------------------

def _const_spec(a):
    """Whole-array VMEM block whose index does not vary with the grid."""
    return pl.BlockSpec(a.shape, lambda b, n=a.ndim: (0,) * n)


def vit_forward(x, params):
    """x: (B, C, H, W) float32 NCHW. Returns logits (B, NUM_CLASSES)."""
    B, C, H, W = x.shape
    gh, gw = H // PATCH, W // PATCH
    n_patches = gh * gw
    cpp = C * PATCH * PATCH

    # patchify (cheap XLA layout op outside the kernel)
    xp = x.reshape(B, C, gh, PATCH, gw, PATCH).transpose(0, 2, 4, 1, 3, 5)
    xp = xp.reshape(B, n_patches, cpp)

    kernel = functools.partial(
        _vit_kernel,
        num_layers=NUM_LAYERS, num_heads=NUM_HEADS, head_dim=HEAD_DIM,
        hidden=HIDDEN, scale=float(HEAD_DIM) ** -0.5, eps=LN_EPS)

    args = [
        xp,
        params["patch_w"], params["patch_b"], params["cls"], params["pos"],
        params["wqkv"], params["bqkv"], params["wo"], params["bo"],
        params["w1"], params["b1"], params["w2"], params["b2"],
        params["head_w1"], params["head_b1"], params["head_w2"], params["head_b2"],
    ]

    in_specs = [pl.BlockSpec((1, n_patches, cpp), lambda b: (b, 0, 0))]
    in_specs += [_const_spec(a) for a in args[1:]]

    out = pl.pallas_call(
        kernel,
        grid=(B,),
        out_shape=jax.ShapeDtypeStruct((B, 1, OUT_PAD), jnp.float32),
        in_specs=in_specs,
        out_specs=pl.BlockSpec((1, 1, OUT_PAD), lambda b: (b, 0, 0)),
        compiler_params=pltpu.CompilerParams(dimension_semantics=("parallel",)),
    )(*args)

    return out.reshape(B, OUT_PAD)[:, :NUM_CLASSES]


# ------------------------------- parameters ----------------------------------

def init_params(key, in_ch, n_tok):
    """PyTorch-equivalent (unfused) parameters, all in f32."""
    ks = iter(jax.random.split(key, 32))

    def nrm(shape):
        return 0.02 * jax.random.normal(next(ks), shape, dtype=jnp.float32)

    def zeros(shape):
        return jnp.zeros(shape, jnp.float32)

    def ones(shape):
        return jnp.ones(shape, jnp.float32)

    cpp = in_ch * PATCH * PATCH
    L, D, M3 = NUM_LAYERS, HIDDEN, 3 * HIDDEN
    return {
        "patch_w": nrm((cpp, D)), "patch_b": zeros((1, D)),
        "cls": nrm((1, D)), "pos": nrm((n_tok, D)),
        "ln1_g": ones((L, 1, D)), "ln1_b": zeros((L, 1, D)),
        "wqkv": nrm((L, D, M3)), "bqkv": zeros((L, 1, M3)),
        "wo": nrm((L, D, D)), "bo": zeros((L, 1, D)),
        "ln2_g": ones((L, 1, D)), "ln2_b": zeros((L, 1, D)),
        "w1": nrm((L, D, MLP_DIM)), "b1": zeros((L, 1, MLP_DIM)),
        "w2": nrm((L, MLP_DIM, D)), "b2": zeros((L, 1, D)),
        "lnf_g": ones((1, D)), "lnf_b": zeros((1, D)),
        "head_w1": nrm((D, D)), "head_b1": zeros((1, D)),
        "head_w2": nrm((D, NUM_CLASSES)), "head_b2": zeros((1, NUM_CLASSES)),
    }


def _fold_ln(gamma, beta, w, b):
    """Fold a LayerNorm affine into the next matmul.

    (LN_noaffine(x) * g + b) @ W + c  ==  LN_noaffine(x) @ (g^T ⊙ W) + (b @ W + c)
    """
    w32 = w.astype(jnp.float32)
    w_f = jnp.swapaxes(gamma, -1, -2) * w32
    b_f = b + jnp.matmul(beta, w32)
    return w_f, b_f


def prepare_params(raw):
    """One-time offline prep: fold LN affine into the following matmul, cast
    MXU weights to bf16, pad the logits projection to a 128-lane slab."""
    wqkv, bqkv = _fold_ln(raw["ln1_g"], raw["ln1_b"], raw["wqkv"], raw["bqkv"])
    w1, b1 = _fold_ln(raw["ln2_g"], raw["ln2_b"], raw["w1"], raw["b1"])
    hw1, hb1 = _fold_ln(raw["lnf_g"], raw["lnf_b"], raw["head_w1"], raw["head_b1"])

    D = raw["head_w2"].shape[0]
    hw2 = jnp.zeros((D, OUT_PAD), jnp.float32).at[:, :NUM_CLASSES].set(raw["head_w2"])
    hb2 = jnp.zeros((1, OUT_PAD), jnp.float32).at[:, :NUM_CLASSES].set(raw["head_b2"])

    return {
        "patch_w": raw["patch_w"].astype(jnp.bfloat16), "patch_b": raw["patch_b"],
        "cls": raw["cls"], "pos": raw["pos"],
        "wqkv": wqkv.astype(jnp.bfloat16), "bqkv": bqkv,
        "wo": raw["wo"].astype(jnp.bfloat16), "bo": raw["bo"],
        "w1": w1.astype(jnp.bfloat16), "b1": b1,
        "w2": raw["w2"].astype(jnp.bfloat16), "b2": raw["b2"],
        "head_w1": hw1.astype(jnp.bfloat16), "head_b1": hb1,
        "head_w2": hw2.astype(jnp.bfloat16), "head_b2": hb2,
    }


# ----------------------------------- main ------------------------------------

if __name__ == "__main__":
    key = jax.random.PRNGKey(0)
    k_x, k_p = jax.random.split(key)

    B, C, HW = 2, 3, 16
    x = jax.random.normal(k_x, (B, C, HW, HW), dtype=jnp.float32)

    n_tok = (HW // PATCH) * (HW // PATCH) + 1      # patches + cls token
    raw_params = init_params(k_p, in_ch=C, n_tok=n_tok)
    params = prepare_params(raw_params)            # offline fusion / casting

    logits = jax.jit(vit_forward)(x, params)
    logits = jax.block_until_ready(logits)
    assert logits.shape == (B, NUM_CLASSES)
    assert bool(jnp.all(jnp.isfinite(logits)))
    print("KERNEL_OK")
</pallas_src>

<mosaic_0001>
module attributes {stable_mosaic.version = 11 : i64} {
  func.func @_vit_kernel(%arg0: i32, %arg1: memref<1x4x192xf32, #tpu.memory_space<vmem>>, %arg2: memref<192x32xbf16, #tpu.memory_space<vmem>>, %arg3: memref<1x32xf32, #tpu.memory_space<vmem>>, %arg4: memref<1x32xf32, #tpu.memory_space<vmem>>, %arg5: memref<5x32xf32, #tpu.memory_space<vmem>>, %arg6: memref<2x32x96xbf16, #tpu.memory_space<vmem>>, %arg7: memref<2x1x96xf32, #tpu.memory_space<vmem>>, %arg8: memref<2x32x32xbf16, #tpu.memory_space<vmem>>, %arg9: memref<2x1x32xf32, #tpu.memory_space<vmem>>, %arg10: memref<2x32x64xbf16, #tpu.memory_space<vmem>>, %arg11: memref<2x1x64xf32, #tpu.memory_space<vmem>>, %arg12: memref<2x64x32xbf16, #tpu.memory_space<vmem>>, %arg13: memref<2x1x32xf32, #tpu.memory_space<vmem>>, %arg14: memref<32x32xbf16, #tpu.memory_space<vmem>>, %arg15: memref<1x32xf32, #tpu.memory_space<vmem>>, %arg16: memref<32x128xbf16, #tpu.memory_space<vmem>>, %arg17: memref<1x128xf32, #tpu.memory_space<vmem>>, %arg18: memref<1x1x128xf32, #tpu.memory_space<vmem>>) attributes {dimension_semantics = [#tpu.dimension_semantics<parallel>], iteration_bounds = array<i64: 2>, scalar_prefetch = 0 : i64, scratch_operands = 0 : i64, tpu.core_type = #tpu.core_type<tc>, window_params = [{transform_indices = @transform_0, window_bounds = array<i64: 1, 4, 192>}, {pipeline_mode = #tpu.pipeline_mode<synchronous>, transform_indices = @transform_1, window_bounds = array<i64: 192, 32>}, {pipeline_mode = #tpu.pipeline_mode<synchronous>, transform_indices = @transform_2, window_bounds = array<i64: 1, 32>}, {pipeline_mode = #tpu.pipeline_mode<synchronous>, transform_indices = @transform_3, window_bounds = array<i64: 1, 32>}, {pipeline_mode = #tpu.pipeline_mode<synchronous>, transform_indices = @transform_4, window_bounds = array<i64: 5, 32>}, {pipeline_mode = #tpu.pipeline_mode<synchronous>, transform_indices = @transform_5, window_bounds = array<i64: 2, 32, 96>}, {pipeline_mode = #tpu.pipeline_mode<synchronous>, transform_indices = @transform_6, window_bounds = array<i64: 2, 1, 96>}, {pipeline_mode = #tpu.pipeline_mode<synchronous>, transform_indices = @transform_7, window_bounds = array<i64: 2, 32, 32>}, {pipeline_mode = #tpu.pipeline_mode<synchronous>, transform_indices = @transform_8, window_bounds = array<i64: 2, 1, 32>}, {pipeline_mode = #tpu.pipeline_mode<synchronous>, transform_indices = @transform_9, window_bounds = array<i64: 2, 32, 64>}, {pipeline_mode = #tpu.pipeline_mode<synchronous>, transform_indices = @transform_10, window_bounds = array<i64: 2, 1, 64>}, {pipeline_mode = #tpu.pipeline_mode<synchronous>, transform_indices = @transform_11, window_bounds = array<i64: 2, 64, 32>}, {pipeline_mode = #tpu.pipeline_mode<synchronous>, transform_indices = @transform_12, window_bounds = array<i64: 2, 1, 32>}, {pipeline_mode = #tpu.pipeline_mode<synchronous>, transform_indices = @transform_13, window_bounds = array<i64: 32, 32>}, {pipeline_mode = #tpu.pipeline_mode<synchronous>, transform_indices = @transform_14, window_bounds = array<i64: 1, 32>}, {pipeline_mode = #tpu.pipeline_mode<synchronous>, transform_indices = @transform_15, window_bounds = array<i64: 32, 128>}, {pipeline_mode = #tpu.pipeline_mode<synchronous>, transform_indices = @transform_16, window_bounds = array<i64: 1, 128>}, {transform_indices = @transform_17, window_bounds = array<i64: 1, 1, 128>}]} {
    %c0 = arith.constant 0 : index
    %c0_0 = arith.constant 0 : index
    %c0_1 = arith.constant 0 : index
    %0 = vector.load %arg1[%c0, %c0_0, %c0_1] : memref<1x4x192xf32, #tpu.memory_space<vmem>>, vector<1x4x192xf32>
    %1 = vector.shape_cast %0 : vector<1x4x192xf32> to vector<4x192xf32>
    %c0_2 = arith.constant 0 : index
    %c0_3 = arith.constant 0 : index
    %2 = vector.load %arg2[%c0_2, %c0_3] : memref<192x32xbf16, #tpu.memory_space<vmem>>, vector<192x32xbf16>
    %c0_4 = arith.constant 0 : index
    %c0_5 = arith.constant 0 : index
    %3 = vector.load %arg3[%c0_4, %c0_5] : memref<1x32xf32, #tpu.memory_space<vmem>>, vector<1x32xf32>
    %4 = arith.truncf %1 : vector<4x192xf32> to vector<4x192xbf16>
    %cst = arith.constant dense<0.000000e+00> : vector<4x32xf32>
    %5 = tpu.matmul %4, %2, %cst {dimension_numbers = #tpu.dot_dimension_numbers<[1], [0], [0], [1], [0, 0, 1, 1], [], []>} : vector<4x192xbf16>, vector<192x32xbf16>, vector<4x32xf32> -> vector<4x32xf32>
    %6 = vector.broadcast %3 : vector<1x32xf32> to vector<4x32xf32>
    %7 = arith.addf %5, %6 : vector<4x32xf32>
    %c0_6 = arith.constant 0 : index
    %c0_7 = arith.constant 0 : index
    %8 = vector.load %arg4[%c0_6, %c0_7] : memref<1x32xf32, #tpu.memory_space<vmem>>, vector<1x32xf32>
    %9 = tpu.concatenate %8, %7 in 0 : vector<1x32xf32>, vector<4x32xf32> -> vector<5x32xf32>
    %c0_8 = arith.constant 0 : index
    %c0_9 = arith.constant 0 : index
    %10 = vector.load %arg5[%c0_8, %c0_9] : memref<5x32xf32, #tpu.memory_space<vmem>>, vector<5x32xf32>
    %11 = arith.addf %9, %10 : vector<5x32xf32>
    %cst_10 = arith.constant dense<0.000000e+00> : vector<5xf32>
    %12 = vector.multi_reduction <add>, %11, %cst_10 [1] : vector<5x32xf32> to vector<5xf32>
    %13 = vector.shape_cast %12 : vector<5xf32> to vector<5x1xf32>
    %cst_11 = arith.constant 3.200000e+01 : f32
    %14 = vector.broadcast %cst_11 : f32 to vector<5x1xf32>
    %15 = arith.divf %13, %14 : vector<5x1xf32>
    %16 = vector.broadcast %15 : vector<5x1xf32> to vector<5x32xf32>
    %17 = arith.subf %11, %16 : vector<5x32xf32>
    %18 = arith.mulf %17, %17 : vector<5x32xf32>
    %cst_12 = arith.constant dense<0.000000e+00> : vector<5xf32>
    %19 = vector.multi_reduction <add>, %18, %cst_12 [1] : vector<5x32xf32> to vector<5xf32>
    %20 = vector.shape_cast %19 : vector<5xf32> to vector<5x1xf32>
    %cst_13 = arith.constant 3.200000e+01 : f32
    %21 = vector.broadcast %cst_13 : f32 to vector<5x1xf32>
    %22 = arith.divf %20, %21 : vector<5x1xf32>
    %cst_14 = arith.constant 9.99999997E-7 : f32
    %23 = vector.broadcast %cst_14 : f32 to vector<5x1xf32>
    %24 = arith.addf %22, %23 : vector<5x1xf32>
    %25 = math.rsqrt %24 : vector<5x1xf32>
    %26 = vector.broadcast %25 : vector<5x1xf32> to vector<5x32xf32>
    %27 = arith.mulf %17, %26 : vector<5x32xf32>
    %c0_15 = arith.constant 0 : index
    %c0_16 = arith.constant 0 : index
    %c0_17 = arith.constant 0 : index
    %28 = vector.load %arg6[%c0_15, %c0_16, %c0_17] : memref<2x32x96xbf16, #tpu.memory_space<vmem>>, vector<1x32x96xbf16>
    %29 = vector.shape_cast %28 : vector<1x32x96xbf16> to vector<32x96xbf16>
    %c0_18 = arith.constant 0 : index
    %c0_19 = arith.constant 0 : index
    %c0_20 = arith.constant 0 : index
    %30 = vector.load %arg7[%c0_18, %c0_19, %c0_20] : memref<2x1x96xf32, #tpu.memory_space<vmem>>, vector<1x1x96xf32>
    %31 = vector.shape_cast %30 : vector<1x1x96xf32> to vector<1x96xf32>
    %32 = arith.truncf %27 : vector<5x32xf32> to vector<5x32xbf16>
    %cst_21 = arith.constant dense<0.000000e+00> : vector<5x96xf32>
    %33 = tpu.matmul %32, %29, %cst_21 {dimension_numbers = #tpu.dot_dimension_numbers<[1], [0], [0], [1], [0, 0, 1, 1], [], []>} : vector<5x32xbf16>, vector<32x96xbf16>, vector<5x96xf32> -> vector<5x96xf32>
    %34 = vector.broadcast %31 : vector<1x96xf32> to vector<5x96xf32>
    %35 = arith.addf %33, %34 : vector<5x96xf32>
    %36 = arith.truncf %35 : vector<5x96xf32> to vector<5x96xbf16>
    %37 = vector.extract_strided_slice %36 {offsets = [0, 0], sizes = [5, 8], strides = [1, 1]} : vector<5x96xbf16> to vector<5x8xbf16>
    %38 = vector.extract_strided_slice %36 {offsets = [0, 32], sizes = [5, 8], strides = [1, 1]} : vector<5x96xbf16> to vector<5x8xbf16>
    %39 = vector.extract_strided_slice %36 {offsets = [0, 64], sizes = [5, 8], strides = [1, 1]} : vector<5x96xbf16> to vector<5x8xbf16>
    %cst_22 = arith.constant dense<0.000000e+00> : vector<5x5xf32>
    %40 = tpu.matmul %37, %38, %cst_22 {dimension_numbers = #tpu.dot_dimension_numbers<[1], [1], [0], [0], [0, 0, 1, 0], [], []>} : vector<5x8xbf16>, vector<5x8xbf16>, vector<5x5xf32> -> vector<5x5xf32>
    %cst_23 = arith.constant 0.353553385 : f32
    %41 = vector.broadcast %cst_23 : f32 to vector<5x5xf32>
    %42 = arith.mulf %40, %41 : vector<5x5xf32>
    %cst_24 = arith.constant dense<0xFF800000> : vector<5xf32>
    %43 = vector.multi_reduction <maximumf>, %42, %cst_24 [1] : vector<5x5xf32> to vector<5xf32>
    %44 = vector.shape_cast %43 : vector<5xf32> to vector<5x1xf32>
    %45 = vector.broadcast %44 : vector<5x1xf32> to vector<5x5xf32>
    %46 = arith.subf %42, %45 : vector<5x5xf32>
    %47 = math.exp %46 : vector<5x5xf32>
    %cst_25 = arith.constant dense<0.000000e+00> : vector<5xf32>
    %48 = vector.multi_reduction <add>, %47, %cst_25 [1] : vector<5x5xf32> to vector<5xf32>
    %49 = vector.shape_cast %48 : vector<5xf32> to vector<5x1xf32>
    %50 = tpu.reciprocal %49 {approx = true} : vector<5x1xf32> -> vector<5x1xf32>
    %51 = vector.broadcast %50 : vector<5x1xf32> to vector<5x5xf32>
    %52 = arith.mulf %47, %51 : vector<5x5xf32>
    %53 = arith.truncf %52 : vector<5x5xf32> to vector<5x5xbf16>
    %cst_26 = arith.constant dense<0.000000e+00> : vector<5x8xf32>
    %54 = tpu.matmul %53, %39, %cst_26 {dimension_numbers = #tpu.dot_dimension_numbers<[1], [0], [0], [1], [0, 0, 1, 1], [], []>} : vector<5x5xbf16>, vector<5x8xbf16>, vector<5x8xf32> -> vector<5x8xf32>
    %55 = vector.extract_strided_slice %36 {offsets = [0, 8], sizes = [5, 8], strides = [1, 1]} : vector<5x96xbf16> to vector<5x8xbf16>
    %56 = vector.extract_strided_slice %36 {offsets = [0, 40], sizes = [5, 8], strides = [1, 1]} : vector<5x96xbf16> to vector<5x8xbf16>
    %57 = vector.extract_strided_slice %36 {offsets = [0, 72], sizes = [5, 8], strides = [1, 1]} : vector<5x96xbf16> to vector<5x8xbf16>
    %cst_27 = arith.constant dense<0.000000e+00> : vector<5x5xf32>
    %58 = tpu.matmul %55, %56, %cst_27 {dimension_numbers = #tpu.dot_dimension_numbers<[1], [1], [0], [0], [0, 0, 1, 0], [], []>} : vector<5x8xbf16>, vector<5x8xbf16>, vector<5x5xf32> -> vector<5x5xf32>
    %cst_28 = arith.constant 0.353553385 : f32
    %59 = vector.broadcast %cst_28 : f32 to vector<5x5xf32>
    %60 = arith.mulf %58, %59 : vector<5x5xf32>
    %cst_29 = arith.constant dense<0xFF800000> : vector<5xf32>
    %61 = vector.multi_reduction <maximumf>, %60, %cst_29 [1] : vector<5x5xf32> to vector<5xf32>
    %62 = vector.shape_cast %61 : vector<5xf32> to vector<5x1xf32>
    %63 = vector.broadcast %62 : vector<5x1xf32> to vector<5x5xf32>
    %64 = arith.subf %60, %63 : vector<5x5xf32>
    %65 = math.exp %64 : vector<5x5xf32>
    %cst_30 = arith.constant dense<0.000000e+00> : vector<5xf32>
    %66 = vector.multi_reduction <add>, %65, %cst_30 [1] : vector<5x5xf32> to vector<5xf32>
    %67 = vector.shape_cast %66 : vector<5xf32> to vector<5x1xf32>
    %68 = tpu.reciprocal %67 {approx = true} : vector<5x1xf32> -> vector<5x1xf32>
    %69 = vector.broadcast %68 : vector<5x1xf32> to vector<5x5xf32>
    %70 = arith.mulf %65, %69 : vector<5x5xf32>
    %71 = arith.truncf %70 : vector<5x5xf32> to vector<5x5xbf16>
    %cst_31 = arith.constant dense<0.000000e+00> : vector<5x8xf32>
    %72 = tpu.matmul %71, %57, %cst_31 {dimension_numbers = #tpu.dot_dimension_numbers<[1], [0], [0], [1], [0, 0, 1, 1], [], []>} : vector<5x5xbf16>, vector<5x8xbf16>, vector<5x8xf32> -> vector<5x8xf32>
    %73 = vector.extract_strided_slice %36 {offsets = [0, 16], sizes = [5, 8], strides = [1, 1]} : vector<5x96xbf16> to vector<5x8xbf16>
    %74 = vector.extract_strided_slice %36 {offsets = [0, 48], sizes = [5, 8], strides = [1, 1]} : vector<5x96xbf16> to vector<5x8xbf16>
    %75 = vector.extract_strided_slice %36 {offsets = [0, 80], sizes = [5, 8], strides = [1, 1]} : vector<5x96xbf16> to vector<5x8xbf16>
    %cst_32 = arith.constant dense<0.000000e+00> : vector<5x5xf32>
    %76 = tpu.matmul %73, %74, %cst_32 {dimension_numbers = #tpu.dot_dimension_numbers<[1], [1], [0], [0], [0, 0, 1, 0], [], []>} : vector<5x8xbf16>, vector<5x8xbf16>, vector<5x5xf32> -> vector<5x5xf32>
    %cst_33 = arith.constant 0.353553385 : f32
    %77 = vector.broadcast %cst_33 : f32 to vector<5x5xf32>
    %78 = arith.mulf %76, %77 : vector<5x5xf32>
    %cst_34 = arith.constant dense<0xFF800000> : vector<5xf32>
    %79 = vector.multi_reduction <maximumf>, %78, %cst_34 [1] : vector<5x5xf32> to vector<5xf32>
    %80 = vector.shape_cast %79 : vector<5xf32> to vector<5x1xf32>
    %81 = vector.broadcast %80 : vector<5x1xf32> to vector<5x5xf32>
    %82 = arith.subf %78, %81 : vector<5x5xf32>
    %83 = math.exp %82 : vector<5x5xf32>
    %cst_35 = arith.constant dense<0.000000e+00> : vector<5xf32>
    %84 = vector.multi_reduction <add>, %83, %cst_35 [1] : vector<5x5xf32> to vector<5xf32>
    %85 = vector.shape_cast %84 : vector<5xf32> to vector<5x1xf32>
    %86 = tpu.reciprocal %85 {approx = true} : vector<5x1xf32> -> vector<5x1xf32>
    %87 = vector.broadcast %86 : vector<5x1xf32> to vector<5x5xf32>
    %88 = arith.mulf %83, %87 : vector<5x5xf32>
    %89 = arith.truncf %88 : vector<5x5xf32> to vector<5x5xbf16>
    %cst_36 = arith.constant dense<0.000000e+00> : vector<5x8xf32>
    %90 = tpu.matmul %89, %75, %cst_36 {dimension_numbers = #tpu.dot_dimension_numbers<[1], [0], [0], [1], [0, 0, 1, 1], [], []>} : vector<5x5xbf16>, vector<5x8xbf16>, vector<5x8xf32> -> vector<5x8xf32>
    %91 = vector.extract_strided_slice %36 {offsets = [0, 24], sizes = [5, 8], strides = [1, 1]} : vector<5x96xbf16> to vector<5x8xbf16>
    %92 = vector.extract_strided_slice %36 {offsets = [0, 56], sizes = [5, 8], strides = [1, 1]} : vector<5x96xbf16> to vector<5x8xbf16>
    %93 = vector.extract_strided_slice %36 {offsets = [0, 88], sizes = [5, 8], strides = [1, 1]} : vector<5x96xbf16> to vector<5x8xbf16>
    %cst_37 = arith.constant dense<0.000000e+00> : vector<5x5xf32>
    %94 = tpu.matmul %91, %92, %cst_37 {dimension_numbers = #tpu.dot_dimension_numbers<[1], [1], [0], [0], [0, 0, 1, 0], [], []>} : vector<5x8xbf16>, vector<5x8xbf16>, vector<5x5xf32> -> vector<5x5xf32>
    %cst_38 = arith.constant 0.353553385 : f32
    %95 = vector.broadcast %cst_38 : f32 to vector<5x5xf32>
    %96 = arith.mulf %94, %95 : vector<5x5xf32>
    %cst_39 = arith.constant dense<0xFF800000> : vector<5xf32>
    %97 = vector.multi_reduction <maximumf>, %96, %cst_39 [1] : vector<5x5xf32> to vector<5xf32>
    %98 = vector.shape_cast %97 : vector<5xf32> to vector<5x1xf32>
    %99 = vector.broadcast %98 : vector<5x1xf32> to vector<5x5xf32>
    %100 = arith.subf %96, %99 : vector<5x5xf32>
    %101 = math.exp %100 : vector<5x5xf32>
    %cst_40 = arith.constant dense<0.000000e+00> : vector<5xf32>
    %102 = vector.multi_reduction <add>, %101, %cst_40 [1] : vector<5x5xf32> to vector<5xf32>
    %103 = vector.shape_cast %102 : vector<5xf32> to vector<5x1xf32>
    %104 = tpu.reciprocal %103 {approx = true} : vector<5x1xf32> -> vector<5x1xf32>
    %105 = vector.broadcast %104 : vector<5x1xf32> to vector<5x5xf32>
    %106 = arith.mulf %101, %105 : vector<5x5xf32>
    %107 = arith.truncf %106 : vector<5x5xf32> to vector<5x5xbf16>
    %cst_41 = arith.constant dense<0.000000e+00> : vector<5x8xf32>
    %108 = tpu.matmul %107, %93, %cst_41 {dimension_numbers = #tpu.dot_dimension_numbers<[1], [0], [0], [1], [0, 0, 1, 1], [], []>} : vector<5x5xbf16>, vector<5x8xbf16>, vector<5x8xf32> -> vector<5x8xf32>
    %109 = tpu.concatenate %54, %72, %90, %108 in 1 : vector<5x8xf32>, vector<5x8xf32>, vector<5x8xf32>, vector<5x8xf32> -> vector<5x32xf32>
    %c0_42 = arith.constant 0 : index
    %c0_43 = arith.constant 0 : index
    %c0_44 = arith.constant 0 : index
    %110 = vector.load %arg8[%c0_42, %c0_43, %c0_44] : memref<2x32x32xbf16, #tpu.memory_space<vmem>>, vector<1x32x32xbf16>
    %111 = vector.shape_cast %110 : vector<1x32x32xbf16> to vector<32x32xbf16>
    %c0_45 = arith.constant 0 : index
    %c0_46 = arith.constant 0 : index
    %c0_47 = arith.constant 0 : index
    %112 = vector.load %arg9[%c0_45, %c0_46, %c0_47] : memref<2x1x32xf32, #tpu.memory_space<vmem>>, vector<1x1x32xf32>
    %113 = vector.shape_cast %112 : vector<1x1x32xf32> to vector<1x32xf32>
    %114 = arith.truncf %109 : vector<5x32xf32> to vector<5x32xbf16>
    %cst_48 = arith.constant dense<0.000000e+00> : vector<5x32xf32>
    %115 = tpu.matmul %114, %111, %cst_48 {dimension_numbers = #tpu.dot_dimension_numbers<[1], [0], [0], [1], [0, 0, 1, 1], [], []>} : vector<5x32xbf16>, vector<32x32xbf16>, vector<5x32xf32> -> vector<5x32xf32>
    %116 = vector.broadcast %113 : vector<1x32xf32> to vector<5x32xf32>
    %117 = arith.addf %115, %116 : vector<5x32xf32>
    %118 = arith.addf %11, %117 : vector<5x32xf32>
    %cst_49 = arith.constant dense<0.000000e+00> : vector<5xf32>
    %119 = vector.multi_reduction <add>, %118, %cst_49 [1] : vector<5x32xf32> to vector<5xf32>
    %120 = vector.shape_cast %119 : vector<5xf32> to vector<5x1xf32>
    %cst_50 = arith.constant 3.200000e+01 : f32
    %121 = vector.broadcast %cst_50 : f32 to vector<5x1xf32>
    %122 = arith.divf %120, %121 : vector<5x1xf32>
    %123 = vector.broadcast %122 : vector<5x1xf32> to vector<5x32xf32>
    %124 = arith.subf %118, %123 : vector<5x32xf32>
    %125 = arith.mulf %124, %124 : vector<5x32xf32>
    %cst_51 = arith.constant dense<0.000000e+00> : vector<5xf32>
    %126 = vector.multi_reduction <add>, %125, %cst_51 [1] : vector<5x32xf32> to vector<5xf32>
    %127 = vector.shape_cast %126 : vector<5xf32> to vector<5x1xf32>
    %cst_52 = arith.constant 3.200000e+01 : f32
    %128 = vector.broadcast %cst_52 : f32 to vector<5x1xf32>
    %129 = arith.divf %127, %128 : vector<5x1xf32>
    %cst_53 = arith.constant 9.99999997E-7 : f32
    %130 = vector.broadcast %cst_53 : f32 to vector<5x1xf32>
    %131 = arith.addf %129, %130 : vector<5x1xf32>
    %132 = math.rsqrt %131 : vector<5x1xf32>
    %133 = vector.broadcast %132 : vector<5x1xf32> to vector<5x32xf32>
    %134 = arith.mulf %124, %133 : vector<5x32xf32>
    %c0_54 = arith.constant 0 : index
    %c0_55 = arith.constant 0 : index
    %c0_56 = arith.constant 0 : index
    %135 = vector.load %arg10[%c0_54, %c0_55, %c0_56] : memref<2x32x64xbf16, #tpu.memory_space<vmem>>, vector<1x32x64xbf16>
    %136 = vector.shape_cast %135 : vector<1x32x64xbf16> to vector<32x64xbf16>
    %c0_57 = arith.constant 0 : index
    %c0_58 = arith.constant 0 : index
    %c0_59 = arith.constant 0 : index
    %137 = vector.load %arg11[%c0_57, %c0_58, %c0_59] : memref<2x1x64xf32, #tpu.memory_space<vmem>>, vector<1x1x64xf32>
    %138 = vector.shape_cast %137 : vector<1x1x64xf32> to vector<1x64xf32>
    %139 = arith.truncf %134 : vector<5x32xf32> to vector<5x32xbf16>
    %cst_60 = arith.constant dense<0.000000e+00> : vector<5x64xf32>
    %140 = tpu.matmul %139, %136, %cst_60 {dimension_numbers = #tpu.dot_dimension_numbers<[1], [0], [0], [1], [0, 0, 1, 1], [], []>} : vector<5x32xbf16>, vector<32x64xbf16>, vector<5x64xf32> -> vector<5x64xf32>
    %141 = vector.broadcast %138 : vector<1x64xf32> to vector<5x64xf32>
    %142 = arith.addf %140, %141 : vector<5x64xf32>
    %143 = arith.mulf %142, %142 : vector<5x64xf32>
    %144 = arith.mulf %142, %143 : vector<5x64xf32>
    %cst_61 = arith.constant 4.471500e-02 : f32
    %145 = vector.broadcast %cst_61 : f32 to vector<5x64xf32>
    %146 = arith.mulf %145, %144 : vector<5x64xf32>
    %147 = arith.addf %142, %146 : vector<5x64xf32>
    %cst_62 = arith.constant 0.797884583 : f32
    %148 = vector.broadcast %cst_62 : f32 to vector<5x64xf32>
    %149 = arith.mulf %148, %147 : vector<5x64xf32>
    %150 = math.tanh %149 : vector<5x64xf32>
    %cst_63 = arith.constant 1.000000e+00 : f32
    %151 = vector.broadcast %cst_63 : f32 to vector<5x64xf32>
    %152 = arith.addf %151, %150 : vector<5x64xf32>
    %cst_64 = arith.constant 5.000000e-01 : f32
    %153 = vector.broadcast %cst_64 : f32 to vector<5x64xf32>
    %154 = arith.mulf %153, %152 : vector<5x64xf32>
    %155 = arith.mulf %142, %154 : vector<5x64xf32>
    %c0_65 = arith.constant 0 : index
    %c0_66 = arith.constant 0 : index
    %c0_67 = arith.constant 0 : index
    %156 = vector.load %arg12[%c0_65, %c0_66, %c0_67] : memref<2x64x32xbf16, #tpu.memory_space<vmem>>, vector<1x64x32xbf16>
    %157 = vector.shape_cast %156 : vector<1x64x32xbf16> to vector<64x32xbf16>
    %c0_68 = arith.constant 0 : index
    %c0_69 = arith.constant 0 : index
    %c0_70 = arith.constant 0 : index
    %158 = vector.load %arg13[%c0_68, %c0_69, %c0_70] : memref<2x1x32xf32, #tpu.memory_space<vmem>>, vector<1x1x32xf32>
    %159 = vector.shape_cast %158 : vector<1x1x32xf32> to vector<1x32xf32>
    %160 = arith.truncf %155 : vector<5x64xf32> to vector<5x64xbf16>
    %cst_71 = arith.constant dense<0.000000e+00> : vector<5x32xf32>
    %161 = tpu.matmul %160, %157, %cst_71 {dimension_numbers = #tpu.dot_dimension_numbers<[1], [0], [0], [1], [0, 0, 1, 1], [], []>} : vector<5x64xbf16>, vector<64x32xbf16>, vector<5x32xf32> -> vector<5x32xf32>
    %162 = vector.broadcast %159 : vector<1x32xf32> to vector<5x32xf32>
    %163 = arith.addf %161, %162 : vector<5x32xf32>
    %164 = arith.addf %118, %163 : vector<5x32xf32>
    %cst_72 = arith.constant dense<0.000000e+00> : vector<5xf32>
    %165 = vector.multi_reduction <add>, %164, %cst_72 [1] : vector<5x32xf32> to vector<5xf32>
    %166 = vector.shape_cast %165 : vector<5xf32> to vector<5x1xf32>
    %cst_73 = arith.constant 3.200000e+01 : f32
    %167 = vector.broadcast %cst_73 : f32 to vector<5x1xf32>
    %168 = arith.divf %166, %167 : vector<5x1xf32>
    %169 = vector.broadcast %168 : vector<5x1xf32> to vector<5x32xf32>
    %170 = arith.subf %164, %169 : vector<5x32xf32>
    %171 = arith.mulf %170, %170 : vector<5x32xf32>
    %cst_74 = arith.constant dense<0.000000e+00> : vector<5xf32>
    %172 = vector.multi_reduction <add>, %171, %cst_74 [1] : vector<5x32xf32> to vector<5xf32>
    %173 = vector.shape_cast %172 : vector<5xf32> to vector<5x1xf32>
    %cst_75 = arith.constant 3.200000e+01 : f32
    %174 = vector.broadcast %cst_75 : f32 to vector<5x1xf32>
    %175 = arith.divf %173, %174 : vector<5x1xf32>
    %cst_76 = arith.constant 9.99999997E-7 : f32
    %176 = vector.broadcast %cst_76 : f32 to vector<5x1xf32>
    %177 = arith.addf %175, %176 : vector<5x1xf32>
    %178 = math.rsqrt %177 : vector<5x1xf32>
    %179 = vector.broadcast %178 : vector<5x1xf32> to vector<5x32xf32>
    %180 = arith.mulf %170, %179 : vector<5x32xf32>
    %c1 = arith.constant 1 : index
    %c0_77 = arith.constant 0 : index
    %c0_78 = arith.constant 0 : index
    %181 = vector.load %arg6[%c1, %c0_77, %c0_78] : memref<2x32x96xbf16, #tpu.memory_space<vmem>>, vector<1x32x96xbf16>
    %182 = vector.shape_cast %181 : vector<1x32x96xbf16> to vector<32x96xbf16>
    %c1_79 = arith.constant 1 : index
    %c0_80 = arith.constant 0 : index
    %c0_81 = arith.constant 0 : index
    %183 = vector.load %arg7[%c1_79, %c0_80, %c0_81] : memref<2x1x96xf32, #tpu.memory_space<vmem>>, vector<1x1x96xf32>
    %184 = vector.shape_cast %183 : vector<1x1x96xf32> to vector<1x96xf32>
    %185 = arith.truncf %180 : vector<5x32xf32> to vector<5x32xbf16>
    %cst_82 = arith.constant dense<0.000000e+00> : vector<5x96xf32>
    %186 = tpu.matmul %185, %182, %cst_82 {dimension_numbers = #tpu.dot_dimension_numbers<[1], [0], [0], [1], [0, 0, 1, 1], [], []>} : vector<5x32xbf16>, vector<32x96xbf16>, vector<5x96xf32> -> vector<5x96xf32>
    %187 = vector.broadcast %184 : vector<1x96xf32> to vector<5x96xf32>
    %188 = arith.addf %186, %187 : vector<5x96xf32>
    %189 = arith.truncf %188 : vector<5x96xf32> to vector<5x96xbf16>
    %190 = vector.extract_strided_slice %189 {offsets = [0, 0], sizes = [5, 8], strides = [1, 1]} : vector<5x96xbf16> to vector<5x8xbf16>
    %191 = vector.extract_strided_slice %189 {offsets = [0, 32], sizes = [5, 8], strides = [1, 1]} : vector<5x96xbf16> to vector<5x8xbf16>
    %192 = vector.extract_strided_slice %189 {offsets = [0, 64], sizes = [5, 8], strides = [1, 1]} : vector<5x96xbf16> to vector<5x8xbf16>
    %cst_83 = arith.constant dense<0.000000e+00> : vector<5x5xf32>
    %193 = tpu.matmul %190, %191, %cst_83 {dimension_numbers = #tpu.dot_dimension_numbers<[1], [1], [0], [0], [0, 0, 1, 0], [], []>} : vector<5x8xbf16>, vector<5x8xbf16>, vector<5x5xf32> -> vector<5x5xf32>
    %cst_84 = arith.constant 0.353553385 : f32
    %194 = vector.broadcast %cst_84 : f32 to vector<5x5xf32>
    %195 = arith.mulf %193, %194 : vector<5x5xf32>
    %cst_85 = arith.constant dense<0xFF800000> : vector<5xf32>
    %196 = vector.multi_reduction <maximumf>, %195, %cst_85 [1] : vector<5x5xf32> to vector<5xf32>
    %197 = vector.shape_cast %196 : vector<5xf32> to vector<5x1xf32>
    %198 = vector.broadcast %197 : vector<5x1xf32> to vector<5x5xf32>
    %199 = arith.subf %195, %198 : vector<5x5xf32>
    %200 = math.exp %199 : vector<5x5xf32>
    %cst_86 = arith.constant dense<0.000000e+00> : vector<5xf32>
    %201 = vector.multi_reduction <add>, %200, %cst_86 [1] : vector<5x5xf32> to vector<5xf32>
    %202 = vector.shape_cast %201 : vector<5xf32> to vector<5x1xf32>
    %203 = tpu.reciprocal %202 {approx = true} : vector<5x1xf32> -> vector<5x1xf32>
    %204 = vector.broadcast %203 : vector<5x1xf32> to vector<5x5xf32>
    %205 = arith.mulf %200, %204 : vector<5x5xf32>
    %206 = arith.truncf %205 : vector<5x5xf32> to vector<5x5xbf16>
    %cst_87 = arith.constant dense<0.000000e+00> : vector<5x8xf32>
    %207 = tpu.matmul %206, %192, %cst_87 {dimension_numbers = #tpu.dot_dimension_numbers<[1], [0], [0], [1], [0, 0, 1, 1], [], []>} : vector<5x5xbf16>, vector<5x8xbf16>, vector<5x8xf32> -> vector<5x8xf32>
    %208 = vector.extract_strided_slice %189 {offsets = [0, 8], sizes = [5, 8], strides = [1, 1]} : vector<5x96xbf16> to vector<5x8xbf16>
    %209 = vector.extract_strided_slice %189 {offsets = [0, 40], sizes = [5, 8], strides = [1, 1]} : vector<5x96xbf16> to vector<5x8xbf16>
    %210 = vector.extract_strided_slice %189 {offsets = [0, 72], sizes = [5, 8], strides = [1, 1]} : vector<5x96xbf16> to vector<5x8xbf16>
    %cst_88 = arith.constant dense<0.000000e+00> : vector<5x5xf32>
    %211 = tpu.matmul %208, %209, %cst_88 {dimension_numbers = #tpu.dot_dimension_numbers<[1], [1], [0], [0], [0, 0, 1, 0], [], []>} : vector<5x8xbf16>, vector<5x8xbf16>, vector<5x5xf32> -> vector<5x5xf32>
    %cst_89 = arith.constant 0.353553385 : f32
    %212 = vector.broadcast %cst_89 : f32 to vector<5x5xf32>
    %213 = arith.mulf %211, %212 : vector<5x5xf32>
    %cst_90 = arith.constant dense<0xFF800000> : vector<5xf32>
    %214 = vector.multi_reduction <maximumf>, %213, %cst_90 [1] : vector<5x5xf32> to vector<5xf32>
    %215 = vector.shape_cast %214 : vector<5xf32> to vector<5x1xf32>
    %216 = vector.broadcast %215 : vector<5x1xf32> to vector<5x5xf32>
    %217 = arith.subf %213, %216 : vector<5x5xf32>
    %218 = math.exp %217 : vector<5x5xf32>
    %cst_91 = arith.constant dense<0.000000e+00> : vector<5xf32>
    %219 = vector.multi_reduction <add>, %218, %cst_91 [1] : vector<5x5xf32> to vector<5xf32>
    %220 = vector.shape_cast %219 : vector<5xf32> to vector<5x1xf32>
    %221 = tpu.reciprocal %220 {approx = true} : vector<5x1xf32> -> vector<5x1xf32>
    %222 = vector.broadcast %221 : vector<5x1xf32> to vector<5x5xf32>
    %223 = arith.mulf %218, %222 : vector<5x5xf32>
    %224 = arith.truncf %223 : vector<5x5xf32> to vector<5x5xbf16>
    %cst_92 = arith.constant dense<0.000000e+00> : vector<5x8xf32>
    %225 = tpu.matmul %224, %210, %cst_92 {dimension_numbers = #tpu.dot_dimension_numbers<[1], [0], [0], [1], [0, 0, 1, 1], [], []>} : vector<5x5xbf16>, vector<5x8xbf16>, vector<5x8xf32> -> vector<5x8xf32>
    %226 = vector.extract_strided_slice %189 {offsets = [0, 16], sizes = [5, 8], strides = [1, 1]} : vector<5x96xbf16> to vector<5x8xbf16>
    %227 = vector.extract_strided_slice %189 {offsets = [0, 48], sizes = [5, 8], strides = [1, 1]} : vector<5x96xbf16> to vector<5x8xbf16>
    %228 = vector.extract_strided_slice %189 {offsets = [0, 80], sizes = [5, 8], strides = [1, 1]} : vector<5x96xbf16> to vector<5x8xbf16>
    %cst_93 = arith.constant dense<0.000000e+00> : vector<5x5xf32>
    %229 = tpu.matmul %226, %227, %cst_93 {dimension_numbers = #tpu.dot_dimension_numbers<[1], [1], [0], [0], [0, 0, 1, 0], [], []>} : vector<5x8xbf16>, vector<5x8xbf16>, vector<5x5xf32> -> vector<5x5xf32>
    %cst_94 = arith.constant 0.353553385 : f32
    %230 = vector.broadcast %cst_94 : f32 to vector<5x5xf32>
    %231 = arith.mulf %229, %230 : vector<5x5xf32>
    %cst_95 = arith.constant dense<0xFF800000> : vector<5xf32>
    %232 = vector.multi_reduction <maximumf>, %231, %cst_95 [1] : vector<5x5xf32> to vector<5xf32>
    %233 = vector.shape_cast %232 : vector<5xf32> to vector<5x1xf32>
    %234 = vector.broadcast %233 : vector<5x1xf32> to vector<5x5xf32>
    %235 = arith.subf %231, %234 : vector<5x5xf32>
    %236 = math.exp %235 : vector<5x5xf32>
    %cst_96 = arith.constant dense<0.000000e+00> : vector<5xf32>
    %237 = vector.multi_reduction <add>, %236, %cst_96 [1] : vector<5x5xf32> to vector<5xf32>
    %238 = vector.shape_cast %237 : vector<5xf32> to vector<5x1xf32>
    %239 = tpu.reciprocal %238 {approx = true} : vector<5x1xf32> -> vector<5x1xf32>
    %240 = vector.broadcast %239 : vector<5x1xf32> to vector<5x5xf32>
    %241 = arith.mulf %236, %240 : vector<5x5xf32>
    %242 = arith.truncf %241 : vector<5x5xf32> to vector<5x5xbf16>
    %cst_97 = arith.constant dense<0.000000e+00> : vector<5x8xf32>
    %243 = tpu.matmul %242, %228, %cst_97 {dimension_numbers = #tpu.dot_dimension_numbers<[1], [0], [0], [1], [0, 0, 1, 1], [], []>} : vector<5x5xbf16>, vector<5x8xbf16>, vector<5x8xf32> -> vector<5x8xf32>
    %244 = vector.extract_strided_slice %189 {offsets = [0, 24], sizes = [5, 8], strides = [1, 1]} : vector<5x96xbf16> to vector<5x8xbf16>
    %245 = vector.extract_strided_slice %189 {offsets = [0, 56], sizes = [5, 8], strides = [1, 1]} : vector<5x96xbf16> to vector<5x8xbf16>
    %246 = vector.extract_strided_slice %189 {offsets = [0, 88], sizes = [5, 8], strides = [1, 1]} : vector<5x96xbf16> to vector<5x8xbf16>
    %cst_98 = arith.constant dense<0.000000e+00> : vector<5x5xf32>
    %247 = tpu.matmul %244, %245, %cst_98 {dimension_numbers = #tpu.dot_dimension_numbers<[1], [1], [0], [0], [0, 0, 1, 0], [], []>} : vector<5x8xbf16>, vector<5x8xbf16>, vector<5x5xf32> -> vector<5x5xf32>
    %cst_99 = arith.constant 0.353553385 : f32
    %248 = vector.broadcast %cst_99 : f32 to vector<5x5xf32>
    %249 = arith.mulf %247, %248 : vector<5x5xf32>
    %cst_100 = arith.constant dense<0xFF800000> : vector<5xf32>
    %250 = vector.multi_reduction <maximumf>, %249, %cst_100 [1] : vector<5x5xf32> to vector<5xf32>
    %251 = vector.shape_cast %250 : vector<5xf32> to vector<5x1xf32>
    %252 = vector.broadcast %251 : vector<5x1xf32> to vector<5x5xf32>
    %253 = arith.subf %249, %252 : vector<5x5xf32>
    %254 = math.exp %253 : vector<5x5xf32>
    %cst_101 = arith.constant dense<0.000000e+00> : vector<5xf32>
    %255 = vector.multi_reduction <add>, %254, %cst_101 [1] : vector<5x5xf32> to vector<5xf32>
    %256 = vector.shape_cast %255 : vector<5xf32> to vector<5x1xf32>
    %257 = tpu.reciprocal %256 {approx = true} : vector<5x1xf32> -> vector<5x1xf32>
    %258 = vector.broadcast %257 : vector<5x1xf32> to vector<5x5xf32>
    %259 = arith.mulf %254, %258 : vector<5x5xf32>
    %260 = arith.truncf %259 : vector<5x5xf32> to vector<5x5xbf16>
    %cst_102 = arith.constant dense<0.000000e+00> : vector<5x8xf32>
    %261 = tpu.matmul %260, %246, %cst_102 {dimension_numbers = #tpu.dot_dimension_numbers<[1], [0], [0], [1], [0, 0, 1, 1], [], []>} : vector<5x5xbf16>, vector<5x8xbf16>, vector<5x8xf32> -> vector<5x8xf32>
    %262 = tpu.concatenate %207, %225, %243, %261 in 1 : vector<5x8xf32>, vector<5x8xf32>, vector<5x8xf32>, vector<5x8xf32> -> vector<5x32xf32>
    %c1_103 = arith.constant 1 : index
    %c0_104 = arith.constant 0 : index
    %c0_105 = arith.constant 0 : index
    %263 = vector.load %arg8[%c1_103, %c0_104, %c0_105] : memref<2x32x32xbf16, #tpu.memory_space<vmem>>, vector<1x32x32xbf16>
    %264 = vector.shape_cast %263 : vector<1x32x32xbf16> to vector<32x32xbf16>
    %c1_106 = arith.constant 1 : index
    %c0_107 = arith.constant 0 : index
    %c0_108 = arith.constant 0 : index
    %265 = vector.load %arg9[%c1_106, %c0_107, %c0_108] : memref<2x1x32xf32, #tpu.memory_space<vmem>>, vector<1x1x32xf32>
    %266 = vector.shape_cast %265 : vector<1x1x32xf32> to vector<1x32xf32>
    %267 = arith.truncf %262 : vector<5x32xf32> to vector<5x32xbf16>
    %cst_109 = arith.constant dense<0.000000e+00> : vector<5x32xf32>
    %268 = tpu.matmul %267, %264, %cst_109 {dimension_numbers = #tpu.dot_dimension_numbers<[1], [0], [0], [1], [0, 0, 1, 1], [], []>} : vector<5x32xbf16>, vector<32x32xbf16>, vector<5x32xf32> -> vector<5x32xf32>
    %269 = vector.broadcast %266 : vector<1x32xf32> to vector<5x32xf32>
    %270 = arith.addf %268, %269 : vector<5x32xf32>
    %271 = arith.addf %164, %270 : vector<5x32xf32>
    %cst_110 = arith.constant dense<0.000000e+00> : vector<5xf32>
    %272 = vector.multi_reduction <add>, %271, %cst_110 [1] : vector<5x32xf32> to vector<5xf32>
    %273 = vector.shape_cast %272 : vector<5xf32> to vector<5x1xf32>
    %cst_111 = arith.constant 3.200000e+01 : f32
    %274 = vector.broadcast %cst_111 : f32 to vector<5x1xf32>
    %275 = arith.divf %273, %274 : vector<5x1xf32>
    %276 = vector.broadcast %275 : vector<5x1xf32> to vector<5x32xf32>
    %277 = arith.subf %271, %276 : vector<5x32xf32>
    %278 = arith.mulf %277, %277 : vector<5x32xf32>
    %cst_112 = arith.constant dense<0.000000e+00> : vector<5xf32>
    %279 = vector.multi_reduction <add>, %278, %cst_112 [1] : vector<5x32xf32> to vector<5xf32>
    %280 = vector.shape_cast %279 : vector<5xf32> to vector<5x1xf32>
    %cst_113 = arith.constant 3.200000e+01 : f32
    %281 = vector.broadcast %cst_113 : f32 to vector<5x1xf32>
    %282 = arith.divf %280, %281 : vector<5x1xf32>
    %cst_114 = arith.constant 9.99999997E-7 : f32
    %283 = vector.broadcast %cst_114 : f32 to vector<5x1xf32>
    %284 = arith.addf %282, %283 : vector<5x1xf32>
    %285 = math.rsqrt %284 : vector<5x1xf32>
    %286 = vector.broadcast %285 : vector<5x1xf32> to vector<5x32xf32>
    %287 = arith.mulf %277, %286 : vector<5x32xf32>
    %c1_115 = arith.constant 1 : index
    %c0_116 = arith.constant 0 : index
    %c0_117 = arith.constant 0 : index
    %288 = vector.load %arg10[%c1_115, %c0_116, %c0_117] : memref<2x32x64xbf16, #tpu.memory_space<vmem>>, vector<1x32x64xbf16>
    %289 = vector.shape_cast %288 : vector<1x32x64xbf16> to vector<32x64xbf16>
    %c1_118 = arith.constant 1 : index
    %c0_119 = arith.constant 0 : index
    %c0_120 = arith.constant 0 : index
    %290 = vector.load %arg11[%c1_118, %c0_119, %c0_120] : memref<2x1x64xf32, #tpu.memory_space<vmem>>, vector<1x1x64xf32>
    %291 = vector.shape_cast %290 : vector<1x1x64xf32> to vector<1x64xf32>
    %292 = arith.truncf %287 : vector<5x32xf32> to vector<5x32xbf16>
    %cst_121 = arith.constant dense<0.000000e+00> : vector<5x64xf32>
    %293 = tpu.matmul %292, %289, %cst_121 {dimension_numbers = #tpu.dot_dimension_numbers<[1], [0], [0], [1], [0, 0, 1, 1], [], []>} : vector<5x32xbf16>, vector<32x64xbf16>, vector<5x64xf32> -> vector<5x64xf32>
    %294 = vector.broadcast %291 : vector<1x64xf32> to vector<5x64xf32>
    %295 = arith.addf %293, %294 : vector<5x64xf32>
    %296 = arith.mulf %295, %295 : vector<5x64xf32>
    %297 = arith.mulf %295, %296 : vector<5x64xf32>
    %cst_122 = arith.constant 4.471500e-02 : f32
    %298 = vector.broadcast %cst_122 : f32 to vector<5x64xf32>
    %299 = arith.mulf %298, %297 : vector<5x64xf32>
    %300 = arith.addf %295, %299 : vector<5x64xf32>
    %cst_123 = arith.constant 0.797884583 : f32
    %301 = vector.broadcast %cst_123 : f32 to vector<5x64xf32>
    %302 = arith.mulf %301, %300 : vector<5x64xf32>
    %303 = math.tanh %302 : vector<5x64xf32>
    %cst_124 = arith.constant 1.000000e+00 : f32
    %304 = vector.broadcast %cst_124 : f32 to vector<5x64xf32>
    %305 = arith.addf %304, %303 : vector<5x64xf32>
    %cst_125 = arith.constant 5.000000e-01 : f32
    %306 = vector.broadcast %cst_125 : f32 to vector<5x64xf32>
    %307 = arith.mulf %306, %305 : vector<5x64xf32>
    %308 = arith.mulf %295, %307 : vector<5x64xf32>
    %c1_126 = arith.constant 1 : index
    %c0_127 = arith.constant 0 : index
    %c0_128 = arith.constant 0 : index
    %309 = vector.load %arg12[%c1_126, %c0_127, %c0_128] : memref<2x64x32xbf16, #tpu.memory_space<vmem>>, vector<1x64x32xbf16>
    %310 = vector.shape_cast %309 : vector<1x64x32xbf16> to vector<64x32xbf16>
    %c1_129 = arith.constant 1 : index
    %c0_130 = arith.constant 0 : index
    %c0_131 = arith.constant 0 : index
    %311 = vector.load %arg13[%c1_129, %c0_130, %c0_131] : memref<2x1x32xf32, #tpu.memory_space<vmem>>, vector<1x1x32xf32>
    %312 = vector.shape_cast %311 : vector<1x1x32xf32> to vector<1x32xf32>
    %313 = arith.truncf %308 : vector<5x64xf32> to vector<5x64xbf16>
    %cst_132 = arith.constant dense<0.000000e+00> : vector<5x32xf32>
    %314 = tpu.matmul %313, %310, %cst_132 {dimension_numbers = #tpu.dot_dimension_numbers<[1], [0], [0], [1], [0, 0, 1, 1], [], []>} : vector<5x64xbf16>, vector<64x32xbf16>, vector<5x32xf32> -> vector<5x32xf32>
    %315 = vector.broadcast %312 : vector<1x32xf32> to vector<5x32xf32>
    %316 = arith.addf %314, %315 : vector<5x32xf32>
    %317 = arith.addf %271, %316 : vector<5x32xf32>
    %318 = vector.extract_strided_slice %317 {offsets = [0, 0], sizes = [1, 32], strides = [1, 1]} : vector<5x32xf32> to vector<1x32xf32>
    %cst_133 = arith.constant dense<0.000000e+00> : vector<1xf32>
    %319 = vector.multi_reduction <add>, %318, %cst_133 [1] : vector<1x32xf32> to vector<1xf32>
    %320 = vector.shape_cast %319 : vector<1xf32> to vector<1x1xf32>
    %cst_134 = arith.constant 3.200000e+01 : f32
    %321 = vector.broadcast %cst_134 : f32 to vector<1x1xf32>
    %322 = arith.divf %320, %321 : vector<1x1xf32>
    %323 = vector.broadcast %322 : vector<1x1xf32> to vector<1x32xf32>
    %324 = arith.subf %318, %323 : vector<1x32xf32>
    %325 = arith.mulf %324, %324 : vector<1x32xf32>
    %cst_135 = arith.constant dense<0.000000e+00> : vector<1xf32>
    %326 = vector.multi_reduction <add>, %325, %cst_135 [1] : vector<1x32xf32> to vector<1xf32>
    %327 = vector.shape_cast %326 : vector<1xf32> to vector<1x1xf32>
    %cst_136 = arith.constant 3.200000e+01 : f32
    %328 = vector.broadcast %cst_136 : f32 to vector<1x1xf32>
    %329 = arith.divf %327, %328 : vector<1x1xf32>
    %cst_137 = arith.constant 9.99999997E-7 : f32
    %330 = vector.broadcast %cst_137 : f32 to vector<1x1xf32>
    %331 = arith.addf %329, %330 : vector<1x1xf32>
    %332 = math.rsqrt %331 : vector<1x1xf32>
    %333 = vector.broadcast %332 : vector<1x1xf32> to vector<1x32xf32>
    %334 = arith.mulf %324, %333 : vector<1x32xf32>
    %c0_138 = arith.constant 0 : index
    %c0_139 = arith.constant 0 : index
    %335 = vector.load %arg14[%c0_138, %c0_139] : memref<32x32xbf16, #tpu.memory_space<vmem>>, vector<32x32xbf16>
    %c0_140 = arith.constant 0 : index
    %c0_141 = arith.constant 0 : index
    %336 = vector.load %arg15[%c0_140, %c0_141] : memref<1x32xf32, #tpu.memory_space<vmem>>, vector<1x32xf32>
    %337 = arith.truncf %334 : vector<1x32xf32> to vector<1x32xbf16>
    %cst_142 = arith.constant dense<0.000000e+00> : vector<1x32xf32>
    %338 = tpu.matmul %337, %335, %cst_142 {dimension_numbers = #tpu.dot_dimension_numbers<[1], [0], [0], [1], [0, 0, 1, 1], [], []>} : vector<1x32xbf16>, vector<32x32xbf16>, vector<1x32xf32> -> vector<1x32xf32>
    %339 = arith.addf %338, %336 : vector<1x32xf32>
    %cst_143 = arith.constant 0.000000e+00 : f32
    %340 = vector.broadcast %cst_143 : f32 to vector<1x32xf32>
    %341 = arith.maximumf %339, %340 : vector<1x32xf32>
    %c0_144 = arith.constant 0 : index
    %c0_145 = arith.constant 0 : index
    %342 = vector.load %arg16[%c0_144, %c0_145] : memref<32x128xbf16, #tpu.memory_space<vmem>>, vector<32x128xbf16>
    %c0_146 = arith.constant 0 : index
    %c0_147 = arith.constant 0 : index
    %343 = vector.load %arg17[%c0_146, %c0_147] : memref<1x128xf32, #tpu.memory_space<vmem>>, vector<1x128xf32>
    %344 = arith.truncf %341 : vector<1x32xf32> to vector<1x32xbf16>
    %cst_148 = arith.constant dense<0.000000e+00> : vector<1x128xf32>
    %345 = tpu.matmul %344, %342, %cst_148 {dimension_numbers = #tpu.dot_dimension_numbers<[1], [0], [0], [1], [0, 0, 1, 1], [], []>} : vector<1x32xbf16>, vector<32x128xbf16>, vector<1x128xf32> -> vector<1x128xf32>
    %346 = arith.addf %345, %343 : vector<1x128xf32>
    %c0_149 = arith.constant 0 : index
    %c0_150 = arith.constant 0 : index
    %c0_151 = arith.constant 0 : index
    %347 = vector.load %arg18[%c0_149, %c0_150, %c0_151] : memref<1x1x128xf32, #tpu.memory_space<vmem>>, vector<1x1x128xf32>
    %348 = vector.shape_cast %347 : vector<1x1x128xf32> to vector<1x128xf32>
    %349 = vector.shape_cast %346 : vector<1x128xf32> to vector<1x1x128xf32>
    tpu.vector_store %arg18[%c0_149, %c0_150, %c0_151], %349 {strides = array<i32>} : memref<1x1x128xf32, #tpu.memory_space<vmem>>, vector<1x1x128xf32>,
    return
  }
  func.func @transform_0(%arg0: i32) -> (i32, i32, i32) {
    %c0_i32 = arith.constant 0 : i32
    %c0_i32_0 = arith.constant 0 : i32
    %c0_i32_1 = arith.constant 0 : i32
    return %arg0, %c0_i32, %c0_i32_0 : i32, i32, i32
  }
  func.func @transform_1(%arg0: i32) -> (i32, i32) {
    %c0_i32 = arith.constant 0 : i32
    %c0_i32_0 = arith.constant 0 : i32
    %c0_i32_1 = arith.constant 0 : i32
    return %c0_i32, %c0_i32_0 : i32, i32
  }
  func.func @transform_2(%arg0: i32) -> (i32, i32) {
    %c0_i32 = arith.constant 0 : i32
    %c0_i32_0 = arith.constant 0 : i32
    %c0_i32_1 = arith.constant 0 : i32
    return %c0_i32, %c0_i32_0 : i32, i32
  }
  func.func @transform_3(%arg0: i32) -> (i32, i32) {
    %c0_i32 = arith.constant 0 : i32
    %c0_i32_0 = arith.constant 0 : i32
    %c0_i32_1 = arith.constant 0 : i32
    return %c0_i32, %c0_i32_0 : i32, i32
  }
  func.func @transform_4(%arg0: i32) -> (i32, i32) {
    %c0_i32 = arith.constant 0 : i32
    %c0_i32_0 = arith.constant 0 : i32
    %c0_i32_1 = arith.constant 0 : i32
    return %c0_i32, %c0_i32_0 : i32, i32
  }
  func.func @transform_5(%arg0: i32) -> (i32, i32, i32) {
    %c0_i32 = arith.constant 0 : i32
    %c0_i32_0 = arith.constant 0 : i32
    %c0_i32_1 = arith.constant 0 : i32
    %c0_i32_2 = arith.constant 0 : i32
    return %c0_i32, %c0_i32_0, %c0_i32_1 : i32, i32, i32
  }
  func.func @transform_6(%arg0: i32) -> (i32, i32, i32) {
    %c0_i32 = arith.constant 0 : i32
    %c0_i32_0 = arith.constant 0 : i32
    %c0_i32_1 = arith.constant 0 : i32
    %c0_i32_2 = arith.constant 0 : i32
    return %c0_i32, %c0_i32_0, %c0_i32_1 : i32, i32, i32
  }
  func.func @transform_7(%arg0: i32) -> (i32, i32, i32) {
    %c0_i32 = arith.constant 0 : i32
    %c0_i32_0 = arith.constant 0 : i32
    %c0_i32_1 = arith.constant 0 : i32
    %c0_i32_2 = arith.constant 0 : i32
    return %c0_i32, %c0_i32_0, %c0_i32_1 : i32, i32, i32
  }
  func.func @transform_8(%arg0: i32) -> (i32, i32, i32) {
    %c0_i32 = arith.constant 0 : i32
    %c0_i32_0 = arith.constant 0 : i32
    %c0_i32_1 = arith.constant 0 : i32
    %c0_i32_2 = arith.constant 0 : i32
    return %c0_i32, %c0_i32_0, %c0_i32_1 : i32, i32, i32
  }
  func.func @transform_9(%arg0: i32) -> (i32, i32, i32) {
    %c0_i32 = arith.constant 0 : i32
    %c0_i32_0 = arith.constant 0 : i32
    %c0_i32_1 = arith.constant 0 : i32
    %c0_i32_2 = arith.constant 0 : i32
    return %c0_i32, %c0_i32_0, %c0_i32_1 : i32, i32, i32
  }
  func.func @transform_10(%arg0: i32) -> (i32, i32, i32) {
    %c0_i32 = arith.constant 0 : i32
    %c0_i32_0 = arith.constant 0 : i32
    %c0_i32_1 = arith.constant 0 : i32
    %c0_i32_2 = arith.constant 0 : i32
    return %c0_i32, %c0_i32_0, %c0_i32_1 : i32, i32, i32
  }
  func.func @transform_11(%arg0: i32) -> (i32, i32, i32) {
    %c0_i32 = arith.constant 0 : i32
    %c0_i32_0 = arith.constant 0 : i32
    %c0_i32_1 = arith.constant 0 : i32
    %c0_i32_2 = arith.constant 0 : i32
    return %c0_i32, %c0_i32_0, %c0_i32_1 : i32, i32, i32
  }
  func.func @transform_12(%arg0: i32) -> (i32, i32, i32) {
    %c0_i32 = arith.constant 0 : i32
    %c0_i32_0 = arith.constant 0 : i32
    %c0_i32_1 = arith.constant 0 : i32
    %c0_i32_2 = arith.constant 0 : i32
    return %c0_i32, %c0_i32_0, %c0_i32_1 : i32, i32, i32
  }
  func.func @transform_13(%arg0: i32) -> (i32, i32) {
    %c0_i32 = arith.constant 0 : i32
    %c0_i32_0 = arith.constant 0 : i32
    %c0_i32_1 = arith.constant 0 : i32
    return %c0_i32, %c0_i32_0 : i32, i32
  }
  func.func @transform_14(%arg0: i32) -> (i32, i32) {
    %c0_i32 = arith.constant 0 : i32
    %c0_i32_0 = arith.constant 0 : i32
    %c0_i32_1 = arith.constant 0 : i32
    return %c0_i32, %c0_i32_0 : i32, i32
  }
  func.func @transform_15(%arg0: i32) -> (i32, i32) {
    %c0_i32 = arith.constant 0 : i32
    %c0_i32_0 = arith.constant 0 : i32
    %c0_i32_1 = arith.constant 0 : i32
    return %c0_i32, %c0_i32_0 : i32, i32
  }
  func.func @transform_16(%arg0: i32) -> (i32, i32) {
    %c0_i32 = arith.constant 0 : i32
    %c0_i32_0 = arith.constant 0 : i32
    %c0_i32_1 = arith.constant 0 : i32
    return %c0_i32, %c0_i32_0 : i32, i32
  }
  func.func @transform_17(%arg0: i32) -> (i32, i32, i32) {
    %c0_i32 = arith.constant 0 : i32
    %c0_i32_0 = arith.constant 0 : i32
    %c0_i32_1 = arith.constant 0 : i32
    return %arg0, %c0_i32, %c0_i32_0 : i32, i32, i32
  }
}

</mosaic_0001>

<llo_original>
// kernel: vit_forward.1
$region0: #{vit_forward.1}
  #allocation0 [shape = 'u32[]', space=smem, size = 0x4, offset = 0x4, fixed_abs, tag = 'smem constant byte address 0x4 - core index']
  #allocation1 [shape = 'u32[144,128]{1,0:T(1,128)}', space=vmem, size = 0x12000, scoped, tag = 'internal scratch']
  %s0 = inlined_call_operand.vmem [shape: f32[2,4,192], index: 0, kind: input, shape index: {}]
  %s1 = inlined_call_operand.vmem [shape: bf16[192,32], index: 1, kind: input, shape index: {}]
  %s2 = inlined_call_operand.vmem [shape: f32[1,32], index: 2, kind: input, shape index: {}]
  %s3 = inlined_call_operand.vmem [shape: f32[1,32], index: 3, kind: input, shape index: {}]
  %s4 = inlined_call_operand.vmem [shape: f32[5,32], index: 4, kind: input, shape index: {}]
  %s5 = inlined_call_operand.vmem [shape: bf16[2,32,96], index: 5, kind: input, shape index: {}]
  %s6 = inlined_call_operand.vmem [shape: f32[2,1,96], index: 6, kind: input, shape index: {}]
  %s7 = inlined_call_operand.vmem [shape: bf16[2,32,32], index: 7, kind: input, shape index: {}]
  %s8 = inlined_call_operand.vmem [shape: f32[2,1,32], index: 8, kind: input, shape index: {}]
  %s9 = inlined_call_operand.vmem [shape: bf16[2,32,64], index: 9, kind: input, shape index: {}]
  %s10 = inlined_call_operand.vmem [shape: f32[2,1,64], index: 10, kind: input, shape index: {}]
  %s11 = inlined_call_operand.vmem [shape: bf16[2,64,32], index: 11, kind: input, shape index: {}]
  %s12 = inlined_call_operand.vmem [shape: f32[2,1,32], index: 12, kind: input, shape index: {}]
  %s13 = inlined_call_operand.vmem [shape: bf16[32,32], index: 13, kind: input, shape index: {}]
  %s14 = inlined_call_operand.vmem [shape: f32[1,32], index: 14, kind: input, shape index: {}]
  %s15 = inlined_call_operand.vmem [shape: bf16[32,128], index: 15, kind: input, shape index: {}]
  %s16 = inlined_call_operand.vmem [shape: f32[1,128], index: 16, kind: input, shape index: {}]
  %s17 = inlined_call_operand.hbm [shape: f32[2,1,128], index: 17, kind: output, shape index: {}]
  %s18 = sld [smem:[#allocation0]]
  $region101: #{vit_forward.1} parent=0
    _
  %s20 = ssub.s32 1, %s18
  %s21 = scalar_select 0, %s20, %s18
  $region1: #{vit_forward.1} parent=0
    #allocation2 [shape = 'u8[1024]{0}', space=vmem, size = 0x400, scoped, tag = 'output window, operand 0']
    #allocation3 [shape = 's32[2]{0}', space=sflag, size = 0x8, scoped, tag = 'scoped memory for vit_forward.1']
    %22 = vsyncpa [#allocation3], 0
    %s23 = scalar_lea.sflag [#allocation3], 1
    %24 = vsyncpa %s23, 0
    loop: start=0, step=1, limit=4
    $region2: #{vit_forward.1} parent=1 // loop_pre_header
      _
    $region3: #{vit_forward.1} parent=1 // loop_header
      %s26 = sphi 0, %s30
      %p27 = scmp.ge.s32.totalorder %s26, 4
      %s36 = sphi 0, %s38
      %s39 = sphi 0, %s36
      %s40 = sphi 0, %s39
      %s56 = sphi 0, %s40
      %s60 = sphi 0, %s60
      %s62 = sphi 0, %s60
      %s63 = sphi 0, %s62
      %s77 = sphi 0, %s63
      %s81 = sphi 0, %s81
      %s83 = sphi 0, %s81
      %s84 = sphi 0, %s83
      %s98 = sphi 0, %s84
      %s102 = sphi 0, %s102
      %s104 = sphi 0, %s102
      %s105 = sphi 0, %s104
      %s119 = sphi 0, %s105
      %s123 = sphi 0, %s123
      %s125 = sphi 0, %s123
      %s126 = sphi 0, %s125
      %s140 = sphi 0, %s126
      %s144 = sphi 0, %s144
      %s146 = sphi 0, %s144
      %s147 = sphi 0, %s146
      %s161 = sphi 0, %s147
      %s165 = sphi 0, %s165
      %s167 = sphi 0, %s165
      %s168 = sphi 0, %s167
      %s182 = sphi 0, %s168
      %s186 = sphi 0, %s186
      %s188 = sphi 0, %s186
      %s189 = sphi 0, %s188
      %s203 = sphi 0, %s189
      %s207 = sphi 0, %s207
      %s209 = sphi 0, %s207
      %s210 = sphi 0, %s209
      %s224 = sphi 0, %s210
      %s228 = sphi 0, %s228
      %s230 = sphi 0, %s228
      %s231 = sphi 0, %s230
      %s245 = sphi 0, %s231
      %s249 = sphi 0, %s249
      %s251 = sphi 0, %s249
      %s252 = sphi 0, %s251
      %s266 = sphi 0, %s252
      %s270 = sphi 0, %s270
      %s272 = sphi 0, %s270
      %s273 = sphi 0, %s272
      %s287 = sphi 0, %s273
      %s291 = sphi 0, %s291
      %s293 = sphi 0, %s291
      %s294 = sphi 0, %s293
      %s308 = sphi 0, %s294
      %s312 = sphi 0, %s312
      %s314 = sphi 0, %s312
      %s315 = sphi 0, %s314
      %s329 = sphi 0, %s315
      %s333 = sphi 0, %s333
      %s335 = sphi 0, %s333
      %s336 = sphi 0, %s335
      %s350 = sphi 0, %s336
      %s354 = sphi 0, %s354
      %s356 = sphi 0, %s354
      %s357 = sphi 0, %s356
      %s371 = sphi 0, %s357
      %s375 = sphi 0, %s375
      %s377 = sphi 0, %s375
      %s378 = sphi 0, %s377
      %s392 = sphi 0, %s378
      %s398 = sphi 0, %s400
      %s401 = sphi 0, %s398
      %s402 = sphi 0, %s401
      %s418 = sphi 0, %s402
    $region4: #{vit_forward.1} parent=1 // loop_header_branch
      %29 = sbr.rel (%p27) target = $region8
    $region5: #{vit_forward.1} parent=1 // loop_body
      %s31 = ssub.s32 %s26, 1
      %s32 = ssub.s32 %s26, 2
      %s33 = sadd.s32 %s26, 1
      %s34 = ssub.s32 %s26, %s33
      %p35 = scmp.eq.s32.totalorder %s34, 0
      %s37 = sadd.s32 %s36, 1
      %s38 = scalar_select %p35, %s36, %s37
      %p41 = pneg %p35
      %p42 = scmp.eq.s32.totalorder %s26, 1
      %p43 = por %p41, %p42
      %p44 = scmp.ne.s32.totalorder %s36, %s39
      %p45 = scmp.eq.s32.totalorder %s26, 0
      %p46 = por %p44, %p45
      %p47 = scmp.ne.s32.totalorder %s36, %s39
      %p48 = scmp.eq.s32.totalorder %s31, 1
      %p49 = por %p47, %p48
      %p50 = scmp.ne.s32.totalorder %s39, %s40
      %p51 = scmp.eq.s32.totalorder %s31, 0
      %p52 = por %p50, %p51
      %p53 = scmp.ne.s32.totalorder %s39, %s40
      %p54 = scmp.eq.s32.totalorder %s32, 1
      %p55 = por %p53, %p54
      %p57 = scmp.ne.s32.totalorder %s40, %s56
      %p58 = scmp.eq.s32.totalorder %s32, 0
      %p59 = por %p57, %p58
      %s61 = sadd.s32 %s60, 1
      %p64 = scmp.eq.s32.totalorder %s26, 1
      %p65 = scmp.ne.s32.totalorder %s60, %s62
      %p66 = scmp.eq.s32.totalorder %s26, 0
      %p67 = por %p65, %p66
      %p68 = scmp.ne.s32.totalorder %s60, %s62
      %p69 = scmp.eq.s32.totalorder %s31, 1
      %p70 = por %p68, %p69
      %p71 = scmp.ne.s32.totalorder %s62, %s63
      %p72 = scmp.eq.s32.totalorder %s31, 0
      %p73 = por %p71, %p72
      %p74 = scmp.ne.s32.totalorder %s62, %s63
      %p75 = scmp.eq.s32.totalorder %s32, 1
      %p76 = por %p74, %p75
      %p78 = scmp.ne.s32.totalorder %s63, %s77
      %p79 = scmp.eq.s32.totalorder %s32, 0
      %p80 = por %p78, %p79
      %s82 = sadd.s32 %s81, 1
      %p85 = scmp.eq.s32.totalorder %s26, 1
      %p86 = scmp.ne.s32.totalorder %s81, %s83
      %p87 = scmp.eq.s32.totalorder %s26, 0
      %p88 = por %p86, %p87
      %p89 = scmp.ne.s32.totalorder %s81, %s83
      %p90 = scmp.eq.s32.totalorder %s31, 1
      %p91 = por %p89, %p90
      %p92 = scmp.ne.s32.totalorder %s83, %s84
      %p93 = scmp.eq.s32.totalorder %s31, 0
      %p94 = por %p92, %p93
      %p95 = scmp.ne.s32.totalorder %s83, %s84
      %p96 = scmp.eq.s32.totalorder %s32, 1
      %p97 = por %p95, %p96
      %p99 = scmp.ne.s32.totalorder %s84, %s98
      %p100 = scmp.eq.s32.totalorder %s32, 0
      %p101 = por %p99, %p100
      %s103 = sadd.s32 %s102, 1
      %p106 = scmp.eq.s32.totalorder %s26, 1
      %p107 = scmp.ne.s32.totalorder %s102, %s104
      %p108 = scmp.eq.s32.totalorder %s26, 0
      %p109 = por %p107, %p108
      %p110 = scmp.ne.s32.totalorder %s102, %s104
      %p111 = scmp.eq.s32.totalorder %s31, 1
      %p112 = por %p110, %p111
      %p113 = scmp.ne.s32.totalorder %s104, %s105
      %p114 = scmp.eq.s32.totalorder %s31, 0
      %p115 = por %p113, %p114
      %p116 = scmp.ne.s32.totalorder %s104, %s105
      %p117 = scmp.eq.s32.totalorder %s32, 1
      %p118 = por %p116, %p117
      %p120 = scmp.ne.s32.totalorder %s105, %s119
      %p121 = scmp.eq.s32.totalorder %s32, 0
      %p122 = por %p120, %p121
      %s124 = sadd.s32 %s123, 1
      %p127 = scmp.eq.s32.totalorder %s26, 1
      %p128 = scmp.ne.s32.totalorder %s123, %s125
      %p129 = scmp.eq.s32.totalorder %s26, 0
      %p130 = por %p128, %p129
      %p131 = scmp.ne.s32.totalorder %s123, %s125
      %p132 = scmp.eq.s32.totalorder %s31, 1
      %p133 = por %p131, %p132
      %p134 = scmp.ne.s32.totalorder %s125, %s126
      %p135 = scmp.eq.s32.totalorder %s31, 0
      %p136 = por %p134, %p135
      %p137 = scmp.ne.s32.totalorder %s125, %s126
      %p138 = scmp.eq.s32.totalorder %s32, 1
      %p139 = por %p137, %p138
      %p141 = scmp.ne.s32.totalorder %s126, %s140
      %p142 = scmp.eq.s32.totalorder %s32, 0
      %p143 = por %p141, %p142
      %s145 = sadd.s32 %s144, 1
      %p148 = scmp.eq.s32.totalorder %s26, 1
      %p149 = scmp.ne.s32.totalorder %s144, %s146
      %p150 = scmp.eq.s32.totalorder %s26, 0
      %p151 = por %p149, %p150
      %p152 = scmp.ne.s32.totalorder %s144, %s146
      %p153 = scmp.eq.s32.totalorder %s31, 1
      %p154 = por %p152, %p153
      %p155 = scmp.ne.s32.totalorder %s146, %s147
      %p156 = scmp.eq.s32.totalorder %s31, 0
      %p157 = por %p155, %p156
      %p158 = scmp.ne.s32.totalorder %s146, %s147
      %p159 = scmp.eq.s32.totalorder %s32, 1
      %p160 = por %p158, %p159
      %p162 = scmp.ne.s32.totalorder %s147, %s161
      %p163 = scmp.eq.s32.totalorder %s32, 0
      %p164 = por %p162, %p163
      %s166 = sadd.s32 %s165, 1
      %p169 = scmp.eq.s32.totalorder %s26, 1
      %p170 = scmp.ne.s32.totalorder %s165, %s167
      %p171 = scmp.eq.s32.totalorder %s26, 0
      %p172 = por %p170, %p171
      %p173 = scmp.ne.s32.totalorder %s165, %s167
      %p174 = scmp.eq.s32.totalorder %s31, 1
      %p175 = por %p173, %p174
      %p176 = scmp.ne.s32.totalorder %s167, %s168
      %p177 = scmp.eq.s32.totalorder %s31, 0
      %p178 = por %p176, %p177
      %p179 = scmp.ne.s32.totalorder %s167, %s168
      %p180 = scmp.eq.s32.totalorder %s32, 1
      %p181 = por %p179, %p180
      %p183 = scmp.ne.s32.totalorder %s168, %s182
      %p184 = scmp.eq.s32.totalorder %s32, 0
      %p185 = por %p183, %p184
      %s187 = sadd.s32 %s186, 1
      %p190 = scmp.eq.s32.totalorder %s26, 1
      %p191 = scmp.ne.s32.totalorder %s186, %s188
      %p192 = scmp.eq.s32.totalorder %s26, 0
      %p193 = por %p191, %p192
      %p194 = scmp.ne.s32.totalorder %s186, %s188
      %p195 = scmp.eq.s32.totalorder %s31, 1
      %p196 = por %p194, %p195
      %p197 = scmp.ne.s32.totalorder %s188, %s189
      %p198 = scmp.eq.s32.totalorder %s31, 0
      %p199 = por %p197, %p198
      %p200 = scmp.ne.s32.totalorder %s188, %s189
      %p201 = scmp.eq.s32.totalorder %s32, 1
      %p202 = por %p200, %p201
      %p204 = scmp.ne.s32.totalorder %s189, %s203
      %p205 = scmp.eq.s32.totalorder %s32, 0
      %p206 = por %p204, %p205
      %s208 = sadd.s32 %s207, 1
      %p211 = scmp.eq.s32.totalorder %s26, 1
      %p212 = scmp.ne.s32.totalorder %s207, %s209
      %p213 = scmp.eq.s32.totalorder %s26, 0
      %p214 = por %p212, %p213
      %p215 = scmp.ne.s32.totalorder %s207, %s209
      %p216 = scmp.eq.s32.totalorder %s31, 1
      %p217 = por %p215, %p216
      %p218 = scmp.ne.s32.totalorder %s209, %s210
      %p219 = scmp.eq.s32.totalorder %s31, 0
      %p220 = por %p218, %p219
      %p221 = scmp.ne.s32.totalorder %s209, %s210
      %p222 = scmp.eq.s32.totalorder %s32, 1
      %p223 = por %p221, %p222
      %p225 = scmp.ne.s32.totalorder %s210, %s224
      %p226 = scmp.eq.s32.totalorder %s32, 0
      %p227 = por %p225, %p226
      %s229 = sadd.s32 %s228, 1
      %p232 = scmp.eq.s32.totalorder %s26, 1
      %p233 = scmp.ne.s32.totalorder %s228, %s230
      %p234 = scmp.eq.s32.totalorder %s26, 0
      %p235 = por %p233, %p234
      %p236 = scmp.ne.s32.totalorder %s228, %s230
      %p237 = scmp.eq.s32.totalorder %s31, 1
      %p238 = por %p236, %p237
      %p239 = scmp.ne.s32.totalorder %s230, %s231
      %p240 = scmp.eq.s32.totalorder %s31, 0
      %p241 = por %p239, %p240
      %p242 = scmp.ne.s32.totalorder %s230, %s231
      %p243 = scmp.eq.s32.totalorder %s32, 1
      %p244 = por %p242, %p243
      %p246 = scmp.ne.s32.totalorder %s231, %s245
      %p247 = scmp.eq.s32.totalorder %s32, 0
      %p248 = por %p246, %p247
      %s250 = sadd.s32 %s249, 1
      %p253 = scmp.eq.s32.totalorder %s26, 1
      %p254 = scmp.ne.s32.totalorder %s249, %s251
      %p255 = scmp.eq.s32.totalorder %s26, 0
      %p256 = por %p254, %p255
      %p257 = scmp.ne.s32.totalorder %s249, %s251
      %p258 = scmp.eq.s32.totalorder %s31, 1
      %p259 = por %p257, %p258
      %p260 = scmp.ne.s32.totalorder %s251, %s252
      %p261 = scmp.eq.s32.totalorder %s31, 0
      %p262 = por %p260, %p261
      %p263 = scmp.ne.s32.totalorder %s251, %s252
      %p264 = scmp.eq.s32.totalorder %s32, 1
      %p265 = por %p263, %p264
      %p267 = scmp.ne.s32.totalorder %s252, %s266
      %p268 = scmp.eq.s32.totalorder %s32, 0
      %p269 = por %p267, %p268
      %s271 = sadd.s32 %s270, 1
      %p274 = scmp.eq.s32.totalorder %s26, 1
      %p275 = scmp.ne.s32.totalorder %s270, %s272
      %p276 = scmp.eq.s32.totalorder %s26, 0
      %p277 = por %p275, %p276
      %p278 = scmp.ne.s32.totalorder %s270, %s272
      %p279 = scmp.eq.s32.totalorder %s31, 1
      %p280 = por %p278, %p279
      %p281 = scmp.ne.s32.totalorder %s272, %s273
      %p282 = scmp.eq.s32.totalorder %s31, 0
      %p283 = por %p281, %p282
      %p284 = scmp.ne.s32.totalorder %s272, %s273
      %p285 = scmp.eq.s32.totalorder %s32, 1
      %p286 = por %p284, %p285
      %p288 = scmp.ne.s32.totalorder %s273, %s287
      %p289 = scmp.eq.s32.totalorder %s32, 0
      %p290 = por %p288, %p289
      %s292 = sadd.s32 %s291, 1
      %p295 = scmp.eq.s32.totalorder %s26, 1
      %p296 = scmp.ne.s32.totalorder %s291, %s293
      %p297 = scmp.eq.s32.totalorder %s26, 0
      %p298 = por %p296, %p297
      %p299 = scmp.ne.s32.totalorder %s291, %s293
      %p300 = scmp.eq.s32.totalorder %s31, 1
      %p301 = por %p299, %p300
      %p302 = scmp.ne.s32.totalorder %s293, %s294
      %p303 = scmp.eq.s32.totalorder %s31, 0
      %p304 = por %p302, %p303
      %p305 = scmp.ne.s32.totalorder %s293, %s294
      %p306 = scmp.eq.s32.totalorder %s32, 1
      %p307 = por %p305, %p306
      %p309 = scmp.ne.s32.totalorder %s294, %s308
      %p310 = scmp.eq.s32.totalorder %s32, 0
      %p311 = por %p309, %p310
      %s313 = sadd.s32 %s312, 1
      %p316 = scmp.eq.s32.totalorder %s26, 1
      %p317 = scmp.ne.s32.totalorder %s312, %s314
      %p318 = scmp.eq.s32.totalorder %s26, 0
      %p319 = por %p317, %p318
      %p320 = scmp.ne.s32.totalorder %s312, %s314
      %p321 = scmp.eq.s32.totalorder %s31, 1
      %p322 = por %p320, %p321
      %p323 = scmp.ne.s32.totalorder %s314, %s315
      %p324 = scmp.eq.s32.totalorder %s31, 0
      %p325 = por %p323, %p324
      %p326 = scmp.ne.s32.totalorder %s314, %s315
      %p327 = scmp.eq.s32.totalorder %s32, 1
      %p328 = por %p326, %p327
      %p330 = scmp.ne.s32.totalorder %s315, %s329
      %p331 = scmp.eq.s32.totalorder %s32, 0
      %p332 = por %p330, %p331
      %s334 = sadd.s32 %s333, 1
      %p337 = scmp.eq.s32.totalorder %s26, 1
      %p338 = scmp.ne.s32.totalorder %s333, %s335
      %p339 = scmp.eq.s32.totalorder %s26, 0
      %p340 = por %p338, %p339
      %p341 = scmp.ne.s32.totalorder %s333, %s335
      %p342 = scmp.eq.s32.totalorder %s31, 1
      %p343 = por %p341, %p342
      %p344 = scmp.ne.s32.totalorder %s335, %s336
      %p345 = scmp.eq.s32.totalorder %s31, 0
      %p346 = por %p344, %p345
      %p347 = scmp.ne.s32.totalorder %s335, %s336
      %p348 = scmp.eq.s32.totalorder %s32, 1
      %p349 = por %p347, %p348
      %p351 = scmp.ne.s32.totalorder %s336, %s350
      %p352 = scmp.eq.s32.totalorder %s32, 0
      %p353 = por %p351, %p352
      %s355 = sadd.s32 %s354, 1
      %p358 = scmp.eq.s32.totalorder %s26, 1
      %p359 = scmp.ne.s32.totalorder %s354, %s356
      %p360 = scmp.eq.s32.totalorder %s26, 0
      %p361 = por %p359, %p360
      %p362 = scmp.ne.s32.totalorder %s354, %s356
      %p363 = scmp.eq.s32.totalorder %s31, 1
      %p364 = por %p362, %p363
      %p365 = scmp.ne.s32.totalorder %s356, %s357
      %p366 = scmp.eq.s32.totalorder %s31, 0
      %p367 = por %p365, %p366
      %p368 = scmp.ne.s32.totalorder %s356, %s357
      %p369 = scmp.eq.s32.totalorder %s32, 1
      %p370 = por %p368, %p369
      %p372 = scmp.ne.s32.totalorder %s357, %s371
      %p373 = scmp.eq.s32.totalorder %s32, 0
      %p374 = por %p372, %p373
      %s376 = sadd.s32 %s375, 1
      %p379 = scmp.eq.s32.totalorder %s26, 1
      %p380 = scmp.ne.s32.totalorder %s375, %s377
      %p381 = scmp.eq.s32.totalorder %s26, 0
      %p382 = por %p380, %p381
      %p383 = scmp.ne.s32.totalorder %s375, %s377
      %p384 = scmp.eq.s32.totalorder %s31, 1
      %p385 = por %p383, %p384
      %p386 = scmp.ne.s32.totalorder %s377, %s378
      %p387 = scmp.eq.s32.totalorder %s31, 0
      %p388 = por %p386, %p387
      %p389 = scmp.ne.s32.totalorder %s377, %s378
      %p390 = scmp.eq.s32.totalorder %s32, 1
      %p391 = por %p389, %p390
      %p393 = scmp.ne.s32.totalorder %s378, %s392
      %p394 = scmp.eq.s32.totalorder %s32, 0
      %p395 = por %p393, %p394
      %s396 = ssub.s32 %s26, %s33
      %p397 = scmp.eq.s32.totalorder %s396, 0
      %s399 = sadd.s32 %s398, 1
      %s400 = scalar_select %p397, %s398, %s399
      %p403 = pneg %p397
      %p404 = scmp.eq.s32.totalorder %s26, 1
      %p405 = por %p403, %p404
      %p406 = scmp.ne.s32.totalorder %s398, %s401
      %p407 = scmp.eq.s32.totalorder %s26, 0
      %p408 = por %p406, %p407
      %p409 = scmp.ne.s32.totalorder %s398, %s401
      %p410 = scmp.eq.s32.totalorder %s31, 1
      %p411 = por %p409, %p410
      %p412 = scmp.ne.s32.totalorder %s401, %s402
      %p413 = scmp.eq.s32.totalorder %s31, 0
      %p414 = por %p412, %p413
      %p415 = scmp.ne.s32.totalorder %s401, %s402
      %p416 = scmp.eq.s32.totalorder %s32, 1
      %p417 = por %p415, %p416
      %p419 = scmp.ne.s32.totalorder %s402, %s418
      %p420 = scmp.eq.s32.totalorder %s32, 0
      %p421 = por %p419, %p420
      %p422 = scmp.le.s32.totalorder 1, %s26
      %p423 = scmp.lt.s32.totalorder %s26, 3
      %p424 = pnand %p422, %p423
      %p425 = pneg %p424
      // Predicated region
      $region9: #{vit_forward.1} parent=5 // pred_check
        _
      $region10: #{vit_forward.1} parent=5 // pred_check_branch
        %427 = sbr.rel (%p424) target = $region12
      $region11: #{vit_forward.1} parent=5 // pred_region
        %s428 = ssub.s32 %s26, 1
        // Predicated region
        $region13: #{vit_forward.1} parent=11 // pred_check
          %p429 = pneg %p73
        $region14: #{vit_forward.1} parent=11 // pred_check_branch
          %431 = sbr.rel (%p429) target = $region16
        $region15: #{vit_forward.1} parent=11 // pred_region
          _
        $region16: #{vit_forward.1} parent=11 // pred_fallthru
          _
        // Predicated region
        $region17: #{vit_forward.1} parent=11 // pred_check
          %p432 = pneg %p94
        $region18: #{vit_forward.1} parent=11 // pred_check_branch
          %434 = sbr.rel (%p432) target = $region20
        $region19: #{vit_forward.1} parent=11 // pred_region
          _
        $region20: #{vit_forward.1} parent=11 // pred_fallthru
          _
        // Predicated region
        $region21: #{vit_forward.1} parent=11 // pred_check
          %p435 = pneg %p115
        $region22: #{vit_forward.1} parent=11 // pred_check_branch
          %437 = sbr.rel (%p435) target = $region24
        $region23: #{vit_forward.1} parent=11 // pred_region
          _
        $region24: #{vit_forward.1} parent=11 // pred_fallthru
          _
        // Predicated region
        $region25: #{vit_forward.1} parent=11 // pred_check
          %p438 = pneg %p136
        $region26: #{vit_forward.1} parent=11 // pred_check_branch
          %440 = sbr.rel (%p438) target = $region28
        $region27: #{vit_forward.1} parent=11 // pred_region
          _
        $region28: #{vit_forward.1} parent=11 // pred_fallthru
          _
        // Predicated region
        $region29: #{vit_forward.1} parent=11 // pred_check
          %p441 = pneg %p157
        $region30: #{vit_forward.1} parent=11 // pred_check_branch
          %443 = sbr.rel (%p441) target = $region32
        $region31: #{vit_forward.1} parent=11 // pred_region
          _
        $region32: #{vit_forward.1} parent=11 // pred_fallthru
          _
        // Predicated region
        $region33: #{vit_forward.1} parent=11 // pred_check
          %p444 = pneg %p178
        $region34: #{vit_forward.1} parent=11 // pred_check_branch
          %446 = sbr.rel (%p444) target = $region36
        $region35: #{vit_forward.1} parent=11 // pred_region
          _
        $region36: #{vit_forward.1} parent=11 // pred_fallthru
          _
        // Predicated region
        $region37: #{vit_forward.1} parent=11 // pred_check
          %p447 = pneg %p199
        $region38: #{vit_forward.1} parent=11 // pred_check_branch
          %449 = sbr.rel (%p447) target = $region40
        $region39: #{vit_forward.1} parent=11 // pred_region
          _
        $region40: #{vit_forward.1} parent=11 // pred_fallthru
          _
        // Predicated region
        $region41: #{vit_forward.1} parent=11 // pred_check
          %p450 = pneg %p220
        $region42: #{vit_forward.1} parent=11 // pred_check_branch
          %452 = sbr.rel (%p450) target = $region44
        $region43: #{vit_forward.1} parent=11 // pred_region
          _
        $region44: #{vit_forward.1} parent=11 // pred_fallthru
          _
        // Predicated region
        $region45: #{vit_forward.1} parent=11 // pred_check
          %p453 = pneg %p241
        $region46: #{vit_forward.1} parent=11 // pred_check_branch
          %455 = sbr.rel (%p453) target = $region48
        $region47: #{vit_forward.1} parent=11 // pred_region
          _
        $region48: #{vit_forward.1} parent=11 // pred_fallthru
          _
        // Predicated region
        $region49: #{vit_forward.1} parent=11 // pred_check
          %p456 = pneg %p262
        $region50: #{vit_forward.1} parent=11 // pred_check_branch
          %458 = sbr.rel (%p456) target = $region52
        $region51: #{vit_forward.1} parent=11 // pred_region
          _
        $region52: #{vit_forward.1} parent=11 // pred_fallthru
          _
        // Predicated region
        $region53: #{vit_forward.1} parent=11 // pred_check
          %p459 = pneg %p283
        $region54: #{vit_forward.1} parent=11 // pred_check_branch
          %461 = sbr.rel (%p459) target = $region56
        $region55: #{vit_forward.1} parent=11 // pred_region
          _
        $region56: #{vit_forward.1} parent=11 // pred_fallthru
          _
        // Predicated region
        $region57: #{vit_forward.1} parent=11 // pred_check
          %p462 = pneg %p304
        $region58: #{vit_forward.1} parent=11 // pred_check_branch
          %464 = sbr.rel (%p462) target = $region60
        $region59: #{vit_forward.1} parent=11 // pred_region
          _
        $region60: #{vit_forward.1} parent=11 // pred_fallthru
          _
        // Predicated region
        $region61: #{vit_forward.1} parent=11 // pred_check
          %p465 = pneg %p325
        $region62: #{vit_forward.1} parent=11 // pred_check_branch
          %467 = sbr.rel (%p465) target = $region64
        $region63: #{vit_forward.1} parent=11 // pred_region
          _
        $region64: #{vit_forward.1} parent=11 // pred_fallthru
          _
        // Predicated region
        $region65: #{vit_forward.1} parent=11 // pred_check
          %p468 = pneg %p346
        $region66: #{vit_forward.1} parent=11 // pred_check_branch
          %470 = sbr.rel (%p468) target = $region68
        $region67: #{vit_forward.1} parent=11 // pred_region
          _
        $region68: #{vit_forward.1} parent=11 // pred_fallthru
          _
        // Predicated region
        $region69: #{vit_forward.1} parent=11 // pred_check
          %p471 = pneg %p367
        $region70: #{vit_forward.1} parent=11 // pred_check_branch
          %473 = sbr.rel (%p471) target = $region72
        $region71: #{vit_forward.1} parent=11 // pred_region
          _
        $region72: #{vit_forward.1} parent=11 // pred_fallthru
          _
        // Predicated region
        $region73: #{vit_forward.1} parent=11 // pred_check
          %p474 = pneg %p388
        $region74: #{vit_forward.1} parent=11 // pred_check_branch
          %476 = sbr.rel (%p474) target = $region76
        $region75: #{vit_forward.1} parent=11 // pred_region
          _
        $region76: #{vit_forward.1} parent=11 // pred_fallthru
          _
      $region12: #{vit_forward.1} parent=5 // pred_fallthru
        _
      %p477 = scmp.lt.s32.totalorder %s26, 2
      // Predicated region
      $region77: #{vit_forward.1} parent=5 // pred_check
        %p478 = pneg %p477
      $region78: #{vit_forward.1} parent=5 // pred_check_branch
        %480 = sbr.rel (%p478) target = $region80
      $region79: #{vit_forward.1} parent=5 // pred_region
        // Predicated region
        $region81: #{vit_forward.1} parent=79 // pred_check
          %p481 = pneg %p46
        $region82: #{vit_forward.1} parent=79 // pred_check_branch
          %483 = sbr.rel (%p481) target = $region84
        $region83: #{vit_forward.1} parent=79 // pred_region
          %p484 = scmp.lt.s32.totalorder %s26, 1
          %s485 = scalar_select %p484, %s26, 1
          %s486 = smul.addr %s485, 2
          %s487 = smul.addr %s486, 4
          %s488 = scalar_lea.vmem %s0, %s487
        $region84: #{vit_forward.1} parent=79 // pred_fallthru
          _
      $region80: #{vit_forward.1} parent=5 // pred_fallthru
        _
      %p489 = scmp.le.s32.totalorder 1, %s26
      %p490 = scmp.lt.s32.totalorder %s26, 3
      %p491 = pnand %p489, %p490
      %p492 = pneg %p491
      // Predicated region
      $region85: #{vit_forward.1} parent=5 // pred_check
        _
      $region86: #{vit_forward.1} parent=5 // pred_check_branch
        %494 = sbr.rel (%p491) target = $region88
      $region87: #{vit_forward.1} parent=5 // pred_region
        %s495 = ssub.s32 %s26, 1
        %p496 = scmp.lt.s32.totalorder %s31, 1
        %s497 = scalar_select %p496, %s31, 1
        %s498 = smul.addr %s497, 2
        %s499 = smul.addr %s498, 4
        %s500 = scalar_lea.vmem %s0, %s499
        %p501 = pneg %p52
        %p502 = pneg %p49
        %p503 = pneg %p73
        %p504 = pneg %p70
        %p505 = pneg %p94
        %p506 = pneg %p91
        %p507 = pneg %p115
        %p508 = pneg %p112
        %p509 = pneg %p136
        %p510 = pneg %p133
        %p511 = pneg %p157
        %p512 = pneg %p154
        %p513 = pneg %p178
        %p514 = pneg %p175
        %p515 = pneg %p199
        %p516 = pneg %p196
        %p517 = pneg %p220
        %p518 = pneg %p217
        %p519 = pneg %p241
        %p520 = pneg %p238
        %p521 = pneg %p262
        %p522 = pneg %p259
        %p523 = pneg %p283
        %p524 = pneg %p280
        %p525 = pneg %p304
        %p526 = pneg %p301
        %p527 = pneg %p325
        %p528 = pneg %p322
        %p529 = pneg %p346
        %p530 = pneg %p343
        %p531 = pneg %p367
        %p532 = pneg %p364
        %p533 = pneg %p388
        %p534 = pneg %p385
        %p535 = pneg %p414
        %p536 = pneg %p411
        %s537 = sand.u32 %s401, 1
        %s538 = scalar_lea.sflag [#allocation3], %s537
        %s539 = sand.u32 %s401, 1
        %s540 = scalar_lea.vmem [#allocation2], %s539
        %p541 = scmp.lt.s32.totalorder %s31, 1
        %s542 = scalar_select %p541, %s31, 1
        %s543 = smul.addr %s542, 2
        %s544 = smul.addr %s543, 4
        %s545 = scalar_lea.vmem %s0, %s544
        %v547 = vld [vmem:[%s545] sm:$0xff]
        %v548 = vld [vmem:[%s1] sm:$0xf]
        %v549 = vld [vmem:[%s1 + $0x4] sm:$0xf]
        %v550 = vld [vmem:[%s1 + $0x8] sm:$0xf]
        %v551 = vld [vmem:[%s1 + $0xc] sm:$0xf]
        %v552 = vld [vmem:[%s1 + $0x10] sm:$0xf]
        %v553 = vld [vmem:[%s1 + $0x14] sm:$0xf]
        %v554 = vld [vmem:[%s1 + $0x18] sm:$0xf]
        %v555 = vld [vmem:[%s1 + $0x1c] sm:$0xf]
        %v556 = vld [vmem:[%s1 + $0x20] sm:$0xf]
        %v557 = vld [vmem:[%s1 + $0x24] sm:$0xf]
        %v558 = vld [vmem:[%s1 + $0x28] sm:$0xf]
        %v559 = vld [vmem:[%s1 + $0x2c] sm:$0xf]
        %v560 = vld [vmem:[%s1 + $0x30] sm:$0xf]
        %v561 = vld [vmem:[%s1 + $0x34] sm:$0xf]
        %v562 = vld [vmem:[%s1 + $0x38] sm:$0xf]
        %v563 = vld [vmem:[%s1 + $0x3c] sm:$0xf]
        %v564 = vld [vmem:[%s1 + $0x40] sm:$0xf]
        %v565 = vld [vmem:[%s1 + $0x44] sm:$0xf]
        %v566 = vld [vmem:[%s1 + $0x48] sm:$0xf]
        %v567 = vld [vmem:[%s1 + $0x4c] sm:$0xf]
        %v568 = vld [vmem:[%s1 + $0x50] sm:$0xf]
        %v569 = vld [vmem:[%s1 + $0x54] sm:$0xf]
        %v570 = vld [vmem:[%s1 + $0x58] sm:$0xf]
        %v571 = vld [vmem:[%s1 + $0x5c] sm:$0xf]
        %v572 = vld [vmem:[%s2] sm:$0x1]
        %v574 = vcombine.high %v547, %v547
        %v576 = vpack.c.bf16 %v547, %v547
        %v577 = vpack.c.bf16 %v574, %v574
        %v579 = vlaneseq
        %v580 = vshrl.u32 %v579, 7
        %v581 = vsub.s32 0, %v580
        %v582 = vrot.slane %v572, %v581
        %v608 = vunpack.c.l.b16 %v548
        %v609 = vunpack.c.l.b16 %v549
        %v610 = vunpack.c.l.b16 %v550
        %v611 = vunpack.c.l.b16 %v551
        %v612 = vunpack.c.l.b16 %v552
        %v613 = vunpack.c.l.b16 %v553
        %v614 = vunpack.c.l.b16 %v554
        %v615 = vunpack.c.l.b16 %v555
        %v616 = vunpack.c.l.b16 %v556
        %v617 = vunpack.c.l.b16 %v557
        %v618 = vunpack.c.l.b16 %v558
        %v619 = vunpack.c.l.b16 %v559
        %v620 = vunpack.c.l.b16 %v560
        %v621 = vunpack.c.l.b16 %v561
        %v622 = vunpack.c.l.b16 %v562
        %v623 = vunpack.c.l.b16 %v563
        %v624 = vunpack.c.l.b16 %v564
        %v625 = vunpack.c.l.b16 %v565
        %v626 = vunpack.c.l.b16 %v566
        %v627 = vunpack.c.l.b16 %v567
        %v628 = vunpack.c.l.b16 %v568
        %v629 = vunpack.c.l.b16 %v569
        %v630 = vunpack.c.l.b16 %v570
        %v631 = vunpack.c.l.b16 %v571
        %v632 = vpack.c.b16 %v609, %v608
        %v633 = vpack.c.b16 %v611, %v610
        %v634 = vpack.c.b16 %v613, %v612
        %v635 = vpack.c.b16 %v615, %v614
        %v636 = vpack.c.b16 %v617, %v616
        %v637 = vpack.c.b16 %v619, %v618
        %v638 = vpack.c.b16 %v621, %v620
        %v639 = vpack.c.b16 %v623, %v622
        %v640 = vpack.c.b16 %v625, %v624
        %v641 = vpack.c.b16 %v627, %v626
        %v642 = vpack.c.b16 %v629, %v628
        %v643 = vpack.c.b16 %v631, %v630
        %vm656 = vcmask 523264
        %v658 = vsel %vm656, %v577, 0
        %660 = vmatprep.subr.bf16.mxu0 0
        %661 = vmatpush1.bf16.msra.mxu0 %v632
        %662 = vmatprep.subr.bf16.mxu0 0
        %663 = vmatpush1.bf16.msra.mxu0 %v633
        %664 = vmatprep.subr.bf16.mxu0 0
        %665 = vmatpush1.bf16.msra.mxu0 %v634
        %666 = vmatprep.subr.bf16.mxu0 0
        %667 = vmatpush1.bf16.msra.mxu0 %v635
        %668 = vmatprep.subr.bf16.mxu0 0
        %669 = vmatpush1.bf16.msra.mxu0 %v636
        %670 = vmatprep.subr.bf16.mxu0 0
        %671 = vmatpush1.bf16.msra.mxu0 %v637
        %672 = vmatprep.subr.bf16.mxu0 0
        %673 = vmatpush1.bf16.msra.mxu0 %v638
        %674 = vmatprep.subr.bf16.mxu0 0
        %675 = vmatpush1.bf16.msra.mxu0 %v639
        %676 = vmatprep.subr.bf16.mxu0 0
        %677 = vmatpush1.bf16.msra.mxu0 %v640
        %678 = vmatprep.subr.bf16.mxu0 0
        %679 = vmatpush1.bf16.msra.mxu0 %v641
        %680 = vmatprep.subr.bf16.mxu0 0
        %681 = vmatpush1.bf16.msra.mxu0 %v642
        %682 = vmatprep.subr.bf16.mxu0 0
        %683 = vmatpush1.bf16.msra.mxu0 %v643
        %684 = vmatprep.subr.bf16.mxu0 0
        %685 = vmatpush1.bf16.msra.mxu0 0
        %686 = vmatprep.subr.bf16.mxu0 0
        %687 = vmatpush1.bf16.msra.mxu0 0
        %688 = vmatprep.subr.bf16.mxu0 0
        %689 = vmatpush1.bf16.msra.mxu0 0
        %690 = vmatprep.subr.bf16.mxu0 0
        %691 = vmatpush1.bf16.msra.mxu0 0
        %692 = vmatprep.mubr.bf16.mxu0 %v658
        %693 = vmatmul.mubr.bf16.gmra.mrb[0].mxu0 %v576
        %v694 = vpop.f32.mrb[0].mxu0
        %v695 = vadd.f32 %v582, %v694
        %v696 = vpop.f32.mrb[0].mxu0
        %v697 = vpop.f32.mrb[0].mxu0
        %v698 = vpop.f32.mrb[0].mxu0
        %699 = vdwg.mxu0
        %v700 = vld [vmem:[%s3] sm:$0x1]
        %v702 = vrot.slane %v695, 7
        %vm704 = vcmask 1040384
        %v705 = vsel %vm704, %v700, %v702
        %v706 = vld [vmem:[%s4] sm:$0x1f]
        %v707 = vadd.f32 %v705, %v706
        %vm708 = vcmask 258048
        %v709 = vsel %vm708, %v707, 0.0
        %710 = vadd.xlane.f32.xlu0 %v709
        %v711 = vpop.xlane.xlu0 %710
        %v712 = vrcp.pop 32.0
        %v713 = vmul.f32 %v711, %v712
        %v714 = vsub.f32 %v707, %v713
        %v715 = vmul.f32 %v714, %v714
        %v716 = vsel %vm708, %v715, 0.0
        %717 = vadd.xlane.f32.xlu0 %v716
        %v718 = vpop.xlane.xlu0 %717
        %v719 = vmul.f32 %v718, %v712
        %v720 = vadd.f32 %v719, 1e-06
        %v721 = vrsqrt.pop %v720
        %v722 = vmul.f32 %v714, %v721
        %v723 = vld [vmem:[%s5] sm:$0xf]
        %v724 = vld [vmem:[%s5 + $0x4] sm:$0xf]
        %v725 = vld [vmem:[%s5 + $0x8] sm:$0xf]
        %v726 = vld [vmem:[%s5 + $0xc] sm:$0xf]
        %v727 = vld [vmem:[%s6] sm:$0x1]
        %v728 = vpack.c.bf16 %v722, %v722
        %v730 = vlaneseq
        %v731 = vshrl.u32 %v730, 7
        %v732 = vsub.s32 0, %v731
        %v733 = vrot.slane %v727, %v732
        %v739 = vunpack.c.l.b16 %v723
        %v740 = vunpack.c.l.b16 %v724
        %v741 = vunpack.c.l.b16 %v725
        %v742 = vunpack.c.l.b16 %v726
        %v743 = vpack.c.b16 %v740, %v739
        %v744 = vpack.c.b16 %v742, %v741
        %vm747 = vcmask 261120
        %v749 = vsel %vm747, %v728, 0
        %751 = vmatprep.subr.bf16.mxu0 0
        %752 = vmatpush1.bf16.msra.mxu0 %v743
        %753 = vmatprep.subr.bf16.mxu0 0
        %754 = vmatpush1.bf16.msra.mxu0 %v744
        %755 = vmatprep.subr.bf16.mxu0 0
        %756 = vmatpush1.bf16.msra.mxu0 0
        %757 = vmatprep.subr.bf16.mxu0 0
        %758 = vmatpush1.bf16.msra.mxu0 0
        %759 = vmatprep.subr.bf16.mxu0 0
        %760 = vmatpush1.bf16.msra.mxu0 0
        %761 = vmatprep.subr.bf16.mxu0 0
        %762 = vmatpush1.bf16.msra.mxu0 0
        %763 = vmatprep.subr.bf16.mxu0 0
        %764 = vmatpush1.bf16.msra.mxu0 0
        %765 = vmatprep.subr.bf16.mxu0 0
        %766 = vmatpush1.bf16.msra.mxu0 0
        %767 = vmatprep.subr.bf16.mxu0 0
        %768 = vmatpush1.bf16.msra.mxu0 0
        %769 = vmatprep.subr.bf16.mxu0 0
        %770 = vmatpush1.bf16.msra.mxu0 0
        %771 = vmatprep.subr.bf16.mxu0 0
        %772 = vmatpush1.bf16.msra.mxu0 0
        %773 = vmatprep.subr.bf16.mxu0 0
        %774 = vmatpush1.bf16.msra.mxu0 0
        %775 = vmatprep.subr.bf16.mxu0 0
        %776 = vmatpush1.bf16.msra.mxu0 0
        %777 = vmatprep.subr.bf16.mxu0 0
        %778 = vmatpush1.bf16.msra.mxu0 0
        %779 = vmatprep.subr.bf16.mxu0 0
        %780 = vmatpush1.bf16.msra.mxu0 0
        %781 = vmatprep.subr.bf16.mxu0 0
        %782 = vmatpush1.bf16.msra.mxu0 0
        %783 = vmatprep.mubr.bf16.mxu0 0
        %784 = vmatmul.mubr.bf16.gmra.mrb[0].mxu0 %v749
        %v785 = vpop.f32.mrb[0].mxu0
        %v786 = vadd.f32 %v733, %v785
        %v787 = vpop.f32.mrb[0].mxu0
        %v788 = vpop.f32.mrb[0].mxu0
        %v789 = vpop.f32.mrb[0].mxu0
        %790 = vdwg.mxu0
        %v791 = vpack.c.bf16 %v786, %v786
        %793 = vrot.lane.b32.xlu0 %v791, 96
        %v794 = vpop.permute.xlu0 %793
        %vm795 = vcmask 64512
        %v797 = vsel %vm795, %v791, 0
        %v800 = vsel %vm795, %v794, 0
        %802 = vmatprep.subr.bf16.mxu0 0
        %803 = vmatpush1.bf16.xpose.msra.mxu0 %v800
        %804 = vmatprep.subr.bf16.mxu0 0
        %805 = vmatpush1.bf16.xpose.msra.mxu0 0
        %806 = vmatprep.subr.bf16.mxu0 0
        %807 = vmatpush1.bf16.xpose.msra.mxu0 0
        %808 = vmatprep.subr.bf16.mxu0 0
        %809 = vmatpush1.bf16.xpose.msra.mxu0 0
        %810 = vmatprep.subr.bf16.mxu0 0
        %811 = vmatpush1.bf16.xpose.msra.mxu0 0
        %812 = vmatprep.subr.bf16.mxu0 0
        %813 = vmatpush1.bf16.xpose.msra.mxu0 0
        %814 = vmatprep.subr.bf16.mxu0 0
        %815 = vmatpush1.bf16.xpose.msra.mxu0 0
        %816 = vmatprep.subr.bf16.mxu0 0
        %817 = vmatpush1.bf16.xpose.msra.mxu0 0
        %818 = vmatprep.subr.bf16.mxu0 0
        %819 = vmatpush1.bf16.xpose.msra.mxu0 0
        %820 = vmatprep.subr.bf16.mxu0 0
        %821 = vmatpush1.bf16.xpose.msra.mxu0 0
        %822 = vmatprep.subr.bf16.mxu0 0
        %823 = vmatpush1.bf16.xpose.msra.mxu0 0
        %824 = vmatprep.subr.bf16.mxu0 0
        %825 = vmatpush1.bf16.xpose.msra.mxu0 0
        %826 = vmatprep.subr.bf16.mxu0 0
        %827 = vmatpush1.bf16.xpose.msra.mxu0 0
        %828 = vmatprep.subr.bf16.mxu0 0
        %829 = vmatpush1.bf16.xpose.msra.mxu0 0
        %830 = vmatprep.subr.bf16.mxu0 0
        %831 = vmatpush1.bf16.xpose.msra.mxu0 0
        %832 = vmatprep.subr.bf16.mxu0 0
        %833 = vmatpush1.bf16.xpose.msra.mxu0 0
        %834 = vmatprep.mubr.bf16.mxu0 0
        %835 = vmatmul.mubr.bf16.gmra.mrb[0].mxu0 %v797
        %v836 = vpop.f32.mrb[0].mxu0
        %v837 = vadd.f32 0.0, %v836
        %v838 = vpop.f32.mrb[0].mxu0
        %v839 = vpop.f32.mrb[0].mxu0
        %v840 = vpop.f32.mrb[0].mxu0
        %841 = vdwg.mxu0
        %v842 = vmul.f32 %v837, 0.35355338
        %vm843 = vcmask 36864
        %v844 = vsel %vm843, %v842, -inf
        %845 = vmax.xlane.f32.xlu0 %v844
        %v846 = vpop.xlane.xlu0 %845
        %v847 = vsub.f32 %v842, %v846
        %v848 = vmul.f32 %v847, 1.442695
        %v849 = vpow.pop %v848
        %v850 = vsel %vm843, %v849, 0.0
        %851 = vadd.xlane.f32.xlu0 %v850
        %v852 = vpop.xlane.xlu0 %851
        %v853 = vrcp.pop %v852
        %v854 = vmul.f32 %v849, %v853
        %v855 = vpack.c.bf16 %v854, %v854
        %856 = vrot.lane.b32.xlu0 %v791, 64
        %v857 = vpop.permute.xlu0 %856
        %vm858 = vcmask 39936
        %v860 = vsel %vm858, %v855, 0
        %vm862 = vcmask 1041408
        %vm863 = vcmask 1042432
        %v864 = vsel %vm862, 4294967295, 65535
        %v865 = vsel %vm863, %v864, 0
        %v867 = vand.u32 %v857, %v865
        %869 = vmatprep.subr.bf16.mxu0 0
        %870 = vmatpush1.bf16.msra.mxu0 %v867
        %871 = vmatprep.subr.bf16.mxu0 0
        %872 = vmatpush1.bf16.msra.mxu0 0
        %873 = vmatprep.subr.bf16.mxu0 0
        %874 = vmatpush1.bf16.msra.mxu0 0
        %875 = vmatprep.subr.bf16.mxu0 0
        %876 = vmatpush1.bf16.msra.mxu0 0
        %877 = vmatprep.subr.bf16.mxu0 0
        %878 = vmatpush1.bf16.msra.mxu0 0
        %879 = vmatprep.subr.bf16.mxu0 0
        %880 = vmatpush1.bf16.msra.mxu0 0
        %881 = vmatprep.subr.bf16.mxu0 0
        %882 = vmatpush1.bf16.msra.mxu0 0
        %883 = vmatprep.subr.bf16.mxu0 0
        %884 = vmatpush1.bf16.msra.mxu0 0
        %885 = vmatprep.subr.bf16.mxu0 0
        %886 = vmatpush1.bf16.msra.mxu0 0
        %887 = vmatprep.subr.bf16.mxu0 0
        %888 = vmatpush1.bf16.msra.mxu0 0
        %889 = vmatprep.subr.bf16.mxu0 0
        %890 = vmatpush1.bf16.msra.mxu0 0
        %891 = vmatprep.subr.bf16.mxu0 0
        %892 = vmatpush1.bf16.msra.mxu0 0
        %893 = vmatprep.subr.bf16.mxu0 0
        %894 = vmatpush1.bf16.msra.mxu0 0
        %895 = vmatprep.subr.bf16.mxu0 0
        %896 = vmatpush1.bf16.msra.mxu0 0
        %897 = vmatprep.subr.bf16.mxu0 0
        %898 = vmatpush1.bf16.msra.mxu0 0
        %899 = vmatprep.subr.bf16.mxu0 0
        %900 = vmatpush1.bf16.msra.mxu0 0
        %901 = vmatprep.mubr.bf16.mxu0 0
        %902 = vmatmul.mubr.bf16.gmra.mrb[0].mxu0 %v860
        %v903 = vpop.f32.mrb[0].mxu0
        %v904 = vadd.f32 0.0, %v903
        %v905 = vpop.f32.mrb[0].mxu0
        %v906 = vpop.f32.mrb[0].mxu0
        %v907 = vpop.f32.mrb[0].mxu0
        %908 = vdwg.mxu0
        %909 = vrot.lane.b32.xlu0 %v791, 120
        %v910 = vpop.permute.xlu0 %909
        %911 = vrot.lane.b32.xlu0 %v791, 88
        %v912 = vpop.permute.xlu0 %911
        %v914 = vsel %vm795, %v910, 0
        %v917 = vsel %vm795, %v912, 0
        %919 = vmatprep.subr.bf16.mxu0 0
        %920 = vmatpush1.bf16.xpose.msra.mxu0 %v917
        %921 = vmatprep.subr.bf16.mxu0 0
        %922 = vmatpush1.bf16.xpose.msra.mxu0 0
        %923 = vmatprep.subr.bf16.mxu0 0
        %924 = vmatpush1.bf16.xpose.msra.mxu0 0
        %925 = vmatprep.subr.bf16.mxu0 0
        %926 = vmatpush1.bf16.xpose.msra.mxu0 0
        %927 = vmatprep.subr.bf16.mxu0 0
        %928 = vmatpush1.bf16.xpose.msra.mxu0 0
        %929 = vmatprep.subr.bf16.mxu0 0
        %930 = vmatpush1.bf16.xpose.msra.mxu0 0
        %931 = vmatprep.subr.bf16.mxu0 0
        %932 = vmatpush1.bf16.xpose.msra.mxu0 0
        %933 = vmatprep.subr.bf16.mxu0 0
        %934 = vmatpush1.bf16.xpose.msra.mxu0 0
        %935 = vmatprep.subr.bf16.mxu0 0
        %936 = vmatpush1.bf16.xpose.msra.mxu0 0
        %937 = vmatprep.subr.bf16.mxu0 0
        %938 = vmatpush1.bf16.xpose.msra.mxu0 0
        %939 = vmatprep.subr.bf16.mxu0 0
        %940 = vmatpush1.bf16.xpose.msra.mxu0 0
        %941 = vmatprep.subr.bf16.mxu0 0
        %942 = vmatpush1.bf16.xpose.msra.mxu0 0
        %943 = vmatprep.subr.bf16.mxu0 0
        %944 = vmatpush1.bf16.xpose.msra.mxu0 0
        %945 = vmatprep.subr.bf16.mxu0 0
        %946 = vmatpush1.bf16.xpose.msra.mxu0 0
        %947 = vmatprep.subr.bf16.mxu0 0
        %948 = vmatpush1.bf16.xpose.msra.mxu0 0
        %949 = vmatprep.subr.bf16.mxu0 0
        %950 = vmatpush1.bf16.xpose.msra.mxu0 0
        %951 = vmatprep.mubr.bf16.mxu0 0
        %952 = vmatmul.mubr.bf16.gmra.mrb[0].mxu0 %v914
        %v953 = vpop.f32.mrb[0].mxu0
        %v954 = vadd.f32 0.0, %v953
        %v955 = vpop.f32.mrb[0].mxu0
        %v956 = vpop.f32.mrb[0].mxu0
        %v957 = vpop.f32.mrb[0].mxu0
        %958 = vdwg.mxu0
        %v959 = vmul.f32 %v954, 0.35355338
        %v960 = vsel %vm843, %v959, -inf
        %961 = vmax.xlane.f32.xlu0 %v960
        %v962 = vpop.xlane.xlu0 %961
        %v963 = vsub.f32 %v959, %v962
        %v964 = vmul.f32 %v963, 1.442695
        %v965 = vpow.pop %v964
        %v966 = vsel %vm843, %v965, 0.0
        %967 = vadd.xlane.f32.xlu0 %v966
        %v968 = vpop.xlane.xlu0 %967
        %v969 = vrcp.pop %v968
        %v970 = vmul.f32 %v965, %v969
        %v971 = vpack.c.bf16 %v970, %v970
        %972 = vrot.lane.b32.xlu0 %v791, 56
        %v973 = vpop.permute.xlu0 %972
        %v975 = vsel %vm858, %v971, 0
        %v978 = vand.u32 %v973, %v865
        %980 = vmatprep.subr.bf16.mxu0 0
        %981 = vmatpush1.bf16.msra.mxu0 %v978
        %982 = vmatprep.subr.bf16.mxu0 0
        %983 = vmatpush1.bf16.msra.mxu0 0
        %984 = vmatprep.subr.bf16.mxu0 0
        %985 = vmatpush1.bf16.msra.mxu0 0
        %986 = vmatprep.subr.bf16.mxu0 0
        %987 = vmatpush1.bf16.msra.mxu0 0
        %988 = vmatprep.subr.bf16.mxu0 0
        %989 = vmatpush1.bf16.msra.mxu0 0
        %990 = vmatprep.subr.bf16.mxu0 0
        %991 = vmatpush1.bf16.msra.mxu0 0
        %992 = vmatprep.subr.bf16.mxu0 0
        %993 = vmatpush1.bf16.msra.mxu0 0
        %994 = vmatprep.subr.bf16.mxu0 0
        %995 = vmatpush1.bf16.msra.mxu0 0
        %996 = vmatprep.subr.bf16.mxu0 0
        %997 = vmatpush1.bf16.msra.mxu0 0
        %998 = vmatprep.subr.bf16.mxu0 0
        %999 = vmatpush1.bf16.msra.mxu0 0
        %1000 = vmatprep.subr.bf16.mxu0 0
        %1001 = vmatpush1.bf16.msra.mxu0 0
        %1002 = vmatprep.subr.bf16.mxu0 0
        %1003 = vmatpush1.bf16.msra.mxu0 0
        %1004 = vmatprep.subr.bf16.mxu0 0
        %1005 = vmatpush1.bf16.msra.mxu0 0
        %1006 = vmatprep.subr.bf16.mxu0 0
        %1007 = vmatpush1.bf16.msra.mxu0 0
        %1008 = vmatprep.subr.bf16.mxu0 0
        %1009 = vmatpush1.bf16.msra.mxu0 0
        %1010 = vmatprep.subr.bf16.mxu0 0
        %1011 = vmatpush1.bf16.msra.mxu0 0
        %1012 = vmatprep.mubr.bf16.mxu0 0
        %1013 = vmatmul.mubr.bf16.gmra.mrb[0].mxu0 %v975
        %v1014 = vpop.f32.mrb[0].mxu0
        %v1015 = vadd.f32 0.0, %v1014
        %v1016 = vpop.f32.mrb[0].mxu0
        %v1017 = vpop.f32.mrb[0].mxu0
        %v1018 = vpop.f32.mrb[0].mxu0
        %1019 = vdwg.mxu0
        %1020 = vrot.lane.b32.xlu0 %v791, 112
        %v1021 = vpop.permute.xlu0 %1020
        %1022 = vrot.lane.b32.xlu0 %v791, 80
        %v1023 = vpop.permute.xlu0 %1022
        %v1025 = vsel %vm795, %v1021, 0
        %v1028 = vsel %vm795, %v1023, 0
        %1030 = vmatprep.subr.bf16.mxu0 0
        %1031 = vmatpush1.bf16.xpose.msra.mxu0 %v1028
        %1032 = vmatprep.subr.bf16.mxu0 0
        %1033 = vmatpush1.bf16.xpose.msra.mxu0 0
        %1034 = vmatprep.subr.bf16.mxu0 0
        %1035 = vmatpush1.bf16.xpose.msra.mxu0 0
        %1036 = vmatprep.subr.bf16.mxu0 0
        %1037 = vmatpush1.bf16.xpose.msra.mxu0 0
        %1038 = vmatprep.subr.bf16.mxu0 0
        %1039 = vmatpush1.bf16.xpose.msra.mxu0 0
        %1040 = vmatprep.subr.bf16.mxu0 0
        %1041 = vmatpush1.bf16.xpose.msra.mxu0 0
        %1042 = vmatprep.subr.bf16.mxu0 0
        %1043 = vmatpush1.bf16.xpose.msra.mxu0 0
        %1044 = vmatprep.subr.bf16.mxu0 0
        %1045 = vmatpush1.bf16.xpose.msra.mxu0 0
        %1046 = vmatprep.subr.bf16.mxu0 0
        %1047 = vmatpush1.bf16.xpose.msra.mxu0 0
        %1048 = vmatprep.subr.bf16.mxu0 0
        %1049 = vmatpush1.bf16.xpose.msra.mxu0 0
        %1050 = vmatprep.subr.bf16.mxu0 0
        %1051 = vmatpush1.bf16.xpose.msra.mxu0 0
        %1052 = vmatprep.subr.bf16.mxu0 0
        %1053 = vmatpush1.bf16.xpose.msra.mxu0 0
        %1054 = vmatprep.subr.bf16.mxu0 0
        %1055 = vmatpush1.bf16.xpose.msra.mxu0 0
        %1056 = vmatprep.subr.bf16.mxu0 0
        %1057 = vmatpush1.bf16.xpose.msra.mxu0 0
        %1058 = vmatprep.subr.bf16.mxu0 0
        %1059 = vmatpush1.bf16.xpose.msra.mxu0 0
        %1060 = vmatprep.subr.bf16.mxu0 0
        %1061 = vmatpush1.bf16.xpose.msra.mxu0 0
        %1062 = vmatprep.mubr.bf16.mxu0 0
        %1063 = vmatmul.mubr.bf16.gmra.mrb[0].mxu0 %v1025
        %v1064 = vpop.f32.mrb[0].mxu0
        %v1065 = vadd.f32 0.0, %v1064
        %v1066 = vpop.f32.mrb[0].mxu0
        %v1067 = vpop.f32.mrb[0].mxu0
        %v1068 = vpop.f32.mrb[0].mxu0
        %1069 = vdwg.mxu0
        %v1070 = vmul.f32 %v1065, 0.35355338
        %v1071 = vsel %vm843, %v1070, -inf
        %1072 = vmax.xlane.f32.xlu0 %v1071
        %v1073 = vpop.xlane.xlu0 %1072
        %v1074 = vsub.f32 %v1070, %v1073
        %v1075 = vmul.f32 %v1074, 1.442695
        %v1076 = vpow.pop %v1075
        %v1077 = vsel %vm843, %v1076, 0.0
        %1078 = vadd.xlane.f32.xlu0 %v1077
        %v1079 = vpop.xlane.xlu0 %1078
        %v1080 = vrcp.pop %v1079
        %v1081 = vmul.f32 %v1076, %v1080
        %v1082 = vpack.c.bf16 %v1081, %v1081
        %1083 = vrot.lane.b32.xlu0 %v791, 48
        %v1084 = vpop.permute.xlu0 %1083
        %v1086 = vsel %vm858, %v1082, 0
        %v1089 = vand.u32 %v1084, %v865
        %1091 = vmatprep.subr.bf16.mxu0 0
        %1092 = vmatpush1.bf16.msra.mxu0 %v1089
        %1093 = vmatprep.subr.bf16.mxu0 0
        %1094 = vmatpush1.bf16.msra.mxu0 0
        %1095 = vmatprep.subr.bf16.mxu0 0
        %1096 = vmatpush1.bf16.msra.mxu0 0
        %1097 = vmatprep.subr.bf16.mxu0 0
        %1098 = vmatpush1.bf16.msra.mxu0 0
        %1099 = vmatprep.subr.bf16.mxu0 0
        %1100 = vmatpush1.bf16.msra.mxu0 0
        %1101 = vmatprep.subr.bf16.mxu0 0
        %1102 = vmatpush1.bf16.msra.mxu0 0
        %1103 = vmatprep.subr.bf16.mxu0 0
        %1104 = vmatpush1.bf16.msra.mxu0 0
        %1105 = vmatprep.subr.bf16.mxu0 0
        %1106 = vmatpush1.bf16.msra.mxu0 0
        %1107 = vmatprep.subr.bf16.mxu0 0
        %1108 = vmatpush1.bf16.msra.mxu0 0
        %1109 = vmatprep.subr.bf16.mxu0 0
        %1110 = vmatpush1.bf16.msra.mxu0 0
        %1111 = vmatprep.subr.bf16.mxu0 0
        %1112 = vmatpush1.bf16.msra.mxu0 0
        %1113 = vmatprep.subr.bf16.mxu0 0
        %1114 = vmatpush1.bf16.msra.mxu0 0
        %1115 = vmatprep.subr.bf16.mxu0 0
        %1116 = vmatpush1.bf16.msra.mxu0 0
        %1117 = vmatprep.subr.bf16.mxu0 0
        %1118 = vmatpush1.bf16.msra.mxu0 0
        %1119 = vmatprep.subr.bf16.mxu0 0
        %1120 = vmatpush1.bf16.msra.mxu0 0
        %1121 = vmatprep.subr.bf16.mxu0 0
        %1122 = vmatpush1.bf16.msra.mxu0 0
        %1123 = vmatprep.mubr.bf16.mxu0 0
        %1124 = vmatmul.mubr.bf16.gmra.mrb[0].mxu0 %v1086
        %v1125 = vpop.f32.mrb[0].mxu0
        %v1126 = vadd.f32 0.0, %v1125
        %v1127 = vpop.f32.mrb[0].mxu0
        %v1128 = vpop.f32.mrb[0].mxu0
        %v1129 = vpop.f32.mrb[0].mxu0
        %1130 = vdwg.mxu0
        %1131 = vrot.lane.b32.xlu0 %v791, 104
        %v1132 = vpop.permute.xlu0 %1131
        %1133 = vrot.lane.b32.xlu0 %v791, 72
        %v1134 = vpop.permute.xlu0 %1133
        %v1136 = vsel %vm795, %v1132, 0
        %v1139 = vsel %vm795, %v1134, 0
        %1141 = vmatprep.subr.bf16.mxu0 0
        %1142 = vmatpush1.bf16.xpose.msra.mxu0 %v1139
        %1143 = vmatprep.subr.bf16.mxu0 0
        %1144 = vmatpush1.bf16.xpose.msra.mxu0 0
        %1145 = vmatprep.subr.bf16.mxu0 0
        %1146 = vmatpush1.bf16.xpose.msra.mxu0 0
        %1147 = vmatprep.subr.bf16.mxu0 0
        %1148 = vmatpush1.bf16.xpose.msra.mxu0 0
        %1149 = vmatprep.subr.bf16.mxu0 0
        %1150 = vmatpush1.bf16.xpose.msra.mxu0 0
        %1151 = vmatprep.subr.bf16.mxu0 0
        %1152 = vmatpush1.bf16.xpose.msra.mxu0 0
        %1153 = vmatprep.subr.bf16.mxu0 0
        %1154 = vmatpush1.bf16.xpose.msra.mxu0 0
        %1155 = vmatprep.subr.bf16.mxu0 0
        %1156 = vmatpush1.bf16.xpose.msra.mxu0 0
        %1157 = vmatprep.subr.bf16.mxu0 0
        %1158 = vmatpush1.bf16.xpose.msra.mxu0 0
        %1159 = vmatprep.subr.bf16.mxu0 0
        %1160 = vmatpush1.bf16.xpose.msra.mxu0 0
        %1161 = vmatprep.subr.bf16.mxu0 0
        %1162 = vmatpush1.bf16.xpose.msra.mxu0 0
        %1163 = vmatprep.subr.bf16.mxu0 0
        %1164 = vmatpush1.bf16.xpose.msra.mxu0 0
        %1165 = vmatprep.subr.bf16.mxu0 0
        %1166 = vmatpush1.bf16.xpose.msra.mxu0 0
        %1167 = vmatprep.subr.bf16.mxu0 0
        %1168 = vmatpush1.bf16.xpose.msra.mxu0 0
        %1169 = vmatprep.subr.bf16.mxu0 0
        %1170 = vmatpush1.bf16.xpose.msra.mxu0 0
        %1171 = vmatprep.subr.bf16.mxu0 0
        %1172 = vmatpush1.bf16.xpose.msra.mxu0 0
        %1173 = vmatprep.mubr.bf16.mxu0 0
        %1174 = vmatmul.mubr.bf16.gmra.mrb[0].mxu0 %v1136
        %v1175 = vpop.f32.mrb[0].mxu0
        %v1176 = vadd.f32 0.0, %v1175
        %v1177 = vpop.f32.mrb[0].mxu0
        %v1178 = vpop.f32.mrb[0].mxu0
        %v1179 = vpop.f32.mrb[0].mxu0
        %1180 = vdwg.mxu0
        %v1181 = vmul.f32 %v1176, 0.35355338
        %v1182 = vsel %vm843, %v1181, -inf
        %1183 = vmax.xlane.f32.xlu0 %v1182
        %v1184 = vpop.xlane.xlu0 %1183
        %v1185 = vsub.f32 %v1181, %v1184
        %v1186 = vmul.f32 %v1185, 1.442695
        %v1187 = vpow.pop %v1186
        %v1188 = vsel %vm843, %v1187, 0.0
        %1189 = vadd.xlane.f32.xlu0 %v1188
        %v1190 = vpop.xlane.xlu0 %1189
        %v1191 = vrcp.pop %v1190
        %v1192 = vmul.f32 %v1187, %v1191
        %v1193 = vpack.c.bf16 %v1192, %v1192
        %1194 = vrot.lane.b32.xlu0 %v791, 40
        %v1195 = vpop.permute.xlu0 %1194
        %v1197 = vsel %vm858, %v1193, 0
        %v1200 = vand.u32 %v1195, %v865
        %1202 = vmatprep.subr.bf16.mxu0 0
        %1203 = vmatpush1.bf16.msra.mxu0 %v1200
        %1204 = vmatprep.subr.bf16.mxu0 0
        %1205 = vmatpush1.bf16.msra.mxu0 0
        %1206 = vmatprep.subr.bf16.mxu0 0
        %1207 = vmatpush1.bf16.msra.mxu0 0
        %1208 = vmatprep.subr.bf16.mxu0 0
        %1209 = vmatpush1.bf16.msra.mxu0 0
        %1210 = vmatprep.subr.bf16.mxu0 0
        %1211 = vmatpush1.bf16.msra.mxu0 0
        %1212 = vmatprep.subr.bf16.mxu0 0
        %1213 = vmatpush1.bf16.msra.mxu0 0
        %1214 = vmatprep.subr.bf16.mxu0 0
        %1215 = vmatpush1.bf16.msra.mxu0 0
        %1216 = vmatprep.subr.bf16.mxu0 0
        %1217 = vmatpush1.bf16.msra.mxu0 0
        %1218 = vmatprep.subr.bf16.mxu0 0
        %1219 = vmatpush1.bf16.msra.mxu0 0
        %1220 = vmatprep.subr.bf16.mxu0 0
        %1221 = vmatpush1.bf16.msra.mxu0 0
        %1222 = vmatprep.subr.bf16.mxu0 0
        %1223 = vmatpush1.bf16.msra.mxu0 0
        %1224 = vmatprep.subr.bf16.mxu0 0
        %1225 = vmatpush1.bf16.msra.mxu0 0
        %1226 = vmatprep.subr.bf16.mxu0 0
        %1227 = vmatpush1.bf16.msra.mxu0 0
        %1228 = vmatprep.subr.bf16.mxu0 0
        %1229 = vmatpush1.bf16.msra.mxu0 0
        %1230 = vmatprep.subr.bf16.mxu0 0
        %1231 = vmatpush1.bf16.msra.mxu0 0
        %1232 = vmatprep.subr.bf16.mxu0 0
        %1233 = vmatpush1.bf16.msra.mxu0 0
        %1234 = vmatprep.mubr.bf16.mxu0 0
        %1235 = vmatmul.mubr.bf16.gmra.mrb[0].mxu0 %v1197
        %v1236 = vpop.f32.mrb[0].mxu0
        %v1237 = vadd.f32 0.0, %v1236
        %v1238 = vpop.f32.mrb[0].mxu0
        %v1239 = vpop.f32.mrb[0].mxu0
        %v1240 = vpop.f32.mrb[0].mxu0
        %1241 = vdwg.mxu0
        %1243 = vrot.lane.b32.xlu0 %v1015, 8
        %v1244 = vpop.permute.xlu0 %1243
        %1247 = vrot.lane.b32.xlu0 %v1126, 16
        %v1248 = vpop.permute.xlu0 %1247
        %1251 = vrot.lane.b32.xlu0 %v1237, 24
        %v1252 = vpop.permute.xlu0 %1251
        %v1254 = vsel %vm795, %v904, %v1244
        %vm1255 = vcmask 130048
        %v1256 = vsel %vm1255, %v1254, %v1248
        %vm1257 = vcmask 195584
        %v1258 = vsel %vm1257, %v1256, %v1252
        %v1259 = vld [vmem:[%s7] sm:$0xf]
        %v1260 = vld [vmem:[%s7 + $0x4] sm:$0xf]
        %v1261 = vld [vmem:[%s7 + $0x8] sm:$0xf]
        %v1262 = vld [vmem:[%s7 + $0xc] sm:$0xf]
        %v1263 = vld [vmem:[%s8] sm:$0x1]
        %v1264 = vpack.c.bf16 %v1258, %v1258
        %v1266 = vlaneseq
        %v1267 = vshrl.u32 %v1266, 7
        %v1268 = vsub.s32 0, %v1267
        %v1269 = vrot.slane %v1263, %v1268
        %v1275 = vunpack.c.l.b16 %v1259
        %v1276 = vunpack.c.l.b16 %v1260
        %v1277 = vunpack.c.l.b16 %v1261
        %v1278 = vunpack.c.l.b16 %v1262
        %v1279 = vpack.c.b16 %v1276, %v1275
        %v1280 = vpack.c.b16 %v1278, %v1277
        %v1284 = vsel %vm747, %v1264, 0
        %1286 = vmatprep.subr.bf16.mxu0 0
        %1287 = vmatpush1.bf16.msra.mxu0 %v1279
        %1288 = vmatprep.subr.bf16.mxu0 0
        %1289 = vmatpush1.bf16.msra.mxu0 %v1280
        %1290 = vmatprep.subr.bf16.mxu0 0
        %1291 = vmatpush1.bf16.msra.mxu0 0
        %1292 = vmatprep.subr.bf16.mxu0 0
        %1293 = vmatpush1.bf16.msra.mxu0 0
        %1294 = vmatprep.subr.bf16.mxu0 0
        %1295 = vmatpush1.bf16.msra.mxu0 0
        %1296 = vmatprep.subr.bf16.mxu0 0
        %1297 = vmatpush1.bf16.msra.mxu0 0
        %1298 = vmatprep.subr.bf16.mxu0 0
        %1299 = vmatpush1.bf16.msra.mxu0 0
        %1300 = vmatprep.subr.bf16.mxu0 0
        %1301 = vmatpush1.bf16.msra.mxu0 0
        %1302 = vmatprep.subr.bf16.mxu0 0
        %1303 = vmatpush1.bf16.msra.mxu0 0
        %1304 = vmatprep.subr.bf16.mxu0 0
        %1305 = vmatpush1.bf16.msra.mxu0 0
        %1306 = vmatprep.subr.bf16.mxu0 0
        %1307 = vmatpush1.bf16.msra.mxu0 0
        %1308 = vmatprep.subr.bf16.mxu0 0
        %1309 = vmatpush1.bf16.msra.mxu0 0
        %1310 = vmatprep.subr.bf16.mxu0 0
        %1311 = vmatpush1.bf16.msra.mxu0 0
        %1312 = vmatprep.subr.bf16.mxu0 0
        %1313 = vmatpush1.bf16.msra.mxu0 0
        %1314 = vmatprep.subr.bf16.mxu0 0
        %1315 = vmatpush1.bf16.msra.mxu0 0
        %1316 = vmatprep.subr.bf16.mxu0 0
        %1317 = vmatpush1.bf16.msra.mxu0 0
        %1318 = vmatprep.mubr.bf16.mxu0 0
        %1319 = vmatmul.mubr.bf16.gmra.mrb[0].mxu0 %v1284
        %v1320 = vpop.f32.mrb[0].mxu0
        %v1321 = vadd.f32 %v1269, %v1320
        %v1322 = vpop.f32.mrb[0].mxu0
        %v1323 = vpop.f32.mrb[0].mxu0
        %v1324 = vpop.f32.mrb[0].mxu0
        %1325 = vdwg.mxu0
        %v1326 = vadd.f32 %v707, %v1321
        %v1327 = vsel %vm708, %v1326, 0.0
        %1328 = vadd.xlane.f32.xlu0 %v1327
        %v1329 = vpop.xlane.xlu0 %1328
        %v1330 = vmul.f32 %v1329, %v712
        %v1331 = vsub.f32 %v1326, %v1330
        %v1332 = vmul.f32 %v1331, %v1331
        %v1333 = vsel %vm708, %v1332, 0.0
        %1334 = vadd.xlane.f32.xlu0 %v1333
        %v1335 = vpop.xlane.xlu0 %1334
        %v1336 = vmul.f32 %v1335, %v712
        %v1337 = vadd.f32 %v1336, 1e-06
        %v1338 = vrsqrt.pop %v1337
        %v1339 = vmul.f32 %v1331, %v1338
        %v1340 = vld [vmem:[%s9] sm:$0xf]
        %v1341 = vld [vmem:[%s9 + $0x4] sm:$0xf]
        %v1342 = vld [vmem:[%s9 + $0x8] sm:$0xf]
        %v1343 = vld [vmem:[%s9 + $0xc] sm:$0xf]
        %v1344 = vld [vmem:[%s10] sm:$0x1]
        %v1345 = vpack.c.bf16 %v1339, %v1339
        %v1347 = vlaneseq
        %v1348 = vshrl.u32 %v1347, 7
        %v1349 = vsub.s32 0, %v1348
        %v1350 = vrot.slane %v1344, %v1349
        %v1356 = vunpack.c.l.b16 %v1340
        %v1357 = vunpack.c.l.b16 %v1341
        %v1358 = vunpack.c.l.b16 %v1342
        %v1359 = vunpack.c.l.b16 %v1343
        %v1360 = vpack.c.b16 %v1357, %v1356
        %v1361 = vpack.c.b16 %v1359, %v1358
        %v1365 = vsel %vm747, %v1345, 0
        %1367 = vmatprep.subr.bf16.mxu0 0
        %1368 = vmatpush1.bf16.msra.mxu0 %v1360
        %1369 = vmatprep.subr.bf16.mxu0 0
        %1370 = vmatpush1.bf16.msra.mxu0 %v1361
        %1371 = vmatprep.subr.bf16.mxu0 0
        %1372 = vmatpush1.bf16.msra.mxu0 0
        %1373 = vmatprep.subr.bf16.mxu0 0
        %1374 = vmatpush1.bf16.msra.mxu0 0
        %1375 = vmatprep.subr.bf16.mxu0 0
        %1376 = vmatpush1.bf16.msra.mxu0 0
        %1377 = vmatprep.subr.bf16.mxu0 0
        %1378 = vmatpush1.bf16.msra.mxu0 0
        %1379 = vmatprep.subr.bf16.mxu0 0
        %1380 = vmatpush1.bf16.msra.mxu0 0
        %1381 = vmatprep.subr.bf16.mxu0 0
        %1382 = vmatpush1.bf16.msra.mxu0 0
        %1383 = vmatprep.subr.bf16.mxu0 0
        %1384 = vmatpush1.bf16.msra.mxu0 0
        %1385 = vmatprep.subr.bf16.mxu0 0
        %1386 = vmatpush1.bf16.msra.mxu0 0
        %1387 = vmatprep.subr.bf16.mxu0 0
        %1388 = vmatpush1.bf16.msra.mxu0 0
        %1389 = vmatprep.subr.bf16.mxu0 0
        %1390 = vmatpush1.bf16.msra.mxu0 0
        %1391 = vmatprep.subr.bf16.mxu0 0
        %1392 = vmatpush1.bf16.msra.mxu0 0
        %1393 = vmatprep.subr.bf16.mxu0 0
        %1394 = vmatpush1.bf16.msra.mxu0 0
        %1395 = vmatprep.subr.bf16.mxu0 0
        %1396 = vmatpush1.bf16.msra.mxu0 0
        %1397 = vmatprep.subr.bf16.mxu0 0
        %1398 = vmatpush1.bf16.msra.mxu0 0
        %1399 = vmatprep.mubr.bf16.mxu0 0
        %1400 = vmatmul.mubr.bf16.gmra.mrb[0].mxu0 %v1365
        %v1401 = vpop.f32.mrb[0].mxu0
        %v1402 = vadd.f32 %v1350, %v1401
        %v1403 = vpop.f32.mrb[0].mxu0
        %v1404 = vpop.f32.mrb[0].mxu0
        %v1405 = vpop.f32.mrb[0].mxu0
        %1406 = vdwg.mxu0
        %v1407 = vmul.f32 %v1402, %v1402
        %v1408 = vmul.f32 %v1402, %v1407
        %v1409 = vmul.f32 %v1408, 0.044715
        %v1410 = vadd.f32 %v1402, %v1409
        %v1411 = vmul.f32 %v1410, 0.7978846
        %v1412 = vtanh.pop %v1411
        %v1413 = vadd.f32 %v1412, 1.0
        %v1414 = vmul.f32 %v1413, 0.5
        %v1415 = vmul.f32 %v1402, %v1414
        %v1416 = vld [vmem:[%s11] sm:$0xf]
        %v1417 = vld [vmem:[%s11 + $0x4] sm:$0xf]
        %v1418 = vld [vmem:[%s11 + $0x8] sm:$0xf]
        %v1419 = vld [vmem:[%s11 + $0xc] sm:$0xf]
        %v1420 = vld [vmem:[%s11 + $0x10] sm:$0xf]
        %v1421 = vld [vmem:[%s11 + $0x14] sm:$0xf]
        %v1422 = vld [vmem:[%s11 + $0x18] sm:$0xf]
        %v1423 = vld [vmem:[%s11 + $0x1c] sm:$0xf]
        %v1424 = vld [vmem:[%s12] sm:$0x1]
        %v1425 = vpack.c.bf16 %v1415, %v1415
        %v1427 = vlaneseq
        %v1428 = vshrl.u32 %v1427, 7
        %v1429 = vsub.s32 0, %v1428
        %v1430 = vrot.slane %v1424, %v1429
        %v1440 = vunpack.c.l.b16 %v1416
        %v1441 = vunpack.c.l.b16 %v1417
        %v1442 = vunpack.c.l.b16 %v1418
        %v1443 = vunpack.c.l.b16 %v1419
        %v1444 = vunpack.c.l.b16 %v1420
        %v1445 = vunpack.c.l.b16 %v1421
        %v1446 = vunpack.c.l.b16 %v1422
        %v1447 = vunpack.c.l.b16 %v1423
        %v1448 = vpack.c.b16 %v1441, %v1440
        %v1449 = vpack.c.b16 %v1443, %v1442
        %v1450 = vpack.c.b16 %v1445, %v1444
        %v1451 = vpack.c.b16 %v1447, %v1446
        %v1457 = vsel %vm656, %v1425, 0
        %1459 = vmatprep.subr.bf16.mxu0 0
        %1460 = vmatpush1.bf16.msra.mxu0 %v1448
        %1461 = vmatprep.subr.bf16.mxu0 0
        %1462 = vmatpush1.bf16.msra.mxu0 %v1449
        %1463 = vmatprep.subr.bf16.mxu0 0
        %1464 = vmatpush1.bf16.msra.mxu0 %v1450
        %1465 = vmatprep.subr.bf16.mxu0 0
        %1466 = vmatpush1.bf16.msra.mxu0 %v1451
        %1467 = vmatprep.subr.bf16.mxu0 0
        %1468 = vmatpush1.bf16.msra.mxu0 0
        %1469 = vmatprep.subr.bf16.mxu0 0
        %1470 = vmatpush1.bf16.msra.mxu0 0
        %1471 = vmatprep.subr.bf16.mxu0 0
        %1472 = vmatpush1.bf16.msra.mxu0 0
        %1473 = vmatprep.subr.bf16.mxu0 0
        %1474 = vmatpush1.bf16.msra.mxu0 0
        %1475 = vmatprep.subr.bf16.mxu0 0
        %1476 = vmatpush1.bf16.msra.mxu0 0
        %1477 = vmatprep.subr.bf16.mxu0 0
        %1478 = vmatpush1.bf16.msra.mxu0 0
        %1479 = vmatprep.subr.bf16.mxu0 0
        %1480 = vmatpush1.bf16.msra.mxu0 0
        %1481 = vmatprep.subr.bf16.mxu0 0
        %1482 = vmatpush1.bf16.msra.mxu0 0
        %1483 = vmatprep.subr.bf16.mxu0 0
        %1484 = vmatpush1.bf16.msra.mxu0 0
        %1485 = vmatprep.subr.bf16.mxu0 0
        %1486 = vmatpush1.bf16.msra.mxu0 0
        %1487 = vmatprep.subr.bf16.mxu0 0
        %1488 = vmatpush1.bf16.msra.mxu0 0
        %1489 = vmatprep.subr.bf16.mxu0 0
        %1490 = vmatpush1.bf16.msra.mxu0 0
        %1491 = vmatprep.mubr.bf16.mxu0 0
        %1492 = vmatmul.mubr.bf16.gmra.mrb[0].mxu0 %v1457
        %v1493 = vpop.f32.mrb[0].mxu0
        %v1494 = vadd.f32 %v1430, %v1493
        %v1495 = vpop.f32.mrb[0].mxu0
        %v1496 = vpop.f32.mrb[0].mxu0
        %v1497 = vpop.f32.mrb[0].mxu0
        %1498 = vdwg.mxu0
        %v1499 = vadd.f32 %v1326, %v1494
        %v1500 = vsel %vm708, %v1499, 0.0
        %1501 = vadd.xlane.f32.xlu0 %v1500
        %v1502 = vpop.xlane.xlu0 %1501
        %v1503 = vmul.f32 %v1502, %v712
        %v1504 = vsub.f32 %v1499, %v1503
        %v1505 = vmul.f32 %v1504, %v1504
        %v1506 = vsel %vm708, %v1505, 0.0
        %1507 = vadd.xlane.f32.xlu0 %v1506
        %v1508 = vpop.xlane.xlu0 %1507
        %v1509 = vmul.f32 %v1508, %v712
        %v1510 = vadd.f32 %v1509, 1e-06
        %v1511 = vrsqrt.pop %v1510
        %v1512 = vmul.f32 %v1504, %v1511
        %s1513 = scalar_lea.vmem %s5, 16
        %v1514 = vld [vmem:[%s1513] sm:$0xf]
        %v1515 = vld [vmem:[%s1513 + $0x4] sm:$0xf]
        %v1516 = vld [vmem:[%s1513 + $0x8] sm:$0xf]
        %v1517 = vld [vmem:[%s1513 + $0xc] sm:$0xf]
        %s1518 = scalar_lea.vmem %s6, 1
        %v1519 = vld [vmem:[%s1518] sm:$0x1]
        %v1520 = vpack.c.bf16 %v1512, %v1512
        %v1522 = vlaneseq
        %v1523 = vshrl.u32 %v1522, 7
        %v1524 = vsub.s32 0, %v1523
        %v1525 = vrot.slane %v1519, %v1524
        %v1531 = vunpack.c.l.b16 %v1514
        %v1532 = vunpack.c.l.b16 %v1515
        %v1533 = vunpack.c.l.b16 %v1516
        %v1534 = vunpack.c.l.b16 %v1517
        %v1535 = vpack.c.b16 %v1532, %v1531
        %v1536 = vpack.c.b16 %v1534, %v1533
        %v1540 = vsel %vm747, %v1520, 0
        %1542 = vmatprep.subr.bf16.mxu0 0
        %1543 = vmatpush1.bf16.msra.mxu0 %v1535
        %1544 = vmatprep.subr.bf16.mxu0 0
        %1545 = vmatpush1.bf16.msra.mxu0 %v1536
        %1546 = vmatprep.subr.bf16.mxu0 0
        %1547 = vmatpush1.bf16.msra.mxu0 0
        %1548 = vmatprep.subr.bf16.mxu0 0
        %1549 = vmatpush1.bf16.msra.mxu0 0
        %1550 = vmatprep.subr.bf16.mxu0 0
        %1551 = vmatpush1.bf16.msra.mxu0 0
        %1552 = vmatprep.subr.bf16.mxu0 0
        %1553 = vmatpush1.bf16.msra.mxu0 0
        %1554 = vmatprep.subr.bf16.mxu0 0
        %1555 = vmatpush1.bf16.msra.mxu0 0
        %1556 = vmatprep.subr.bf16.mxu0 0
        %1557 = vmatpush1.bf16.msra.mxu0 0
        %1558 = vmatprep.subr.bf16.mxu0 0
        %1559 = vmatpush1.bf16.msra.mxu0 0
        %1560 = vmatprep.subr.bf16.mxu0 0
        %1561 = vmatpush1.bf16.msra.mxu0 0
        %1562 = vmatprep.subr.bf16.mxu0 0
        %1563 = vmatpush1.bf16.msra.mxu0 0
        %1564 = vmatprep.subr.bf16.mxu0 0
        %1565 = vmatpush1.bf16.msra.mxu0 0
        %1566 = vmatprep.subr.bf16.mxu0 0
        %1567 = vmatpush1.bf16.msra.mxu0 0
        %1568 = vmatprep.subr.bf16.mxu0 0
        %1569 = vmatpush1.bf16.msra.mxu0 0
        %1570 = vmatprep.subr.bf16.mxu0 0
        %1571 = vmatpush1.bf16.msra.mxu0 0
        %1572 = vmatprep.subr.bf16.mxu0 0
        %1573 = vmatpush1.bf16.msra.mxu0 0
        %1574 = vmatprep.mubr.bf16.mxu0 0
        %1575 = vmatmul.mubr.bf16.gmra.mrb[0].mxu0 %v1540
        %v1576 = vpop.f32.mrb[0].mxu0
        %v1577 = vadd.f32 %v1525, %v1576
        %v1578 = vpop.f32.mrb[0].mxu0
        %v1579 = vpop.f32.mrb[0].mxu0
        %v1580 = vpop.f32.mrb[0].mxu0
        %1581 = vdwg.mxu0
        %v1582 = vpack.c.bf16 %v1577, %v1577
        %1584 = vrot.lane.b32.xlu0 %v1582, 96
        %v1585 = vpop.permute.xlu0 %1584
        %v1587 = vsel %vm795, %v1582, 0
        %v1590 = vsel %vm795, %v1585, 0
        %1592 = vmatprep.subr.bf16.mxu0 0
        %1593 = vmatpush1.bf16.xpose.msra.mxu0 %v1590
        %1594 = vmatprep.subr.bf16.mxu0 0
        %1595 = vmatpush1.bf16.xpose.msra.mxu0 0
        %1596 = vmatprep.subr.bf16.mxu0 0
        %1597 = vmatpush1.bf16.xpose.msra.mxu0 0
        %1598 = vmatprep.subr.bf16.mxu0 0
        %1599 = vmatpush1.bf16.xpose.msra.mxu0 0
        %1600 = vmatprep.subr.bf16.mxu0 0
        %1601 = vmatpush1.bf16.xpose.msra.mxu0 0
        %1602 = vmatprep.subr.bf16.mxu0 0
        %1603 = vmatpush1.bf16.xpose.msra.mxu0 0
        %1604 = vmatprep.subr.bf16.mxu0 0
        %1605 = vmatpush1.bf16.xpose.msra.mxu0 0
        %1606 = vmatprep.subr.bf16.mxu0 0
        %1607 = vmatpush1.bf16.xpose.msra.mxu0 0
        %1608 = vmatprep.subr.bf16.mxu0 0
        %1609 = vmatpush1.bf16.xpose.msra.mxu0 0
        %1610 = vmatprep.subr.bf16.mxu0 0
        %1611 = vmatpush1.bf16.xpose.msra.mxu0 0
        %1612 = vmatprep.subr.bf16.mxu0 0
        %1613 = vmatpush1.bf16.xpose.msra.mxu0 0
        %1614 = vmatprep.subr.bf16.mxu0 0
        %1615 = vmatpush1.bf16.xpose.msra.mxu0 0
        %1616 = vmatprep.subr.bf16.mxu0 0
        %1617 = vmatpush1.bf16.xpose.msra.mxu0 0
        %1618 = vmatprep.subr.bf16.mxu0 0
        %1619 = vmatpush1.bf16.xpose.msra.mxu0 0
        %1620 = vmatprep.subr.bf16.mxu0 0
        %1621 = vmatpush1.bf16.xpose.msra.mxu0 0
        %1622 = vmatprep.subr.bf16.mxu0 0
        %1623 = vmatpush1.bf16.xpose.msra.mxu0 0
        %1624 = vmatprep.mubr.bf16.mxu0 0
        %1625 = vmatmul.mubr.bf16.gmra.mrb[0].mxu0 %v1587
        %v1626 = vpop.f32.mrb[0].mxu0
        %v1627 = vadd.f32 0.0, %v1626
        %v1628 = vpop.f32.mrb[0].mxu0
        %v1629 = vpop.f32.mrb[0].mxu0
        %v1630 = vpop.f32.mrb[0].mxu0
        %1631 = vdwg.mxu0
        %v1632 = vmul.f32 %v1627, 0.35355338
        %v1633 = vsel %vm843, %v1632, -inf
        %1634 = vmax.xlane.f32.xlu0 %v1633
        %v1635 = vpop.xlane.xlu0 %1634
        %v1636 = vsub.f32 %v1632, %v1635
        %v1637 = vmul.f32 %v1636, 1.442695
        %v1638 = vpow.pop %v1637
        %v1639 = vsel %vm843, %v1638, 0.0
        %1640 = vadd.xlane.f32.xlu0 %v1639
        %v1641 = vpop.xlane.xlu0 %1640
        %v1642 = vrcp.pop %v1641
        %v1643 = vmul.f32 %v1638, %v1642
        %v1644 = vpack.c.bf16 %v1643, %v1643
        %1645 = vrot.lane.b32.xlu0 %v1582, 64
        %v1646 = vpop.permute.xlu0 %1645
        %v1648 = vsel %vm858, %v1644, 0
        %v1651 = vand.u32 %v1646, %v865
        %1653 = vmatprep.subr.bf16.mxu0 0
        %1654 = vmatpush1.bf16.msra.mxu0 %v1651
        %1655 = vmatprep.subr.bf16.mxu0 0
        %1656 = vmatpush1.bf16.msra.mxu0 0
        %1657 = vmatprep.subr.bf16.mxu0 0
        %1658 = vmatpush1.bf16.msra.mxu0 0
        %1659 = vmatprep.subr.bf16.mxu0 0
        %1660 = vmatpush1.bf16.msra.mxu0 0
        %1661 = vmatprep.subr.bf16.mxu0 0
        %1662 = vmatpush1.bf16.msra.mxu0 0
        %1663 = vmatprep.subr.bf16.mxu0 0
        %1664 = vmatpush1.bf16.msra.mxu0 0
        %1665 = vmatprep.subr.bf16.mxu0 0
        %1666 = vmatpush1.bf16.msra.mxu0 0
        %1667 = vmatprep.subr.bf16.mxu0 0
        %1668 = vmatpush1.bf16.msra.mxu0 0
        %1669 = vmatprep.subr.bf16.mxu0 0
        %1670 = vmatpush1.bf16.msra.mxu0 0
        %1671 = vmatprep.subr.bf16.mxu0 0
        %1672 = vmatpush1.bf16.msra.mxu0 0
        %1673 = vmatprep.subr.bf16.mxu0 0
        %1674 = vmatpush1.bf16.msra.mxu0 0
        %1675 = vmatprep.subr.bf16.mxu0 0
        %1676 = vmatpush1.bf16.msra.mxu0 0
        %1677 = vmatprep.subr.bf16.mxu0 0
        %1678 = vmatpush1.bf16.msra.mxu0 0
        %1679 = vmatprep.subr.bf16.mxu0 0
        %1680 = vmatpush1.bf16.msra.mxu0 0
        %1681 = vmatprep.subr.bf16.mxu0 0
        %1682 = vmatpush1.bf16.msra.mxu0 0
        %1683 = vmatprep.subr.bf16.mxu0 0
        %1684 = vmatpush1.bf16.msra.mxu0 0
        %1685 = vmatprep.mubr.bf16.mxu0 0
        %1686 = vmatmul.mubr.bf16.gmra.mrb[0].mxu0 %v1648
        %v1687 = vpop.f32.mrb[0].mxu0
        %v1688 = vadd.f32 0.0, %v1687
        %v1689 = vpop.f32.mrb[0].mxu0
        %v1690 = vpop.f32.mrb[0].mxu0
        %v1691 = vpop.f32.mrb[0].mxu0
        %1692 = vdwg.mxu0
        %1693 = vrot.lane.b32.xlu0 %v1582, 120
        %v1694 = vpop.permute.xlu0 %1693
        %1695 = vrot.lane.b32.xlu0 %v1582, 88
        %v1696 = vpop.permute.xlu0 %1695
        %v1698 = vsel %vm795, %v1694, 0
        %v1701 = vsel %vm795, %v1696, 0
        %1703 = vmatprep.subr.bf16.mxu0 0
        %1704 = vmatpush1.bf16.xpose.msra.mxu0 %v1701
        %1705 = vmatprep.subr.bf16.mxu0 0
        %1706 = vmatpush1.bf16.xpose.msra.mxu0 0
        %1707 = vmatprep.subr.bf16.mxu0 0
        %1708 = vmatpush1.bf16.xpose.msra.mxu0 0
        %1709 = vmatprep.subr.bf16.mxu0 0
        %1710 = vmatpush1.bf16.xpose.msra.mxu0 0
        %1711 = vmatprep.subr.bf16.mxu0 0
        %1712 = vmatpush1.bf16.xpose.msra.mxu0 0
        %1713 = vmatprep.subr.bf16.mxu0 0
        %1714 = vmatpush1.bf16.xpose.msra.mxu0 0
        %1715 = vmatprep.subr.bf16.mxu0 0
        %1716 = vmatpush1.bf16.xpose.msra.mxu0 0
        %1717 = vmatprep.subr.bf16.mxu0 0
        %1718 = vmatpush1.bf16.xpose.msra.mxu0 0
        %1719 = vmatprep.subr.bf16.mxu0 0
        %1720 = vmatpush1.bf16.xpose.msra.mxu0 0
        %1721 = vmatprep.subr.bf16.mxu0 0
        %1722 = vmatpush1.bf16.xpose.msra.mxu0 0
        %1723 = vmatprep.subr.bf16.mxu0 0
        %1724 = vmatpush1.bf16.xpose.msra.mxu0 0
        %1725 = vmatprep.subr.bf16.mxu0 0
        %1726 = vmatpush1.bf16.xpose.msra.mxu0 0
        %1727 = vmatprep.subr.bf16.mxu0 0
        %1728 = vmatpush1.bf16.xpose.msra.mxu0 0
        %1729 = vmatprep.subr.bf16.mxu0 0
        %1730 = vmatpush1.bf16.xpose.msra.mxu0 0
        %1731 = vmatprep.subr.bf16.mxu0 0
        %1732 = vmatpush1.bf16.xpose.msra.mxu0 0
        %1733 = vmatprep.subr.bf16.mxu0 0
        %1734 = vmatpush1.bf16.xpose.msra.mxu0 0
        %1735 = vmatprep.mubr.bf16.mxu0 0
        %1736 = vmatmul.mubr.bf16.gmra.mrb[0].mxu0 %v1698
        %v1737 = vpop.f32.mrb[0].mxu0
        %v1738 = vadd.f32 0.0, %v1737
        %v1739 = vpop.f32.mrb[0].mxu0
        %v1740 = vpop.f32.mrb[0].mxu0
        %v1741 = vpop.f32.mrb[0].mxu0
        %1742 = vdwg.mxu0
        %v1743 = vmul.f32 %v1738, 0.35355338
        %v1744 = vsel %vm843, %v1743, -inf
        %1745 = vmax.xlane.f32.xlu0 %v1744
        %v1746 = vpop.xlane.xlu0 %1745
        %v1747 = vsub.f32 %v1743, %v1746
        %v1748 = vmul.f32 %v1747, 1.442695
        %v1749 = vpow.pop %v1748
        %v1750 = vsel %vm843, %v1749, 0.0
        %1751 = vadd.xlane.f32.xlu0 %v1750
        %v1752 = vpop.xlane.xlu0 %1751
        %v1753 = vrcp.pop %v1752
        %v1754 = vmul.f32 %v1749, %v1753
        %v1755 = vpack.c.bf16 %v1754, %v1754
        %1756 = vrot.lane.b32.xlu0 %v1582, 56
        %v1757 = vpop.permute.xlu0 %1756
        %v1759 = vsel %vm858, %v1755, 0
        %v1762 = vand.u32 %v1757, %v865
        %1764 = vmatprep.subr.bf16.mxu0 0
        %1765 = vmatpush1.bf16.msra.mxu0 %v1762
        %1766 = vmatprep.subr.bf16.mxu0 0
        %1767 = vmatpush1.bf16.msra.mxu0 0
        %1768 = vmatprep.subr.bf16.mxu0 0
        %1769 = vmatpush1.bf16.msra.mxu0 0
        %1770 = vmatprep.subr.bf16.mxu0 0
        %1771 = vmatpush1.bf16.msra.mxu0 0
        %1772 = vmatprep.subr.bf16.mxu0 0
        %1773 = vmatpush1.bf16.msra.mxu0 0
        %1774 = vmatprep.subr.bf16.mxu0 0
        %1775 = vmatpush1.bf16.msra.mxu0 0
        %1776 = vmatprep.subr.bf16.mxu0 0
        %1777 = vmatpush1.bf16.msra.mxu0 0
        %1778 = vmatprep.subr.bf16.mxu0 0
        %1779 = vmatpush1.bf16.msra.mxu0 0
        %1780 = vmatprep.subr.bf16.mxu0 0
        %1781 = vmatpush1.bf16.msra.mxu0 0
        %1782 = vmatprep.subr.bf16.mxu0 0
        %1783 = vmatpush1.bf16.msra.mxu0 0
        %1784 = vmatprep.subr.bf16.mxu0 0
        %1785 = vmatpush1.bf16.msra.mxu0 0
        %1786 = vmatprep.subr.bf16.mxu0 0
        %1787 = vmatpush1.bf16.msra.mxu0 0
        %1788 = vmatprep.subr.bf16.mxu0 0
        %1789 = vmatpush1.bf16.msra.mxu0 0
        %1790 = vmatprep.subr.bf16.mxu0 0
        %1791 = vmatpush1.bf16.msra.mxu0 0
        %1792 = vmatprep.subr.bf16.mxu0 0
        %1793 = vmatpush1.bf16.msra.mxu0 0
        %1794 = vmatprep.subr.bf16.mxu0 0
        %1795 = vmatpush1.bf16.msra.mxu0 0
        %1796 = vmatprep.mubr.bf16.mxu0 0
        %1797 = vmatmul.mubr.bf16.gmra.mrb[0].mxu0 %v1759
        %v1798 = vpop.f32.mrb[0].mxu0
        %v1799 = vadd.f32 0.0, %v1798
        %v1800 = vpop.f32.mrb[0].mxu0
        %v1801 = vpop.f32.mrb[0].mxu0
        %v1802 = vpop.f32.mrb[0].mxu0
        %1803 = vdwg.mxu0
        %1804 = vrot.lane.b32.xlu0 %v1582, 112
        %v1805 = vpop.permute.xlu0 %1804
        %1806 = vrot.lane.b32.xlu0 %v1582, 80
        %v1807 = vpop.permute.xlu0 %1806
        %v1809 = vsel %vm795, %v1805, 0
        %v1812 = vsel %vm795, %v1807, 0
        %1814 = vmatprep.subr.bf16.mxu0 0
        %1815 = vmatpush1.bf16.xpose.msra.mxu0 %v1812
        %1816 = vmatprep.subr.bf16.mxu0 0
        %1817 = vmatpush1.bf16.xpose.msra.mxu0 0
        %1818 = vmatprep.subr.bf16.mxu0 0
        %1819 = vmatpush1.bf16.xpose.msra.mxu0 0
        %1820 = vmatprep.subr.bf16.mxu0 0
        %1821 = vmatpush1.bf16.xpose.msra.mxu0 0
        %1822 = vmatprep.subr.bf16.mxu0 0
        %1823 = vmatpush1.bf16.xpose.msra.mxu0 0
        %1824 = vmatprep.subr.bf16.mxu0 0
        %1825 = vmatpush1.bf16.xpose.msra.mxu0 0
        %1826 = vmatprep.subr.bf16.mxu0 0
        %1827 = vmatpush1.bf16.xpose.msra.mxu0 0
        %1828 = vmatprep.subr.bf16.mxu0 0
        %1829 = vmatpush1.bf16.xpose.msra.mxu0 0
        %1830 = vmatprep.subr.bf16.mxu0 0
        %1831 = vmatpush1.bf16.xpose.msra.mxu0 0
        %1832 = vmatprep.subr.bf16.mxu0 0
        %1833 = vmatpush1.bf16.xpose.msra.mxu0 0
        %1834 = vmatprep.subr.bf16.mxu0 0
        %1835 = vmatpush1.bf16.xpose.msra.mxu0 0
        %1836 = vmatprep.subr.bf16.mxu0 0
        %1837 = vmatpush1.bf16.xpose.msra.mxu0 0
        %1838 = vmatprep.subr.bf16.mxu0 0
        %1839 = vmatpush1.bf16.xpose.msra.mxu0 0
        %1840 = vmatprep.subr.bf16.mxu0 0
        %1841 = vmatpush1.bf16.xpose.msra.mxu0 0
        %1842 = vmatprep.subr.bf16.mxu0 0
        %1843 = vmatpush1.bf16.xpose.msra.mxu0 0
        %1844 = vmatprep.subr.bf16.mxu0 0
        %1845 = vmatpush1.bf16.xpose.msra.mxu0 0
        %1846 = vmatprep.mubr.bf16.mxu0 0
        %1847 = vmatmul.mubr.bf16.gmra.mrb[0].mxu0 %v1809
        %v1848 = vpop.f32.mrb[0].mxu0
        %v1849 = vadd.f32 0.0, %v1848
        %v1850 = vpop.f32.mrb[0].mxu0
        %v1851 = vpop.f32.mrb[0].mxu0
        %v1852 = vpop.f32.mrb[0].mxu0
        %1853 = vdwg.mxu0
        %v1854 = vmul.f32 %v1849, 0.35355338
        %v1855 = vsel %vm843, %v1854, -inf
        %1856 = vmax.xlane.f32.xlu0 %v1855
        %v1857 = vpop.xlane.xlu0 %1856
        %v1858 = vsub.f32 %v1854, %v1857
        %v1859 = vmul.f32 %v1858, 1.442695
        %v1860 = vpow.pop %v1859
        %v1861 = vsel %vm843, %v1860, 0.0
        %1862 = vadd.xlane.f32.xlu0 %v1861
        %v1863 = vpop.xlane.xlu0 %1862
        %v1864 = vrcp.pop %v1863
        %v1865 = vmul.f32 %v1860, %v1864
        %v1866 = vpack.c.bf16 %v1865, %v1865
        %1867 = vrot.lane.b32.xlu0 %v1582, 48
        %v1868 = vpop.permute.xlu0 %1867
        %v1870 = vsel %vm858, %v1866, 0
        %v1873 = vand.u32 %v1868, %v865
        %1875 = vmatprep.subr.bf16.mxu0 0
        %1876 = vmatpush1.bf16.msra.mxu0 %v1873
        %1877 = vmatprep.subr.bf16.mxu0 0
        %1878 = vmatpush1.bf16.msra.mxu0 0
        %1879 = vmatprep.subr.bf16.mxu0 0
        %1880 = vmatpush1.bf16.msra.mxu0 0
        %1881 = vmatprep.subr.bf16.mxu0 0
        %1882 = vmatpush1.bf16.msra.mxu0 0
        %1883 = vmatprep.subr.bf16.mxu0 0
        %1884 = vmatpush1.bf16.msra.mxu0 0
        %1885 = vmatprep.subr.bf16.mxu0 0
        %1886 = vmatpush1.bf16.msra.mxu0 0
        %1887 = vmatprep.subr.bf16.mxu0 0
        %1888 = vmatpush1.bf16.msra.mxu0 0
        %1889 = vmatprep.subr.bf16.mxu0 0
        %1890 = vmatpush1.bf16.msra.mxu0 0
        %1891 = vmatprep.subr.bf16.mxu0 0
        %1892 = vmatpush1.bf16.msra.mxu0 0
        %1893 = vmatprep.subr.bf16.mxu0 0
        %1894 = vmatpush1.bf16.msra.mxu0 0
        %1895 = vmatprep.subr.bf16.mxu0 0
        %1896 = vmatpush1.bf16.msra.mxu0 0
        %1897 = vmatprep.subr.bf16.mxu0 0
        %1898 = vmatpush1.bf16.msra.mxu0 0
        %1899 = vmatprep.subr.bf16.mxu0 0
        %1900 = vmatpush1.bf16.msra.mxu0 0
        %1901 = vmatprep.subr.bf16.mxu0 0
        %1902 = vmatpush1.bf16.msra.mxu0 0
        %1903 = vmatprep.subr.bf16.mxu0 0
        %1904 = vmatpush1.bf16.msra.mxu0 0
        %1905 = vmatprep.subr.bf16.mxu0 0
        %1906 = vmatpush1.bf16.msra.mxu0 0
        %1907 = vmatprep.mubr.bf16.mxu0 0
        %1908 = vmatmul.mubr.bf16.gmra.mrb[0].mxu0 %v1870
        %v1909 = vpop.f32.mrb[0].mxu0
        %v1910 = vadd.f32 0.0, %v1909
        %v1911 = vpop.f32.mrb[0].mxu0
        %v1912 = vpop.f32.mrb[0].mxu0
        %v1913 = vpop.f32.mrb[0].mxu0
        %1914 = vdwg.mxu0
        %1915 = vrot.lane.b32.xlu0 %v1582, 104
        %v1916 = vpop.permute.xlu0 %1915
        %1917 = vrot.lane.b32.xlu0 %v1582, 72
        %v1918 = vpop.permute.xlu0 %1917
        %v1920 = vsel %vm795, %v1916, 0
        %v1923 = vsel %vm795, %v1918, 0
        %1925 = vmatprep.subr.bf16.mxu0 0
        %1926 = vmatpush1.bf16.xpose.msra.mxu0 %v1923
        %1927 = vmatprep.subr.bf16.mxu0 0
        %1928 = vmatpush1.bf16.xpose.msra.mxu0 0
        %1929 = vmatprep.subr.bf16.mxu0 0
        %1930 = vmatpush1.bf16.xpose.msra.mxu0 0
        %1931 = vmatprep.subr.bf16.mxu0 0
        %1932 = vmatpush1.bf16.xpose.msra.mxu0 0
        %1933 = vmatprep.subr.bf16.mxu0 0
        %1934 = vmatpush1.bf16.xpose.msra.mxu0 0
        %1935 = vmatprep.subr.bf16.mxu0 0
        %1936 = vmatpush1.bf16.xpose.msra.mxu0 0
        %1937 = vmatprep.subr.bf16.mxu0 0
        %1938 = vmatpush1.bf16.xpose.msra.mxu0 0
        %1939 = vmatprep.subr.bf16.mxu0 0
        %1940 = vmatpush1.bf16.xpose.msra.mxu0 0
        %1941 = vmatprep.subr.bf16.mxu0 0
        %1942 = vmatpush1.bf16.xpose.msra.mxu0 0
        %1943 = vmatprep.subr.bf16.mxu0 0
        %1944 = vmatpush1.bf16.xpose.msra.mxu0 0
        %1945 = vmatprep.subr.bf16.mxu0 0
        %1946 = vmatpush1.bf16.xpose.msra.mxu0 0
        %1947 = vmatprep.subr.bf16.mxu0 0
        %1948 = vmatpush1.bf16.xpose.msra.mxu0 0
        %1949 = vmatprep.subr.bf16.mxu0 0
        %1950 = vmatpush1.bf16.xpose.msra.mxu0 0
        %1951 = vmatprep.subr.bf16.mxu0 0
        %1952 = vmatpush1.bf16.xpose.msra.mxu0 0
        %1953 = vmatprep.subr.bf16.mxu0 0
        %1954 = vmatpush1.bf16.xpose.msra.mxu0 0
        %1955 = vmatprep.subr.bf16.mxu0 0
        %1956 = vmatpush1.bf16.xpose.msra.mxu0 0
        %1957 = vmatprep.mubr.bf16.mxu0 0
        %1958 = vmatmul.mubr.bf16.gmra.mrb[0].mxu0 %v1920
        %v1959 = vpop.f32.mrb[0].mxu0
        %v1960 = vadd.f32 0.0, %v1959
        %v1961 = vpop.f32.mrb[0].mxu0
        %v1962 = vpop.f32.mrb[0].mxu0
        %v1963 = vpop.f32.mrb[0].mxu0
        %1964 = vdwg.mxu0
        %v1965 = vmul.f32 %v1960, 0.35355338
        %v1966 = vsel %vm843, %v1965, -inf
        %1967 = vmax.xlane.f32.xlu0 %v1966
        %v1968 = vpop.xlane.xlu0 %1967
        %v1969 = vsub.f32 %v1965, %v1968
        %v1970 = vmul.f32 %v1969, 1.442695
        %v1971 = vpow.pop %v1970
        %v1972 = vsel %vm843, %v1971, 0.0
        %1973 = vadd.xlane.f32.xlu0 %v1972
        %v1974 = vpop.xlane.xlu0 %1973
        %v1975 = vrcp.pop %v1974
        %v1976 = vmul.f32 %v1971, %v1975
        %v1977 = vpack.c.bf16 %v1976, %v1976
        %1978 = vrot.lane.b32.xlu0 %v1582, 40
        %v1979 = vpop.permute.xlu0 %1978
        %v1981 = vsel %vm858, %v1977, 0
        %v1984 = vand.u32 %v1979, %v865
        %1986 = vmatprep.subr.bf16.mxu0 0
        %1987 = vmatpush1.bf16.msra.mxu0 %v1984
        %1988 = vmatprep.subr.bf16.mxu0 0
        %1989 = vmatpush1.bf16.msra.mxu0 0
        %1990 = vmatprep.subr.bf16.mxu0 0
        %1991 = vmatpush1.bf16.msra.mxu0 0
        %1992 = vmatprep.subr.bf16.mxu0 0
        %1993 = vmatpush1.bf16.msra.mxu0 0
        %1994 = vmatprep.subr.bf16.mxu0 0
        %1995 = vmatpush1.bf16.msra.mxu0 0
        %1996 = vmatprep.subr.bf16.mxu0 0
        %1997 = vmatpush1.bf16.msra.mxu0 0
        %1998 = vmatprep.subr.bf16.mxu0 0
        %1999 = vmatpush1.bf16.msra.mxu0 0
        %2000 = vmatprep.subr.bf16.mxu0 0
        %2001 = vmatpush1.bf16.msra.mxu0 0
        %2002 = vmatprep.subr.bf16.mxu0 0
        %2003 = vmatpush1.bf16.msra.mxu0 0
        %2004 = vmatprep.subr.bf16.mxu0 0
        %2005 = vmatpush1.bf16.msra.mxu0 0
        %2006 = vmatprep.subr.bf16.mxu0 0
        %2007 = vmatpush1.bf16.msra.mxu0 0
        %2008 = vmatprep.subr.bf16.mxu0 0
        %2009 = vmatpush1.bf16.msra.mxu0 0
        %2010 = vmatprep.subr.bf16.mxu0 0
        %2011 = vmatpush1.bf16.msra.mxu0 0
        %2012 = vmatprep.subr.bf16.mxu0 0
        %2013 = vmatpush1.bf16.msra.mxu0 0
        %2014 = vmatprep.subr.bf16.mxu0 0
        %2015 = vmatpush1.bf16.msra.mxu0 0
        %2016 = vmatprep.subr.bf16.mxu0 0
        %2017 = vmatpush1.bf16.msra.mxu0 0
        %2018 = vmatprep.mubr.bf16.mxu0 0
        %2019 = vmatmul.mubr.bf16.gmra.mrb[0].mxu0 %v1981
        %v2020 = vpop.f32.mrb[0].mxu0
        %v2021 = vadd.f32 0.0, %v2020
        %v2022 = vpop.f32.mrb[0].mxu0
        %v2023 = vpop.f32.mrb[0].mxu0
        %v2024 = vpop.f32.mrb[0].mxu0
        %2025 = vdwg.mxu0
        %2027 = vrot.lane.b32.xlu0 %v1799, 8
        %v2028 = vpop.permute.xlu0 %2027
        %2031 = vrot.lane.b32.xlu0 %v1910, 16
        %v2032 = vpop.permute.xlu0 %2031
        %2035 = vrot.lane.b32.xlu0 %v2021, 24
        %v2036 = vpop.permute.xlu0 %2035
        %v2038 = vsel %vm795, %v1688, %v2028
        %v2039 = vsel %vm1255, %v2038, %v2032
        %v2040 = vsel %vm1257, %v2039, %v2036
        %s2041 = scalar_lea.vmem %s7, 16
        %v2042 = vld [vmem:[%s2041] sm:$0xf]
        %v2043 = vld [vmem:[%s2041 + $0x4] sm:$0xf]
        %v2044 = vld [vmem:[%s2041 + $0x8] sm:$0xf]
        %v2045 = vld [vmem:[%s2041 + $0xc] sm:$0xf]
        %s2046 = scalar_lea.vmem %s8, 1
        %v2047 = vld [vmem:[%s2046] sm:$0x1]
        %v2048 = vpack.c.bf16 %v2040, %v2040
        %v2050 = vlaneseq
        %v2051 = vshrl.u32 %v2050, 7
        %v2052 = vsub.s32 0, %v2051
        %v2053 = vrot.slane %v2047, %v2052
        %v2059 = vunpack.c.l.b16 %v2042
        %v2060 = vunpack.c.l.b16 %v2043
        %v2061 = vunpack.c.l.b16 %v2044
        %v2062 = vunpack.c.l.b16 %v2045
        %v2063 = vpack.c.b16 %v2060, %v2059
        %v2064 = vpack.c.b16 %v2062, %v2061
        %v2068 = vsel %vm747, %v2048, 0
        %2070 = vmatprep.subr.bf16.mxu0 0
        %2071 = vmatpush1.bf16.msra.mxu0 %v2063
        %2072 = vmatprep.subr.bf16.mxu0 0
        %2073 = vmatpush1.bf16.msra.mxu0 %v2064
        %2074 = vmatprep.subr.bf16.mxu0 0
        %2075 = vmatpush1.bf16.msra.mxu0 0
        %2076 = vmatprep.subr.bf16.mxu0 0
        %2077 = vmatpush1.bf16.msra.mxu0 0
        %2078 = vmatprep.subr.bf16.mxu0 0
        %2079 = vmatpush1.bf16.msra.mxu0 0
        %2080 = vmatprep.subr.bf16.mxu0 0
        %2081 = vmatpush1.bf16.msra.mxu0 0
        %2082 = vmatprep.subr.bf16.mxu0 0
        %2083 = vmatpush1.bf16.msra.mxu0 0
        %2084 = vmatprep.subr.bf16.mxu0 0
        %2085 = vmatpush1.bf16.msra.mxu0 0
        %2086 = vmatprep.subr.bf16.mxu0 0
        %2087 = vmatpush1.bf16.msra.mxu0 0
        %2088 = vmatprep.subr.bf16.mxu0 0
        %2089 = vmatpush1.bf16.msra.mxu0 0
        %2090 = vmatprep.subr.bf16.mxu0 0
        %2091 = vmatpush1.bf16.msra.mxu0 0
        %2092 = vmatprep.subr.bf16.mxu0 0
        %2093 = vmatpush1.bf16.msra.mxu0 0
        %2094 = vmatprep.subr.bf16.mxu0 0
        %2095 = vmatpush1.bf16.msra.mxu0 0
        %2096 = vmatprep.subr.bf16.mxu0 0
        %2097 = vmatpush1.bf16.msra.mxu0 0
        %2098 = vmatprep.subr.bf16.mxu0 0
        %2099 = vmatpush1.bf16.msra.mxu0 0
        %2100 = vmatprep.subr.bf16.mxu0 0
        %2101 = vmatpush1.bf16.msra.mxu0 0
        %2102 = vmatprep.mubr.bf16.mxu0 0
        %2103 = vmatmul.mubr.bf16.gmra.mrb[0].mxu0 %v2068
        %v2104 = vpop.f32.mrb[0].mxu0
        %v2105 = vadd.f32 %v2053, %v2104
        %v2106 = vpop.f32.mrb[0].mxu0
        %v2107 = vpop.f32.mrb[0].mxu0
        %v2108 = vpop.f32.mrb[0].mxu0
        %2109 = vdwg.mxu0
        %v2110 = vadd.f32 %v1499, %v2105
        %v2111 = vsel %vm708, %v2110, 0.0
        %2112 = vadd.xlane.f32.xlu0 %v2111
        %v2113 = vpop.xlane.xlu0 %2112
        %v2114 = vmul.f32 %v2113, %v712
        %v2115 = vsub.f32 %v2110, %v2114
        %v2116 = vmul.f32 %v2115, %v2115
        %v2117 = vsel %vm708, %v2116, 0.0
        %2118 = vadd.xlane.f32.xlu0 %v2117
        %v2119 = vpop.xlane.xlu0 %2118
        %v2120 = vmul.f32 %v2119, %v712
        %v2121 = vadd.f32 %v2120, 1e-06
        %v2122 = vrsqrt.pop %v2121
        %v2123 = vmul.f32 %v2115, %v2122
        %s2124 = scalar_lea.vmem %s9, 16
        %v2125 = vld [vmem:[%s2124] sm:$0xf]
        %v2126 = vld [vmem:[%s2124 + $0x4] sm:$0xf]
        %v2127 = vld [vmem:[%s2124 + $0x8] sm:$0xf]
        %v2128 = vld [vmem:[%s2124 + $0xc] sm:$0xf]
        %s2129 = scalar_lea.vmem %s10, 1
        %v2130 = vld [vmem:[%s2129] sm:$0x1]
        %v2131 = vpack.c.bf16 %v2123, %v2123
        %v2133 = vlaneseq
        %v2134 = vshrl.u32 %v2133, 7
        %v2135 = vsub.s32 0, %v2134
        %v2136 = vrot.slane %v2130, %v2135
        %v2142 = vunpack.c.l.b16 %v2125
        %v2143 = vunpack.c.l.b16 %v2126
        %v2144 = vunpack.c.l.b16 %v2127
        %v2145 = vunpack.c.l.b16 %v2128
        %v2146 = vpack.c.b16 %v2143, %v2142
        %v2147 = vpack.c.b16 %v2145, %v2144
        %v2151 = vsel %vm747, %v2131, 0
        %2153 = vmatprep.subr.bf16.mxu0 0
        %2154 = vmatpush1.bf16.msra.mxu0 %v2146
        %2155 = vmatprep.subr.bf16.mxu0 0
        %2156 = vmatpush1.bf16.msra.mxu0 %v2147
        %2157 = vmatprep.subr.bf16.mxu0 0
        %2158 = vmatpush1.bf16.msra.mxu0 0
        %2159 = vmatprep.subr.bf16.mxu0 0
        %2160 = vmatpush1.bf16.msra.mxu0 0
        %2161 = vmatprep.subr.bf16.mxu0 0
        %2162 = vmatpush1.bf16.msra.mxu0 0
        %2163 = vmatprep.subr.bf16.mxu0 0
        %2164 = vmatpush1.bf16.msra.mxu0 0
        %2165 = vmatprep.subr.bf16.mxu0 0
        %2166 = vmatpush1.bf16.msra.mxu0 0
        %2167 = vmatprep.subr.bf16.mxu0 0
        %2168 = vmatpush1.bf16.msra.mxu0 0
        %2169 = vmatprep.subr.bf16.mxu0 0
        %2170 = vmatpush1.bf16.msra.mxu0 0
        %2171 = vmatprep.subr.bf16.mxu0 0
        %2172 = vmatpush1.bf16.msra.mxu0 0
        %2173 = vmatprep.subr.bf16.mxu0 0
        %2174 = vmatpush1.bf16.msra.mxu0 0
        %2175 = vmatprep.subr.bf16.mxu0 0
        %2176 = vmatpush1.bf16.msra.mxu0 0
        %2177 = vmatprep.subr.bf16.mxu0 0
        %2178 = vmatpush1.bf16.msra.mxu0 0
        %2179 = vmatprep.subr.bf16.mxu0 0
        %2180 = vmatpush1.bf16.msra.mxu0 0
        %2181 = vmatprep.subr.bf16.mxu0 0
        %2182 = vmatpush1.bf16.msra.mxu0 0
        %2183 = vmatprep.subr.bf16.mxu0 0
        %2184 = vmatpush1.bf16.msra.mxu0 0
        %2185 = vmatprep.mubr.bf16.mxu0 0
        %2186 = vmatmul.mubr.bf16.gmra.mrb[0].mxu0 %v2151
        %v2187 = vpop.f32.mrb[0].mxu0
        %v2188 = vadd.f32 %v2136, %v2187
        %v2189 = vpop.f32.mrb[0].mxu0
        %v2190 = vpop.f32.mrb[0].mxu0
        %v2191 = vpop.f32.mrb[0].mxu0
        %2192 = vdwg.mxu0
        %v2193 = vmul.f32 %v2188, %v2188
        %v2194 = vmul.f32 %v2188, %v2193
        %v2195 = vmul.f32 %v2194, 0.044715
        %v2196 = vadd.f32 %v2188, %v2195
        %v2197 = vmul.f32 %v2196, 0.7978846
        %v2198 = vtanh.pop %v2197
        %v2199 = vadd.f32 %v2198, 1.0
        %v2200 = vmul.f32 %v2199, 0.5
        %v2201 = vmul.f32 %v2188, %v2200
        %s2202 = scalar_lea.vmem %s11, 32
        %v2203 = vld [vmem:[%s2202] sm:$0xf]
        %v2204 = vld [vmem:[%s2202 + $0x4] sm:$0xf]
        %v2205 = vld [vmem:[%s2202 + $0x8] sm:$0xf]
        %v2206 = vld [vmem:[%s2202 + $0xc] sm:$0xf]
        %v2207 = vld [vmem:[%s2202 + $0x10] sm:$0xf]
        %v2208 = vld [vmem:[%s2202 + $0x14] sm:$0xf]
        %v2209 = vld [vmem:[%s2202 + $0x18] sm:$0xf]
        %v2210 = vld [vmem:[%s2202 + $0x1c] sm:$0xf]
        %s2211 = scalar_lea.vmem %s12, 1
        %v2212 = vld [vmem:[%s2211] sm:$0x1]
        %v2213 = vpack.c.bf16 %v2201, %v2201
        %v2215 = vlaneseq
        %v2216 = vshrl.u32 %v2215, 7
        %v2217 = vsub.s32 0, %v2216
        %v2218 = vrot.slane %v2212, %v2217
        %v2228 = vunpack.c.l.b16 %v2203
        %v2229 = vunpack.c.l.b16 %v2204
        %v2230 = vunpack.c.l.b16 %v2205
        %v2231 = vunpack.c.l.b16 %v2206
        %v2232 = vunpack.c.l.b16 %v2207
        %v2233 = vunpack.c.l.b16 %v2208
        %v2234 = vunpack.c.l.b16 %v2209
        %v2235 = vunpack.c.l.b16 %v2210
        %v2236 = vpack.c.b16 %v2229, %v2228
        %v2237 = vpack.c.b16 %v2231, %v2230
        %v2238 = vpack.c.b16 %v2233, %v2232
        %v2239 = vpack.c.b16 %v2235, %v2234
        %v2245 = vsel %vm656, %v2213, 0
        %2247 = vmatprep.subr.bf16.mxu0 0
        %2248 = vmatpush1.bf16.msra.mxu0 %v2236
        %2249 = vmatprep.subr.bf16.mxu0 0
        %2250 = vmatpush1.bf16.msra.mxu0 %v2237
        %2251 = vmatprep.subr.bf16.mxu0 0
        %2252 = vmatpush1.bf16.msra.mxu0 %v2238
        %2253 = vmatprep.subr.bf16.mxu0 0
        %2254 = vmatpush1.bf16.msra.mxu0 %v2239
        %2255 = vmatprep.subr.bf16.mxu0 0
        %2256 = vmatpush1.bf16.msra.mxu0 0
        %2257 = vmatprep.subr.bf16.mxu0 0
        %2258 = vmatpush1.bf16.msra.mxu0 0
        %2259 = vmatprep.subr.bf16.mxu0 0
        %2260 = vmatpush1.bf16.msra.mxu0 0
        %2261 = vmatprep.subr.bf16.mxu0 0
        %2262 = vmatpush1.bf16.msra.mxu0 0
        %2263 = vmatprep.subr.bf16.mxu0 0
        %2264 = vmatpush1.bf16.msra.mxu0 0
        %2265 = vmatprep.subr.bf16.mxu0 0
        %2266 = vmatpush1.bf16.msra.mxu0 0
        %2267 = vmatprep.subr.bf16.mxu0 0
        %2268 = vmatpush1.bf16.msra.mxu0 0
        %2269 = vmatprep.subr.bf16.mxu0 0
        %2270 = vmatpush1.bf16.msra.mxu0 0
        %2271 = vmatprep.subr.bf16.mxu0 0
        %2272 = vmatpush1.bf16.msra.mxu0 0
        %2273 = vmatprep.subr.bf16.mxu0 0
        %2274 = vmatpush1.bf16.msra.mxu0 0
        %2275 = vmatprep.subr.bf16.mxu0 0
        %2276 = vmatpush1.bf16.msra.mxu0 0
        %2277 = vmatprep.subr.bf16.mxu0 0
        %2278 = vmatpush1.bf16.msra.mxu0 0
        %2279 = vmatprep.mubr.bf16.mxu0 0
        %2280 = vmatmul.mubr.bf16.gmra.mrb[0].mxu0 %v2245
        %v2281 = vpop.f32.mrb[0].mxu0
        %v2282 = vadd.f32 %v2218, %v2281
        %v2283 = vpop.f32.mrb[0].mxu0
        %v2284 = vpop.f32.mrb[0].mxu0
        %v2285 = vpop.f32.mrb[0].mxu0
        %2286 = vdwg.mxu0
        %v2287 = vadd.f32 %v2110, %v2282
        %vm2288 = vcmask 253952
        %v2289 = vsel %vm2288, %v2287, 0.0
        %2290 = vadd.xlane.f32.xlu0 %v2289
        %v2291 = vpop.xlane.xlu0 %2290
        %v2292 = vmul.f32 %v2291, %v712
        %v2293 = vsub.f32 %v2287, %v2292
        %v2294 = vmul.f32 %v2293, %v2293
        %v2295 = vsel %vm2288, %v2294, 0.0
        %2296 = vadd.xlane.f32.xlu0 %v2295
        %v2297 = vpop.xlane.xlu0 %2296
        %v2298 = vmul.f32 %v2297, %v712
        %v2299 = vadd.f32 %v2298, 1e-06
        %v2300 = vrsqrt.pop %v2299
        %v2301 = vmul.f32 %v2293, %v2300
        %v2302 = vld [vmem:[%s13] sm:$0xf]
        %v2303 = vld [vmem:[%s13 + $0x4] sm:$0xf]
        %v2304 = vld [vmem:[%s13 + $0x8] sm:$0xf]
        %v2305 = vld [vmem:[%s13 + $0xc] sm:$0xf]
        %v2306 = vld [vmem:[%s14] sm:$0x1]
        %v2307 = vpack.c.bf16 %v2301, %v2301
        %v2312 = vunpack.c.l.b16 %v2302
        %v2313 = vunpack.c.l.b16 %v2303
        %v2314 = vunpack.c.l.b16 %v2304
        %v2315 = vunpack.c.l.b16 %v2305
        %v2316 = vpack.c.b16 %v2313, %v2312
        %v2317 = vpack.c.b16 %v2315, %v2314
        %v2321 = vsel %vm747, %v2307, 0
        %2323 = vmatprep.subr.bf16.mxu0 0
        %2324 = vmatpush1.bf16.msra.mxu0 %v2316
        %2325 = vmatprep.subr.bf16.mxu0 0
        %2326 = vmatpush1.bf16.msra.mxu0 %v2317
        %2327 = vmatprep.subr.bf16.mxu0 0
        %2328 = vmatpush1.bf16.msra.mxu0 0
        %2329 = vmatprep.subr.bf16.mxu0 0
        %2330 = vmatpush1.bf16.msra.mxu0 0
        %2331 = vmatprep.subr.bf16.mxu0 0
        %2332 = vmatpush1.bf16.msra.mxu0 0
        %2333 = vmatprep.subr.bf16.mxu0 0
        %2334 = vmatpush1.bf16.msra.mxu0 0
        %2335 = vmatprep.subr.bf16.mxu0 0
        %2336 = vmatpush1.bf16.msra.mxu0 0
        %2337 = vmatprep.subr.bf16.mxu0 0
        %2338 = vmatpush1.bf16.msra.mxu0 0
        %2339 = vmatprep.subr.bf16.mxu0 0
        %2340 = vmatpush1.bf16.msra.mxu0 0
        %2341 = vmatprep.subr.bf16.mxu0 0
        %2342 = vmatpush1.bf16.msra.mxu0 0
        %2343 = vmatprep.subr.bf16.mxu0 0
        %2344 = vmatpush1.bf16.msra.mxu0 0
        %2345 = vmatprep.subr.bf16.mxu0 0
        %2346 = vmatpush1.bf16.msra.mxu0 0
        %2347 = vmatprep.subr.bf16.mxu0 0
        %2348 = vmatpush1.bf16.msra.mxu0 0
        %2349 = vmatprep.subr.bf16.mxu0 0
        %2350 = vmatpush1.bf16.msra.mxu0 0
        %2351 = vmatprep.subr.bf16.mxu0 0
        %2352 = vmatpush1.bf16.msra.mxu0 0
        %2353 = vmatprep.subr.bf16.mxu0 0
        %2354 = vmatpush1.bf16.msra.mxu0 0
        %2355 = vmatprep.mubr.bf16.mxu0 0
        %2356 = vmatmul.mubr.bf16.gmra.mrb[0].mxu0 %v2321
        %v2357 = vpop.f32.mrb[0].mxu0
        %v2358 = vadd.f32 %v2306, %v2357
        %v2359 = vpop.f32.mrb[0].mxu0
        %v2360 = vpop.f32.mrb[0].mxu0
        %v2361 = vpop.f32.mrb[0].mxu0
        %2362 = vdwg.mxu0
        %v2363 = vmax.f32 %v2358, 0.0
        %v2364 = vld [vmem:[%s15] sm:$0xf]
        %v2365 = vld [vmem:[%s15 + $0x4] sm:$0xf]
        %v2366 = vld [vmem:[%s15 + $0x8] sm:$0xf]
        %v2367 = vld [vmem:[%s15 + $0xc] sm:$0xf]
        %v2368 = vld [vmem:[%s16] sm:$0x1]
        %v2369 = vpack.c.bf16 %v2363, %v2363
        %v2374 = vunpack.c.l.b16 %v2364
        %v2375 = vunpack.c.l.b16 %v2365
        %v2376 = vunpack.c.l.b16 %v2366
        %v2377 = vunpack.c.l.b16 %v2367
        %v2378 = vpack.c.b16 %v2375, %v2374
        %v2379 = vpack.c.b16 %v2377, %v2376
        %v2383 = vsel %vm747, %v2369, 0
        %2385 = vmatprep.subr.bf16.mxu0 0
        %2386 = vmatpush1.bf16.msra.mxu0 %v2378
        %2387 = vmatprep.subr.bf16.mxu0 0
        %2388 = vmatpush1.bf16.msra.mxu0 %v2379
        %2389 = vmatprep.subr.bf16.mxu0 0
        %2390 = vmatpush1.bf16.msra.mxu0 0
        %2391 = vmatprep.subr.bf16.mxu0 0
        %2392 = vmatpush1.bf16.msra.mxu0 0
        %2393 = vmatprep.subr.bf16.mxu0 0
        %2394 = vmatpush1.bf16.msra.mxu0 0
        %2395 = vmatprep.subr.bf16.mxu0 0
        %2396 = vmatpush1.bf16.msra.mxu0 0
        %2397 = vmatprep.subr.bf16.mxu0 0
        %2398 = vmatpush1.bf16.msra.mxu0 0
        %2399 = vmatprep.subr.bf16.mxu0 0
        %2400 = vmatpush1.bf16.msra.mxu0 0
        %2401 = vmatprep.subr.bf16.mxu0 0
        %2402 = vmatpush1.bf16.msra.mxu0 0
        %2403 = vmatprep.subr.bf16.mxu0 0
        %2404 = vmatpush1.bf16.msra.mxu0 0
        %2405 = vmatprep.subr.bf16.mxu0 0
        %2406 = vmatpush1.bf16.msra.mxu0 0
        %2407 = vmatprep.subr.bf16.mxu0 0
        %2408 = vmatpush1.bf16.msra.mxu0 0
        %2409 = vmatprep.subr.bf16.mxu0 0
        %2410 = vmatpush1.bf16.msra.mxu0 0
        %2411 = vmatprep.subr.bf16.mxu0 0
        %2412 = vmatpush1.bf16.msra.mxu0 0
        %2413 = vmatprep.subr.bf16.mxu0 0
        %2414 = vmatpush1.bf16.msra.mxu0 0
        %2415 = vmatprep.subr.bf16.mxu0 0
        %2416 = vmatpush1.bf16.msra.mxu0 0
        %2417 = vmatprep.mubr.bf16.mxu0 0
        %2418 = vmatmul.mubr.bf16.gmra.mrb[0].mxu0 %v2383
        %v2419 = vpop.f32.mrb[0].mxu0
        %v2420 = vadd.f32 %v2368, %v2419
        %v2421 = vpop.f32.mrb[0].mxu0
        %v2422 = vpop.f32.mrb[0].mxu0
        %v2423 = vpop.f32.mrb[0].mxu0
        %2424 = vdwg.mxu0
        %2425 = vst [vmem:[%s540] sm:$0x1] %v2420
        %s2426 = sand.u32 %s401, 1
        %s2427 = scalar_lea.sflag [#allocation3], %s2426
        %s2428 = sand.u32 %s401, 1
        %s2429 = scalar_lea.vmem [#allocation2], %s2428
        // Predicated region
        $region89: #{vit_forward.1} parent=87 // pred_check
          %p2430 = pneg %p411
        $region90: #{vit_forward.1} parent=87 // pred_check_branch
          %2432 = sbr.rel (%p2430) target = $region92
        $region91: #{vit_forward.1} parent=87 // pred_region
          %s2434 = ssub.s32 16, 16
          %2435 = vsyncadd %s2427, %s2434
          %s2436 = smul.addr %s31, 16
          %s2437 = scalar_lea.hbm %s17, %s2436
          %s2439 = sshll.u32 %s2429, 4
          %s2440 = int_to_ptr.vmem [resolvable:$true] %s2439
          %2442 = dma.vmem_to_hbm [thread:$0]  %s2440, 16, %s2437, %s2427
        $region92: #{vit_forward.1} parent=87 // pred_fallthru
          _
      $region88: #{vit_forward.1} parent=5 // pred_fallthru
        _
      %p2443 = scmp.le.s32.totalorder 2, %s26
      // Predicated region
      $region93: #{vit_forward.1} parent=5 // pred_check
        %p2444 = pneg %p2443
      $region94: #{vit_forward.1} parent=5 // pred_check_branch
        %2446 = sbr.rel (%p2444) target = $region96
      $region95: #{vit_forward.1} parent=5 // pred_region
        %s2447 = ssub.s32 %s26, 2
        // Predicated region
        $region97: #{vit_forward.1} parent=95 // pred_check
          %p2448 = pneg %p417
        $region98: #{vit_forward.1} parent=95 // pred_check_branch
          %2450 = sbr.rel (%p2448) target = $region100
        $region99: #{vit_forward.1} parent=95 // pred_region
          %s2451 = sand.u32 %s402, 1
          %s2452 = scalar_lea.sflag [#allocation3], %s2451
          %s2453 = sand.u32 %s402, 1
          %s2454 = scalar_lea.vmem [#allocation2], %s2453
          %2455 = dma.done %s2452, 16
        $region100: #{vit_forward.1} parent=95 // pred_fallthru
          _
      $region96: #{vit_forward.1} parent=5 // pred_fallthru
        _
    $region6: #{vit_forward.1} parent=1 // loop_footer
      %s30 = sadd.s32 1, %s26
    $region7: #{vit_forward.1} parent=1 // loop_footer_branch
      %25 = sbr.rel target = $region3
    $region8: #{vit_forward.1} parent=1 // loop_exit
      _
    %2456 = vsyncpa [#allocation3], 1
    %s2457 = scalar_lea.sflag [#allocation3], 1
    %2458 = vsyncpa %s2457, 1

</llo_original>
